<compile_context>
chip_gen: v7x
topology: tpu7x:2x2x1
jax: 0.10.0
libtpu: 0.0.40
codegen_flags: <defaults>
</compile_context>

<pallas_src>
import numpy as np
import jax
import jax.numpy as jnp
from jax import lax
from jax.experimental import pallas as pl
from jax.experimental.pallas import tpu as pltpu

# ------------------------- scaled-down AudioMAE config -------------------------
B = 2
T, FRQ = 64, 16              # mel fbank (time, freq)          (orig 1024, 128)
P = 8                        # patch size                      (orig 16)
TG, FG = T // P, FRQ // P    # token grid (time, freq) = (8,2) (orig (64, 8))
NP = TG * FG                 # num patches = 16                (orig 512)
D = 128                      # embed dim (lane-dense)          (orig 768)
NHEAD = 4                    # attention heads                 (orig 12)
HD = D // NHEAD              # head dim = 32                   (orig 64)
DEPTH = 2                    # transformer depth               (orig 12)
DMLP = 4 * D                 # MLP hidden
TPOOL, FPOOL = 2, 2          # pooling factors                 (orig eval (8, 8))
TOKEN_NUM = (TG // TPOOL) * (FG // FPOOL)
NTOT = 1 + NP                # CLS + patches = 17
NPAD = 32                    # padded token axis (multiple of 8/16 for bf16 sublane packing)
EPS = 1e-6                   # ViT LayerNorm eps
NWIN = TPOOL * FPOOL
NEG_BIG = -1e30              # finite "-inf" for pad-key masking (avoids inf-inf NaN)


# ------------------------------ kernel helpers ---------------------------------
def _layernorm(x, g, b):
    mu = jnp.mean(x, axis=-1, keepdims=True)
    var = jnp.mean((x - mu) ** 2, axis=-1, keepdims=True)
    return (x - mu) * jax.lax.rsqrt(var + EPS) * g + b


def _gelu(x):
    # TODO(synk): PyTorch nn.GELU defaults to exact erf GELU; tanh approximation used for safe
    # Mosaic lowering. Kept in f32 (review suggested bf16 GELU on v6e/v7x; v5e has no bf16 VPU).
    c = 0.7978845608028654
    return 0.5 * x * (1.0 + jnp.tanh(c * (x + 0.044715 * x * x * x)))


# --------------------------- fused forward kernel -------------------------------
def _fused_kernel(patches_ref, patch_w_ref, add_full_ref,
                  ln1_g_ref, ln1_b_ref, wqkv_ref, bqkv_ref, wproj_ref, bproj_ref,
                  ln2_g_ref, ln2_b_ref, wfc1_ref, bfc1_ref, wfc2_ref, bfc2_ref,
                  norm_g_ref, norm_b_ref, sel_ref, o_ref):
    f32 = jnp.float32
    bf16 = jnp.bfloat16

    # ---- patch embed (bf16 MXU matmul) directly into an aligned (NPAD, D) residual stream.
    # add_full already contains: row 0 = cls_token + pos[0]; rows 1..NP = patch_bias + pos[1+i];
    # pad rows = 0. Pad/CLS rows of `patches` are zero, so no concatenates are needed.
    x = jnp.dot(patches_ref[0], patch_w_ref[...],
                preferred_element_type=f32) + add_full_ref[...]            # (NPAD, D) f32

    # key-column softmax bias: 0 for the NTOT real tokens, NEG_BIG for pad key columns
    key_ids = jax.lax.broadcasted_iota(jnp.int32, (1, NPAD), 1)
    key_bias = jnp.where(key_ids < NTOT, jnp.float32(0.0), jnp.float32(NEG_BIG))

    # ---- transformer blocks: fori_loop over DEPTH, dynamic index into stacked weight refs ----
    def layer(l, x):
        # attention
        h = _layernorm(x, ln1_g_ref[l], ln1_b_ref[l]).astype(bf16)
        # fused QKV: ONE (NPAD, D) x (D, 3D) matmul; 1/sqrt(HD) folded into the Q third.
        qkv = jnp.dot(h, wqkv_ref[l], preferred_element_type=f32) + bqkv_ref[l]  # (NPAD, 3D)
        heads = []
        for hh in range(NHEAD):                                  # static lane slices per head
            qh = qkv[:, hh * HD:(hh + 1) * HD].astype(bf16)
            kh = qkv[:, D + hh * HD:D + (hh + 1) * HD].astype(bf16)
            vh = qkv[:, 2 * D + hh * HD:2 * D + (hh + 1) * HD].astype(bf16)
            s = jnp.dot(qh, kh.T, preferred_element_type=f32) + key_bias         # (NPAD, NPAD)
            s = s - jnp.max(s, axis=-1, keepdims=True)                            # f32 softmax
            p = jnp.exp(s)
            p = p * pl.reciprocal(jnp.sum(p, axis=-1, keepdims=True), approx=True)
            heads.append(jnp.dot(p.astype(bf16), vh, preferred_element_type=f32))
        # lane-concat heads -> ONE (NPAD, D) x (D, D) output projection (full-depth contraction)
        o_cat = jnp.concatenate(heads, axis=-1).astype(bf16)                      # (NPAD, D)
        x = x + jnp.dot(o_cat, wproj_ref[l], preferred_element_type=f32) + bproj_ref[l]

        # MLP
        h2 = _layernorm(x, ln2_g_ref[l], ln2_b_ref[l]).astype(bf16)
        h2 = jnp.dot(h2, wfc1_ref[l], preferred_element_type=f32) + bfc1_ref[l]
        h2 = _gelu(h2)
        x = x + jnp.dot(h2.astype(bf16), wfc2_ref[l],
                        preferred_element_type=f32) + bfc2_ref[l]
        return x

    x = lax.fori_loop(0, DEPTH, layer, x)

    # ---- final LayerNorm + (avg+max)/2 pooling via ONE bf16 selection matmul ----
    xf = _layernorm(x, norm_g_ref[...], norm_b_ref[...]).astype(jnp.bfloat16)     # (NPAD, D)
    picks = jnp.dot(sel_ref[...], xf, preferred_element_type=f32)    # (NWIN*TOKEN_NUM, D)
    parts = [picks[kk * TOKEN_NUM:(kk + 1) * TOKEN_NUM] for kk in range(NWIN)]
    avg = parts[0]
    mx = parts[0]
    for t in parts[1:]:
        avg = avg + t
        mx = jnp.maximum(mx, t)
    o_ref[0] = (avg * (1.0 / NWIN) + mx) * 0.5


_PARAM_ORDER = ["patch_w", "add_full", "ln1_g", "ln1_b", "wqkv", "bqkv",
                "wproj", "bproj", "ln2_g", "ln2_b", "wfc1", "bfc1",
                "wfc2", "bfc2", "norm_g", "norm_b", "sel"]


def fused_forward(patches_padded, kparams):
    Bb = patches_padded.shape[0]
    plist = [kparams[n] for n in _PARAM_ORDER]
    # Constant index maps -> weight blocks stay resident in VMEM across the batch grid.
    pspecs = [pl.BlockSpec(p.shape, (lambda nd: (lambda b: (0,) * nd))(p.ndim)) for p in plist]
    return pl.pallas_call(
        _fused_kernel,
        out_shape=jax.ShapeDtypeStruct((Bb, TOKEN_NUM, D), jnp.float32),
        grid=(Bb,),
        in_specs=[pl.BlockSpec((1, NPAD, P * P), lambda b: (b, 0, 0))] + pspecs,
        out_specs=pl.BlockSpec((1, TOKEN_NUM, D), lambda b: (b, 0, 0)),
        # batch programs are independent -> "parallel" (v7x dual-TC sharding; no-op on v5e/v6e).
        compiler_params=pltpu.CompilerParams(
            dimension_semantics=("parallel",),
            vmem_limit_bytes=32 * 1024 * 1024),
    )(patches_padded, *plist)


# ------------------ (avg+max) pooling one-hot selection matrix -----------------
def build_pool_select():
    # token index = 1 + t_grid * FG + f_grid (time-major, timm flatten(2) order; +1 skips CLS).
    # Stacked as NWIN window-offset slabs of TOKEN_NUM rows each; CLS + pad columns stay zero.
    sel = np.zeros((NWIN, TOKEN_NUM, NPAD), np.float32)
    for to in range(TG // TPOOL):
        for fo in range(FG // FPOOL):
            r = to * (FG // FPOOL) + fo
            kk = 0
            for dt in range(TPOOL):
                for df in range(FPOOL):
                    t = (to * TPOOL + dt) * FG + (fo * FPOOL + df)
                    sel[kk, r, 1 + t] = 1.0
                    kk += 1
    return jnp.asarray(sel.reshape(NWIN * TOKEN_NUM, NPAD), jnp.bfloat16)


# ----------------------------- parameter creation --------------------------------
def init_params(key):
    """Synthetic weights in the PyTorch-module layout (wqkv fused, f32)."""
    s = 0.02
    keys = jax.random.split(key, 3 + DEPTH)
    params = {
        "patch_w": s * jax.random.normal(keys[0], (P * P, D), jnp.float32),
        "patch_b": jnp.zeros((1, D), jnp.float32),
        "cls_token": s * jax.random.normal(keys[1], (1, 1, D), jnp.float32),
        "pos_embed": s * jax.random.normal(keys[2], (1, 1 + NP, D), jnp.float32),
        "norm_g": jnp.ones((1, D), jnp.float32),
        "norm_b": jnp.zeros((1, D), jnp.float32),
        "blocks": [],
    }
    for i in range(DEPTH):
        bk = jax.random.split(keys[3 + i], 4)
        params["blocks"].append({
            "ln1_g": jnp.ones((1, D), jnp.float32),
            "ln1_b": jnp.zeros((1, D), jnp.float32),
            "wqkv": s * jax.random.normal(bk[0], (D, 3 * D), jnp.float32),
            "bqkv": jnp.zeros((1, 3 * D), jnp.float32),
            "wproj": s * jax.random.normal(bk[1], (D, D), jnp.float32),
            "bproj": jnp.zeros((1, D), jnp.float32),
            "ln2_g": jnp.ones((1, D), jnp.float32),
            "ln2_b": jnp.zeros((1, D), jnp.float32),
            "wfc1": s * jax.random.normal(bk[2], (D, DMLP), jnp.float32),
            "bfc1": jnp.zeros((1, DMLP), jnp.float32),
            "wfc2": s * jax.random.normal(bk[3], (DMLP, D), jnp.float32),
            "bfc2": jnp.zeros((1, D), jnp.float32),
        })
    return params


def prepare_kernel_params(params):
    """Stack layers, cast matmul weights to bf16, fold 1/sqrt(HD) into the Q third of wqkv,
    and fold CLS / patch-bias / pos-embed into one padded additive table."""
    bf16 = jnp.bfloat16
    scale = HD ** -0.5

    def stack(name):
        return jnp.stack([bp[name] for bp in params["blocks"]], axis=0)

    wqkv = stack("wqkv")                       # (DEPTH, D, 3D)
    bqkv = stack("bqkv")                       # (DEPTH, 1, 3D)
    qscale = jnp.concatenate([jnp.full((D,), scale, jnp.float32),
                              jnp.ones((2 * D,), jnp.float32)], axis=0)
    wqkv = wqkv * qscale                       # scale folded into the Q block only
    bqkv = bqkv * qscale

    add_full = jnp.zeros((NPAD, D), jnp.float32)
    add_full = add_full.at[0].set(params["cls_token"][0, 0] + params["pos_embed"][0, 0])
    add_full = add_full.at[1:1 + NP].set(params["patch_b"] + params["pos_embed"][0, 1:1 + NP])

    return {
        "patch_w": params["patch_w"].astype(bf16),
        "add_full": add_full,
        "ln1_g": stack("ln1_g"), "ln1_b": stack("ln1_b"),
        "wqkv": wqkv.astype(bf16), "bqkv": bqkv,
        "wproj": stack("wproj").astype(bf16), "bproj": stack("bproj"),
        "ln2_g": stack("ln2_g"), "ln2_b": stack("ln2_b"),
        "wfc1": stack("wfc1").astype(bf16), "bfc1": stack("bfc1"),
        "wfc2": stack("wfc2").astype(bf16), "bfc2": stack("bfc2"),
        "norm_g": params["norm_g"], "norm_b": params["norm_b"],
        "sel": build_pool_select(),
    }


# ---------------------------------- forward --------------------------------------
def audiomae_condition_forward(batch, kparams):
    """Mirrors AudioMAEConditionCTPoolRand.forward (use_reg=False, no_mask/no_average)."""
    assert batch.shape[-2] == T and batch.shape[-1] == FRQ
    Bb = batch.shape[0]
    # batch.unsqueeze(1) -> NCHW [B, 1, T, F]; C=1 so the conv patch-embed == matmul over
    # flattened (P, P) patches, extracted here (glue), row-major (time_grid, freq_grid).
    patches = (batch.reshape(Bb, TG, P, FG, P)
                    .transpose(0, 1, 3, 2, 4)
                    .reshape(Bb, NP, P * P))
    # pad token rows to NPAD (row 0 = CLS slot, tail = alignment pad) and cast to bf16 (half DMA)
    patches_padded = jnp.zeros((Bb, NPAD, P * P), jnp.float32).at[:, 1:1 + NP, :].set(patches)
    rep = fused_forward(patches_padded.astype(jnp.bfloat16), kparams)   # (B, TOKEN_NUM, D)
    mask = jnp.ones((Bb, rep.shape[1]), jnp.float32)
    return [rep, mask]


# ---------------------------- pure-JAX f32 reference ------------------------------
def reference_forward(batch, params):
    Bb = batch.shape[0]
    patches = (batch.reshape(Bb, TG, P, FG, P).transpose(0, 1, 3, 2, 4).reshape(Bb, NP, P * P))
    tok = patches @ params["patch_w"] + params["patch_b"]
    tok = tok + params["pos_embed"][:, 1:, :]
    cls = jnp.broadcast_to(params["cls_token"] + params["pos_embed"][:, :1, :], (Bb, 1, D))
    x = jnp.concatenate([cls, tok], axis=1)

    def ln(v, g, b):
        mu = v.mean(-1, keepdims=True)
        var = ((v - mu) ** 2).mean(-1, keepdims=True)
        return (v - mu) * jax.lax.rsqrt(var + EPS) * g + b

    for bp in params["blocks"]:
        h = ln(x, bp["ln1_g"], bp["ln1_b"])
        qkv = h @ bp["wqkv"] + bp["bqkv"]
        q, k, v = qkv[..., :D], qkv[..., D:2 * D], qkv[..., 2 * D:]
        q = q.reshape(Bb, NTOT, NHEAD, HD).transpose(0, 2, 1, 3)
        k = k.reshape(Bb, NTOT, NHEAD, HD).transpose(0, 2, 1, 3)
        v = v.reshape(Bb, NTOT, NHEAD, HD).transpose(0, 2, 1, 3)
        s = (q @ jnp.swapaxes(k, -1, -2)) * (HD ** -0.5)
        p = jax.nn.softmax(s, axis=-1)
        o = (p @ v).transpose(0, 2, 1, 3).reshape(Bb, NTOT, D)
        x = x + o @ bp["wproj"] + bp["bproj"]
        h2 = ln(x, bp["ln2_g"], bp["ln2_b"])
        h2 = _gelu(h2 @ bp["wfc1"] + bp["bfc1"])
        x = x + h2 @ bp["wfc2"] + bp["bfc2"]
    x = ln(x, params["norm_g"], params["norm_b"])
    grid = x[:, 1:, :].reshape(Bb, TG // TPOOL, TPOOL, FG // FPOOL, FPOOL, D)
    avg = grid.mean(axis=(2, 4))
    mx = grid.max(axis=(2, 4))
    return ((avg + mx) * 0.5).reshape(Bb, TOKEN_NUM, D)


# ----------------------------------- main -----------------------------------------
if __name__ == "__main__":
    key = jax.random.PRNGKey(0)
    kx, kw = jax.random.split(key)
    x = jax.random.normal(kx, (B, T, FRQ), jnp.float32)   # mel fbank [B, T(time), F(freq)]
    params = init_params(kw)
    kparams = prepare_kernel_params(params)

    fwd = jax.jit(audiomae_condition_forward)
    rep, mask = fwd(x, kparams)
    jax.block_until_ready((rep, mask))

    assert rep.shape == (B, TOKEN_NUM, D), rep.shape
    assert mask.shape == (B, TOKEN_NUM), mask.shape
    assert bool(jnp.all(jnp.isfinite(rep)))

    # Loose check vs the f32 reference (bf16 matmuls + approx reciprocal introduce small drift).
    ref = reference_forward(x, params)
    err = float(jnp.max(jnp.abs(rep - ref)))
    assert err < 0.3, f"max abs diff vs f32 reference too large: {err}"

    print("KERNEL_OK")
</pallas_src>

<mosaic_0001>
module attributes {stable_mosaic.version = 11 : i64} {
  func.func @_fused_kernel(%arg0: i32, %arg1: memref<1x32x64xbf16, #tpu.memory_space<vmem>>, %arg2: memref<64x128xbf16, #tpu.memory_space<vmem>>, %arg3: memref<32x128xf32, #tpu.memory_space<vmem>>, %arg4: memref<2x1x128xf32, #tpu.memory_space<vmem>>, %arg5: memref<2x1x128xf32, #tpu.memory_space<vmem>>, %arg6: memref<2x128x384xbf16, #tpu.memory_space<vmem>>, %arg7: memref<2x1x384xf32, #tpu.memory_space<vmem>>, %arg8: memref<2x128x128xbf16, #tpu.memory_space<vmem>>, %arg9: memref<2x1x128xf32, #tpu.memory_space<vmem>>, %arg10: memref<2x1x128xf32, #tpu.memory_space<vmem>>, %arg11: memref<2x1x128xf32, #tpu.memory_space<vmem>>, %arg12: memref<2x128x512xbf16, #tpu.memory_space<vmem>>, %arg13: memref<2x1x512xf32, #tpu.memory_space<vmem>>, %arg14: memref<2x512x128xbf16, #tpu.memory_space<vmem>>, %arg15: memref<2x1x128xf32, #tpu.memory_space<vmem>>, %arg16: memref<1x128xf32, #tpu.memory_space<vmem>>, %arg17: memref<1x128xf32, #tpu.memory_space<vmem>>, %arg18: memref<16x32xbf16, #tpu.memory_space<vmem>>, %arg19: memref<1x4x128xf32, #tpu.memory_space<vmem>>) attributes {dimension_semantics = [#tpu.dimension_semantics<parallel>], iteration_bounds = array<i64: 2>, scalar_prefetch = 0 : i64, scratch_operands = 0 : i64, tpu.core_type = #tpu.core_type<tc>, window_params = [{transform_indices = @transform_0, window_bounds = array<i64: 1, 32, 64>}, {pipeline_mode = #tpu.pipeline_mode<synchronous>, transform_indices = @transform_1, window_bounds = array<i64: 64, 128>}, {pipeline_mode = #tpu.pipeline_mode<synchronous>, transform_indices = @transform_2, window_bounds = array<i64: 32, 128>}, {pipeline_mode = #tpu.pipeline_mode<synchronous>, transform_indices = @transform_3, window_bounds = array<i64: 2, 1, 128>}, {pipeline_mode = #tpu.pipeline_mode<synchronous>, transform_indices = @transform_4, window_bounds = array<i64: 2, 1, 128>}, {pipeline_mode = #tpu.pipeline_mode<synchronous>, transform_indices = @transform_5, window_bounds = array<i64: 2, 128, 384>}, {pipeline_mode = #tpu.pipeline_mode<synchronous>, transform_indices = @transform_6, window_bounds = array<i64: 2, 1, 384>}, {pipeline_mode = #tpu.pipeline_mode<synchronous>, transform_indices = @transform_7, window_bounds = array<i64: 2, 128, 128>}, {pipeline_mode = #tpu.pipeline_mode<synchronous>, transform_indices = @transform_8, window_bounds = array<i64: 2, 1, 128>}, {pipeline_mode = #tpu.pipeline_mode<synchronous>, transform_indices = @transform_9, window_bounds = array<i64: 2, 1, 128>}, {pipeline_mode = #tpu.pipeline_mode<synchronous>, transform_indices = @transform_10, window_bounds = array<i64: 2, 1, 128>}, {pipeline_mode = #tpu.pipeline_mode<synchronous>, transform_indices = @transform_11, window_bounds = array<i64: 2, 128, 512>}, {pipeline_mode = #tpu.pipeline_mode<synchronous>, transform_indices = @transform_12, window_bounds = array<i64: 2, 1, 512>}, {pipeline_mode = #tpu.pipeline_mode<synchronous>, transform_indices = @transform_13, window_bounds = array<i64: 2, 512, 128>}, {pipeline_mode = #tpu.pipeline_mode<synchronous>, transform_indices = @transform_14, window_bounds = array<i64: 2, 1, 128>}, {pipeline_mode = #tpu.pipeline_mode<synchronous>, transform_indices = @transform_15, window_bounds = array<i64: 1, 128>}, {pipeline_mode = #tpu.pipeline_mode<synchronous>, transform_indices = @transform_16, window_bounds = array<i64: 1, 128>}, {pipeline_mode = #tpu.pipeline_mode<synchronous>, transform_indices = @transform_17, window_bounds = array<i64: 16, 32>}, {transform_indices = @transform_18, window_bounds = array<i64: 1, 4, 128>}]} {
    %c0 = arith.constant 0 : index
    %c0_0 = arith.constant 0 : index
    %c0_1 = arith.constant 0 : index
    %0 = vector.load %arg1[%c0, %c0_0, %c0_1] : memref<1x32x64xbf16, #tpu.memory_space<vmem>>, vector<1x32x64xbf16>
    %1 = vector.shape_cast %0 : vector<1x32x64xbf16> to vector<32x64xbf16>
    %c0_2 = arith.constant 0 : index
    %c0_3 = arith.constant 0 : index
    %2 = vector.load %arg2[%c0_2, %c0_3] : memref<64x128xbf16, #tpu.memory_space<vmem>>, vector<64x128xbf16>
    %cst = arith.constant dense<0.000000e+00> : vector<32x128xf32>
    %3 = tpu.matmul %1, %2, %cst {dimension_numbers = #tpu.dot_dimension_numbers<[1], [0], [0], [1], [0, 0, 1, 1], [], []>} : vector<32x64xbf16>, vector<64x128xbf16>, vector<32x128xf32> -> vector<32x128xf32>
    %c0_4 = arith.constant 0 : index
    %c0_5 = arith.constant 0 : index
    %4 = vector.load %arg3[%c0_4, %c0_5] : memref<32x128xf32, #tpu.memory_space<vmem>>, vector<32x128xf32>
    %5 = arith.addf %3, %4 : vector<32x128xf32>
    %6 = tpu.iota {dimensions = array<i32: 1>} : vector<1x32xi32>
    %c17_i32 = arith.constant 17 : i32
    %7 = vector.broadcast %c17_i32 : i32 to vector<1x32xi32>
    %8 = arith.cmpi slt, %6, %7 : vector<1x32xi32>
    %cst_6 = arith.constant 0.000000e+00 : f32
    %cst_7 = arith.constant -1.000000e+30 : f32
    %9 = vector.broadcast %cst_6 : f32 to vector<1x32xf32>
    %10 = vector.broadcast %cst_7 : f32 to vector<1x32xf32>
    %11 = arith.select %8, %9, %10 : vector<1x32xi1>, vector<1x32xf32>
    %c0_i32 = arith.constant 0 : i32
    %c2_i32 = arith.constant 2 : i32
    %12 = arith.addi %c0_i32, %c2_i32 : i32
    %c1_i32 = arith.constant 1 : i32
    %13 = scf.for %arg20 = %c0_i32 to %12 step %c1_i32 iter_args(%arg21 = %5) -> (vector<32x128xf32>)  : i32 {
      %59 = arith.index_cast %arg20 : i32 to index
      %c0_26 = arith.constant 0 : index
      %c0_27 = arith.constant 0 : index
      %60 = vector.load %arg4[%59, %c0_26, %c0_27] : memref<2x1x128xf32, #tpu.memory_space<vmem>>, vector<1x1x128xf32>
      %61 = vector.shape_cast %60 : vector<1x1x128xf32> to vector<1x128xf32>
      %62 = arith.index_cast %arg20 : i32 to index
      %c0_28 = arith.constant 0 : index
      %c0_29 = arith.constant 0 : index
      %63 = vector.load %arg5[%62, %c0_28, %c0_29] : memref<2x1x128xf32, #tpu.memory_space<vmem>>, vector<1x1x128xf32>
      %64 = vector.shape_cast %63 : vector<1x1x128xf32> to vector<1x128xf32>
      %cst_30 = arith.constant dense<0.000000e+00> : vector<32xf32>
      %65 = vector.multi_reduction <add>, %arg21, %cst_30 [1] : vector<32x128xf32> to vector<32xf32>
      %66 = vector.shape_cast %65 : vector<32xf32> to vector<32x1xf32>
      %cst_31 = arith.constant 1.280000e+02 : f32
      %67 = vector.broadcast %cst_31 : f32 to vector<32x1xf32>
      %68 = arith.divf %66, %67 : vector<32x1xf32>
      %69 = vector.broadcast %68 : vector<32x1xf32> to vector<32x128xf32>
      %70 = arith.subf %arg21, %69 : vector<32x128xf32>
      %71 = arith.mulf %70, %70 : vector<32x128xf32>
      %cst_32 = arith.constant dense<0.000000e+00> : vector<32xf32>
      %72 = vector.multi_reduction <add>, %71, %cst_32 [1] : vector<32x128xf32> to vector<32xf32>
      %73 = vector.shape_cast %72 : vector<32xf32> to vector<32x1xf32>
      %cst_33 = arith.constant 1.280000e+02 : f32
      %74 = vector.broadcast %cst_33 : f32 to vector<32x1xf32>
      %75 = arith.divf %73, %74 : vector<32x1xf32>
      %76 = vector.broadcast %68 : vector<32x1xf32> to vector<32x128xf32>
      %77 = arith.subf %arg21, %76 : vector<32x128xf32>
      %cst_34 = arith.constant 9.99999997E-7 : f32
      %78 = vector.broadcast %cst_34 : f32 to vector<32x1xf32>
      %79 = arith.addf %75, %78 : vector<32x1xf32>
      %80 = math.rsqrt %79 : vector<32x1xf32>
      %81 = vector.broadcast %80 : vector<32x1xf32> to vector<32x128xf32>
      %82 = arith.mulf %77, %81 : vector<32x128xf32>
      %83 = vector.broadcast %61 : vector<1x128xf32> to vector<32x128xf32>
      %84 = arith.mulf %82, %83 : vector<32x128xf32>
      %85 = vector.broadcast %64 : vector<1x128xf32> to vector<32x128xf32>
      %86 = arith.addf %84, %85 : vector<32x128xf32>
      %87 = arith.truncf %86 : vector<32x128xf32> to vector<32x128xbf16>
      %88 = arith.index_cast %arg20 : i32 to index
      %c0_35 = arith.constant 0 : index
      %c0_36 = arith.constant 0 : index
      %89 = vector.load %arg6[%88, %c0_35, %c0_36] : memref<2x128x384xbf16, #tpu.memory_space<vmem>>, vector<1x128x384xbf16>
      %90 = vector.shape_cast %89 : vector<1x128x384xbf16> to vector<128x384xbf16>
      %cst_37 = arith.constant dense<0.000000e+00> : vector<32x384xf32>
      %91 = tpu.matmul %87, %90, %cst_37 {dimension_numbers = #tpu.dot_dimension_numbers<[1], [0], [0], [1], [0, 0, 1, 1], [], []>} : vector<32x128xbf16>, vector<128x384xbf16>, vector<32x384xf32> -> vector<32x384xf32>
      %92 = arith.index_cast %arg20 : i32 to index
      %c0_38 = arith.constant 0 : index
      %c0_39 = arith.constant 0 : index
      %93 = vector.load %arg7[%92, %c0_38, %c0_39] : memref<2x1x384xf32, #tpu.memory_space<vmem>>, vector<1x1x384xf32>
      %94 = vector.shape_cast %93 : vector<1x1x384xf32> to vector<1x384xf32>
      %95 = vector.broadcast %94 : vector<1x384xf32> to vector<32x384xf32>
      %96 = arith.addf %91, %95 : vector<32x384xf32>
      %97 = vector.extract_strided_slice %96 {offsets = [0, 0], sizes = [32, 32], strides = [1, 1]} : vector<32x384xf32> to vector<32x32xf32>
      %98 = arith.truncf %97 : vector<32x32xf32> to vector<32x32xbf16>
      %99 = vector.extract_strided_slice %96 {offsets = [0, 128], sizes = [32, 32], strides = [1, 1]} : vector<32x384xf32> to vector<32x32xf32>
      %100 = arith.truncf %99 : vector<32x32xf32> to vector<32x32xbf16>
      %101 = vector.extract_strided_slice %96 {offsets = [0, 256], sizes = [32, 32], strides = [1, 1]} : vector<32x384xf32> to vector<32x32xf32>
      %102 = arith.truncf %101 : vector<32x32xf32> to vector<32x32xbf16>
      %103 = tpu.transpose %100, [1, 0] : vector<32x32xbf16> -> vector<32x32xbf16>
      %cst_40 = arith.constant dense<0.000000e+00> : vector<32x32xf32>
      %104 = tpu.matmul %98, %103, %cst_40 {dimension_numbers = #tpu.dot_dimension_numbers<[1], [0], [0], [1], [0, 0, 1, 1], [], []>} : vector<32x32xbf16>, vector<32x32xbf16>, vector<32x32xf32> -> vector<32x32xf32>
      %105 = vector.broadcast %11 : vector<1x32xf32> to vector<32x32xf32>
      %106 = arith.addf %104, %105 : vector<32x32xf32>
      %cst_41 = arith.constant dense<0xFF800000> : vector<32xf32>
      %107 = vector.multi_reduction <maximumf>, %106, %cst_41 [1] : vector<32x32xf32> to vector<32xf32>
      %108 = vector.shape_cast %107 : vector<32xf32> to vector<32x1xf32>
      %109 = vector.broadcast %108 : vector<32x1xf32> to vector<32x32xf32>
      %110 = arith.subf %106, %109 : vector<32x32xf32>
      %111 = math.exp %110 : vector<32x32xf32>
      %cst_42 = arith.constant dense<0.000000e+00> : vector<32xf32>
      %112 = vector.multi_reduction <add>, %111, %cst_42 [1] : vector<32x32xf32> to vector<32xf32>
      %113 = vector.shape_cast %112 : vector<32xf32> to vector<32x1xf32>
      %114 = tpu.reciprocal %113 {approx = true} : vector<32x1xf32> -> vector<32x1xf32>
      %115 = vector.broadcast %114 : vector<32x1xf32> to vector<32x32xf32>
      %116 = arith.mulf %111, %115 : vector<32x32xf32>
      %117 = arith.truncf %116 : vector<32x32xf32> to vector<32x32xbf16>
      %cst_43 = arith.constant dense<0.000000e+00> : vector<32x32xf32>
      %118 = tpu.matmul %117, %102, %cst_43 {dimension_numbers = #tpu.dot_dimension_numbers<[1], [0], [0], [1], [0, 0, 1, 1], [], []>} : vector<32x32xbf16>, vector<32x32xbf16>, vector<32x32xf32> -> vector<32x32xf32>
      %119 = vector.extract_strided_slice %96 {offsets = [0, 32], sizes = [32, 32], strides = [1, 1]} : vector<32x384xf32> to vector<32x32xf32>
      %120 = arith.truncf %119 : vector<32x32xf32> to vector<32x32xbf16>
      %121 = vector.extract_strided_slice %96 {offsets = [0, 160], sizes = [32, 32], strides = [1, 1]} : vector<32x384xf32> to vector<32x32xf32>
      %122 = arith.truncf %121 : vector<32x32xf32> to vector<32x32xbf16>
      %123 = vector.extract_strided_slice %96 {offsets = [0, 288], sizes = [32, 32], strides = [1, 1]} : vector<32x384xf32> to vector<32x32xf32>
      %124 = arith.truncf %123 : vector<32x32xf32> to vector<32x32xbf16>
      %125 = tpu.transpose %122, [1, 0] : vector<32x32xbf16> -> vector<32x32xbf16>
      %cst_44 = arith.constant dense<0.000000e+00> : vector<32x32xf32>
      %126 = tpu.matmul %120, %125, %cst_44 {dimension_numbers = #tpu.dot_dimension_numbers<[1], [0], [0], [1], [0, 0, 1, 1], [], []>} : vector<32x32xbf16>, vector<32x32xbf16>, vector<32x32xf32> -> vector<32x32xf32>
      %127 = vector.broadcast %11 : vector<1x32xf32> to vector<32x32xf32>
      %128 = arith.addf %126, %127 : vector<32x32xf32>
      %cst_45 = arith.constant dense<0xFF800000> : vector<32xf32>
      %129 = vector.multi_reduction <maximumf>, %128, %cst_45 [1] : vector<32x32xf32> to vector<32xf32>
      %130 = vector.shape_cast %129 : vector<32xf32> to vector<32x1xf32>
      %131 = vector.broadcast %130 : vector<32x1xf32> to vector<32x32xf32>
      %132 = arith.subf %128, %131 : vector<32x32xf32>
      %133 = math.exp %132 : vector<32x32xf32>
      %cst_46 = arith.constant dense<0.000000e+00> : vector<32xf32>
      %134 = vector.multi_reduction <add>, %133, %cst_46 [1] : vector<32x32xf32> to vector<32xf32>
      %135 = vector.shape_cast %134 : vector<32xf32> to vector<32x1xf32>
      %136 = tpu.reciprocal %135 {approx = true} : vector<32x1xf32> -> vector<32x1xf32>
      %137 = vector.broadcast %136 : vector<32x1xf32> to vector<32x32xf32>
      %138 = arith.mulf %133, %137 : vector<32x32xf32>
      %139 = arith.truncf %138 : vector<32x32xf32> to vector<32x32xbf16>
      %cst_47 = arith.constant dense<0.000000e+00> : vector<32x32xf32>
      %140 = tpu.matmul %139, %124, %cst_47 {dimension_numbers = #tpu.dot_dimension_numbers<[1], [0], [0], [1], [0, 0, 1, 1], [], []>} : vector<32x32xbf16>, vector<32x32xbf16>, vector<32x32xf32> -> vector<32x32xf32>
      %141 = vector.extract_strided_slice %96 {offsets = [0, 64], sizes = [32, 32], strides = [1, 1]} : vector<32x384xf32> to vector<32x32xf32>
      %142 = arith.truncf %141 : vector<32x32xf32> to vector<32x32xbf16>
      %143 = vector.extract_strided_slice %96 {offsets = [0, 192], sizes = [32, 32], strides = [1, 1]} : vector<32x384xf32> to vector<32x32xf32>
      %144 = arith.truncf %143 : vector<32x32xf32> to vector<32x32xbf16>
      %145 = vector.extract_strided_slice %96 {offsets = [0, 320], sizes = [32, 32], strides = [1, 1]} : vector<32x384xf32> to vector<32x32xf32>
      %146 = arith.truncf %145 : vector<32x32xf32> to vector<32x32xbf16>
      %147 = tpu.transpose %144, [1, 0] : vector<32x32xbf16> -> vector<32x32xbf16>
      %cst_48 = arith.constant dense<0.000000e+00> : vector<32x32xf32>
      %148 = tpu.matmul %142, %147, %cst_48 {dimension_numbers = #tpu.dot_dimension_numbers<[1], [0], [0], [1], [0, 0, 1, 1], [], []>} : vector<32x32xbf16>, vector<32x32xbf16>, vector<32x32xf32> -> vector<32x32xf32>
      %149 = vector.broadcast %11 : vector<1x32xf32> to vector<32x32xf32>
      %150 = arith.addf %148, %149 : vector<32x32xf32>
      %cst_49 = arith.constant dense<0xFF800000> : vector<32xf32>
      %151 = vector.multi_reduction <maximumf>, %150, %cst_49 [1] : vector<32x32xf32> to vector<32xf32>
      %152 = vector.shape_cast %151 : vector<32xf32> to vector<32x1xf32>
      %153 = vector.broadcast %152 : vector<32x1xf32> to vector<32x32xf32>
      %154 = arith.subf %150, %153 : vector<32x32xf32>
      %155 = math.exp %154 : vector<32x32xf32>
      %cst_50 = arith.constant dense<0.000000e+00> : vector<32xf32>
      %156 = vector.multi_reduction <add>, %155, %cst_50 [1] : vector<32x32xf32> to vector<32xf32>
      %157 = vector.shape_cast %156 : vector<32xf32> to vector<32x1xf32>
      %158 = tpu.reciprocal %157 {approx = true} : vector<32x1xf32> -> vector<32x1xf32>
      %159 = vector.broadcast %158 : vector<32x1xf32> to vector<32x32xf32>
      %160 = arith.mulf %155, %159 : vector<32x32xf32>
      %161 = arith.truncf %160 : vector<32x32xf32> to vector<32x32xbf16>
      %cst_51 = arith.constant dense<0.000000e+00> : vector<32x32xf32>
      %162 = tpu.matmul %161, %146, %cst_51 {dimension_numbers = #tpu.dot_dimension_numbers<[1], [0], [0], [1], [0, 0, 1, 1], [], []>} : vector<32x32xbf16>, vector<32x32xbf16>, vector<32x32xf32> -> vector<32x32xf32>
      %163 = vector.extract_strided_slice %96 {offsets = [0, 96], sizes = [32, 32], strides = [1, 1]} : vector<32x384xf32> to vector<32x32xf32>
      %164 = arith.truncf %163 : vector<32x32xf32> to vector<32x32xbf16>
      %165 = vector.extract_strided_slice %96 {offsets = [0, 224], sizes = [32, 32], strides = [1, 1]} : vector<32x384xf32> to vector<32x32xf32>
      %166 = arith.truncf %165 : vector<32x32xf32> to vector<32x32xbf16>
      %167 = vector.extract_strided_slice %96 {offsets = [0, 352], sizes = [32, 32], strides = [1, 1]} : vector<32x384xf32> to vector<32x32xf32>
      %168 = arith.truncf %167 : vector<32x32xf32> to vector<32x32xbf16>
      %169 = tpu.transpose %166, [1, 0] : vector<32x32xbf16> -> vector<32x32xbf16>
      %cst_52 = arith.constant dense<0.000000e+00> : vector<32x32xf32>
      %170 = tpu.matmul %164, %169, %cst_52 {dimension_numbers = #tpu.dot_dimension_numbers<[1], [0], [0], [1], [0, 0, 1, 1], [], []>} : vector<32x32xbf16>, vector<32x32xbf16>, vector<32x32xf32> -> vector<32x32xf32>
      %171 = vector.broadcast %11 : vector<1x32xf32> to vector<32x32xf32>
      %172 = arith.addf %170, %171 : vector<32x32xf32>
      %cst_53 = arith.constant dense<0xFF800000> : vector<32xf32>
      %173 = vector.multi_reduction <maximumf>, %172, %cst_53 [1] : vector<32x32xf32> to vector<32xf32>
      %174 = vector.shape_cast %173 : vector<32xf32> to vector<32x1xf32>
      %175 = vector.broadcast %174 : vector<32x1xf32> to vector<32x32xf32>
      %176 = arith.subf %172, %175 : vector<32x32xf32>
      %177 = math.exp %176 : vector<32x32xf32>
      %cst_54 = arith.constant dense<0.000000e+00> : vector<32xf32>
      %178 = vector.multi_reduction <add>, %177, %cst_54 [1] : vector<32x32xf32> to vector<32xf32>
      %179 = vector.shape_cast %178 : vector<32xf32> to vector<32x1xf32>
      %180 = tpu.reciprocal %179 {approx = true} : vector<32x1xf32> -> vector<32x1xf32>
      %181 = vector.broadcast %180 : vector<32x1xf32> to vector<32x32xf32>
      %182 = arith.mulf %177, %181 : vector<32x32xf32>
      %183 = arith.truncf %182 : vector<32x32xf32> to vector<32x32xbf16>
      %cst_55 = arith.constant dense<0.000000e+00> : vector<32x32xf32>
      %184 = tpu.matmul %183, %168, %cst_55 {dimension_numbers = #tpu.dot_dimension_numbers<[1], [0], [0], [1], [0, 0, 1, 1], [], []>} : vector<32x32xbf16>, vector<32x32xbf16>, vector<32x32xf32> -> vector<32x32xf32>
      %185 = tpu.concatenate %118, %140, %162, %184 in 1 : vector<32x32xf32>, vector<32x32xf32>, vector<32x32xf32>, vector<32x32xf32> -> vector<32x128xf32>
      %186 = arith.truncf %185 : vector<32x128xf32> to vector<32x128xbf16>
      %187 = arith.index_cast %arg20 : i32 to index
      %c0_56 = arith.constant 0 : index
      %c0_57 = arith.constant 0 : index
      %188 = vector.load %arg8[%187, %c0_56, %c0_57] : memref<2x128x128xbf16, #tpu.memory_space<vmem>>, vector<1x128x128xbf16>
      %189 = vector.shape_cast %188 : vector<1x128x128xbf16> to vector<128x128xbf16>
      %cst_58 = arith.constant dense<0.000000e+00> : vector<32x128xf32>
      %190 = tpu.matmul %186, %189, %cst_58 {dimension_numbers = #tpu.dot_dimension_numbers<[1], [0], [0], [1], [0, 0, 1, 1], [], []>} : vector<32x128xbf16>, vector<128x128xbf16>, vector<32x128xf32> -> vector<32x128xf32>
      %191 = arith.addf %arg21, %190 : vector<32x128xf32>
      %192 = arith.index_cast %arg20 : i32 to index
      %c0_59 = arith.constant 0 : index
      %c0_60 = arith.constant 0 : index
      %193 = vector.load %arg9[%192, %c0_59, %c0_60] : memref<2x1x128xf32, #tpu.memory_space<vmem>>, vector<1x1x128xf32>
      %194 = vector.shape_cast %193 : vector<1x1x128xf32> to vector<1x128xf32>
      %195 = vector.broadcast %194 : vector<1x128xf32> to vector<32x128xf32>
      %196 = arith.addf %191, %195 : vector<32x128xf32>
      %197 = arith.index_cast %arg20 : i32 to index
      %c0_61 = arith.constant 0 : index
      %c0_62 = arith.constant 0 : index
      %198 = vector.load %arg10[%197, %c0_61, %c0_62] : memref<2x1x128xf32, #tpu.memory_space<vmem>>, vector<1x1x128xf32>
      %199 = vector.shape_cast %198 : vector<1x1x128xf32> to vector<1x128xf32>
      %200 = arith.index_cast %arg20 : i32 to index
      %c0_63 = arith.constant 0 : index
      %c0_64 = arith.constant 0 : index
      %201 = vector.load %arg11[%200, %c0_63, %c0_64] : memref<2x1x128xf32, #tpu.memory_space<vmem>>, vector<1x1x128xf32>
      %202 = vector.shape_cast %201 : vector<1x1x128xf32> to vector<1x128xf32>
      %cst_65 = arith.constant dense<0.000000e+00> : vector<32xf32>
      %203 = vector.multi_reduction <add>, %196, %cst_65 [1] : vector<32x128xf32> to vector<32xf32>
      %204 = vector.shape_cast %203 : vector<32xf32> to vector<32x1xf32>
      %cst_66 = arith.constant 1.280000e+02 : f32
      %205 = vector.broadcast %cst_66 : f32 to vector<32x1xf32>
      %206 = arith.divf %204, %205 : vector<32x1xf32>
      %207 = vector.broadcast %206 : vector<32x1xf32> to vector<32x128xf32>
      %208 = arith.subf %196, %207 : vector<32x128xf32>
      %209 = arith.mulf %208, %208 : vector<32x128xf32>
      %cst_67 = arith.constant dense<0.000000e+00> : vector<32xf32>
      %210 = vector.multi_reduction <add>, %209, %cst_67 [1] : vector<32x128xf32> to vector<32xf32>
      %211 = vector.shape_cast %210 : vector<32xf32> to vector<32x1xf32>
      %cst_68 = arith.constant 1.280000e+02 : f32
      %212 = vector.broadcast %cst_68 : f32 to vector<32x1xf32>
      %213 = arith.divf %211, %212 : vector<32x1xf32>
      %214 = vector.broadcast %206 : vector<32x1xf32> to vector<32x128xf32>
      %215 = arith.subf %196, %214 : vector<32x128xf32>
      %cst_69 = arith.constant 9.99999997E-7 : f32
      %216 = vector.broadcast %cst_69 : f32 to vector<32x1xf32>
      %217 = arith.addf %213, %216 : vector<32x1xf32>
      %218 = math.rsqrt %217 : vector<32x1xf32>
      %219 = vector.broadcast %218 : vector<32x1xf32> to vector<32x128xf32>
      %220 = arith.mulf %215, %219 : vector<32x128xf32>
      %221 = vector.broadcast %199 : vector<1x128xf32> to vector<32x128xf32>
      %222 = arith.mulf %220, %221 : vector<32x128xf32>
      %223 = vector.broadcast %202 : vector<1x128xf32> to vector<32x128xf32>
      %224 = arith.addf %222, %223 : vector<32x128xf32>
      %225 = arith.truncf %224 : vector<32x128xf32> to vector<32x128xbf16>
      %226 = arith.index_cast %arg20 : i32 to index
      %c0_70 = arith.constant 0 : index
      %c0_71 = arith.constant 0 : index
      %227 = vector.load %arg12[%226, %c0_70, %c0_71] : memref<2x128x512xbf16, #tpu.memory_space<vmem>>, vector<1x128x512xbf16>
      %228 = vector.shape_cast %227 : vector<1x128x512xbf16> to vector<128x512xbf16>
      %cst_72 = arith.constant dense<0.000000e+00> : vector<32x512xf32>
      %229 = tpu.matmul %225, %228, %cst_72 {dimension_numbers = #tpu.dot_dimension_numbers<[1], [0], [0], [1], [0, 0, 1, 1], [], []>} : vector<32x128xbf16>, vector<128x512xbf16>, vector<32x512xf32> -> vector<32x512xf32>
      %230 = arith.index_cast %arg20 : i32 to index
      %c0_73 = arith.constant 0 : index
      %c0_74 = arith.constant 0 : index
      %231 = vector.load %arg13[%230, %c0_73, %c0_74] : memref<2x1x512xf32, #tpu.memory_space<vmem>>, vector<1x1x512xf32>
      %232 = vector.shape_cast %231 : vector<1x1x512xf32> to vector<1x512xf32>
      %233 = vector.broadcast %232 : vector<1x512xf32> to vector<32x512xf32>
      %234 = arith.addf %229, %233 : vector<32x512xf32>
      %cst_75 = arith.constant 5.000000e-01 : f32
      %235 = vector.broadcast %cst_75 : f32 to vector<32x512xf32>
      %236 = arith.mulf %235, %234 : vector<32x512xf32>
      %cst_76 = arith.constant 4.471500e-02 : f32
      %237 = vector.broadcast %cst_76 : f32 to vector<32x512xf32>
      %238 = arith.mulf %237, %234 : vector<32x512xf32>
      %239 = arith.mulf %238, %234 : vector<32x512xf32>
      %240 = arith.mulf %239, %234 : vector<32x512xf32>
      %241 = arith.addf %234, %240 : vector<32x512xf32>
      %cst_77 = arith.constant 0.797884583 : f32
      %242 = vector.broadcast %cst_77 : f32 to vector<32x512xf32>
      %243 = arith.mulf %242, %241 : vector<32x512xf32>
      %244 = math.tanh %243 : vector<32x512xf32>
      %cst_78 = arith.constant 1.000000e+00 : f32
      %245 = vector.broadcast %cst_78 : f32 to vector<32x512xf32>
      %246 = arith.addf %245, %244 : vector<32x512xf32>
      %247 = arith.mulf %236, %246 : vector<32x512xf32>
      %248 = arith.truncf %247 : vector<32x512xf32> to vector<32x512xbf16>
      %249 = arith.index_cast %arg20 : i32 to index
      %c0_79 = arith.constant 0 : index
      %c0_80 = arith.constant 0 : index
      %250 = vector.load %arg14[%249, %c0_79, %c0_80] : memref<2x512x128xbf16, #tpu.memory_space<vmem>>, vector<1x512x128xbf16>
      %251 = vector.shape_cast %250 : vector<1x512x128xbf16> to vector<512x128xbf16>
      %cst_81 = arith.constant dense<0.000000e+00> : vector<32x128xf32>
      %252 = tpu.matmul %248, %251, %cst_81 {dimension_numbers = #tpu.dot_dimension_numbers<[1], [0], [0], [1], [0, 0, 1, 1], [], []>} : vector<32x512xbf16>, vector<512x128xbf16>, vector<32x128xf32> -> vector<32x128xf32>
      %253 = arith.addf %196, %252 : vector<32x128xf32>
      %254 = arith.index_cast %arg20 : i32 to index
      %c0_82 = arith.constant 0 : index
      %c0_83 = arith.constant 0 : index
      %255 = vector.load %arg15[%254, %c0_82, %c0_83] : memref<2x1x128xf32, #tpu.memory_space<vmem>>, vector<1x1x128xf32>
      %256 = vector.shape_cast %255 : vector<1x1x128xf32> to vector<1x128xf32>
      %257 = vector.broadcast %256 : vector<1x128xf32> to vector<32x128xf32>
      %258 = arith.addf %253, %257 : vector<32x128xf32>
      scf.yield %258 : vector<32x128xf32>
    }
    %c2_i32_8 = arith.constant 2 : i32
    %c0_9 = arith.constant 0 : index
    %c0_10 = arith.constant 0 : index
    %14 = vector.load %arg16[%c0_9, %c0_10] : memref<1x128xf32, #tpu.memory_space<vmem>>, vector<1x128xf32>
    %c0_11 = arith.constant 0 : index
    %c0_12 = arith.constant 0 : index
    %15 = vector.load %arg17[%c0_11, %c0_12] : memref<1x128xf32, #tpu.memory_space<vmem>>, vector<1x128xf32>
    %cst_13 = arith.constant dense<0.000000e+00> : vector<32xf32>
    %16 = vector.multi_reduction <add>, %13, %cst_13 [1] : vector<32x128xf32> to vector<32xf32>
    %17 = vector.shape_cast %16 : vector<32xf32> to vector<32x1xf32>
    %cst_14 = arith.constant 1.280000e+02 : f32
    %18 = vector.broadcast %cst_14 : f32 to vector<32x1xf32>
    %19 = arith.divf %17, %18 : vector<32x1xf32>
    %20 = vector.broadcast %19 : vector<32x1xf32> to vector<32x128xf32>
    %21 = arith.subf %13, %20 : vector<32x128xf32>
    %22 = arith.mulf %21, %21 : vector<32x128xf32>
    %cst_15 = arith.constant dense<0.000000e+00> : vector<32xf32>
    %23 = vector.multi_reduction <add>, %22, %cst_15 [1] : vector<32x128xf32> to vector<32xf32>
    %24 = vector.shape_cast %23 : vector<32xf32> to vector<32x1xf32>
    %cst_16 = arith.constant 1.280000e+02 : f32
    %25 = vector.broadcast %cst_16 : f32 to vector<32x1xf32>
    %26 = arith.divf %24, %25 : vector<32x1xf32>
    %27 = vector.broadcast %19 : vector<32x1xf32> to vector<32x128xf32>
    %28 = arith.subf %13, %27 : vector<32x128xf32>
    %cst_17 = arith.constant 9.99999997E-7 : f32
    %29 = vector.broadcast %cst_17 : f32 to vector<32x1xf32>
    %30 = arith.addf %26, %29 : vector<32x1xf32>
    %31 = math.rsqrt %30 : vector<32x1xf32>
    %32 = vector.broadcast %31 : vector<32x1xf32> to vector<32x128xf32>
    %33 = arith.mulf %28, %32 : vector<32x128xf32>
    %34 = vector.broadcast %14 : vector<1x128xf32> to vector<32x128xf32>
    %35 = arith.mulf %33, %34 : vector<32x128xf32>
    %36 = vector.broadcast %15 : vector<1x128xf32> to vector<32x128xf32>
    %37 = arith.addf %35, %36 : vector<32x128xf32>
    %38 = arith.truncf %37 : vector<32x128xf32> to vector<32x128xbf16>
    %c0_18 = arith.constant 0 : index
    %c0_19 = arith.constant 0 : index
    %39 = vector.load %arg18[%c0_18, %c0_19] : memref<16x32xbf16, #tpu.memory_space<vmem>>, vector<16x32xbf16>
    %cst_20 = arith.constant dense<0.000000e+00> : vector<16x128xf32>
    %40 = tpu.matmul %39, %38, %cst_20 {dimension_numbers = #tpu.dot_dimension_numbers<[1], [0], [0], [1], [0, 0, 1, 1], [], []>} : vector<16x32xbf16>, vector<32x128xbf16>, vector<16x128xf32> -> vector<16x128xf32>
    %41 = vector.extract_strided_slice %40 {offsets = [0, 0], sizes = [4, 128], strides = [1, 1]} : vector<16x128xf32> to vector<4x128xf32>
    %42 = vector.extract_strided_slice %40 {offsets = [4, 0], sizes = [4, 128], strides = [1, 1]} : vector<16x128xf32> to vector<4x128xf32>
    %43 = vector.extract_strided_slice %40 {offsets = [8, 0], sizes = [4, 128], strides = [1, 1]} : vector<16x128xf32> to vector<4x128xf32>
    %44 = vector.extract_strided_slice %40 {offsets = [12, 0], sizes = [4, 128], strides = [1, 1]} : vector<16x128xf32> to vector<4x128xf32>
    %45 = arith.addf %41, %42 : vector<4x128xf32>
    %46 = arith.maximumf %41, %42 : vector<4x128xf32>
    %47 = arith.addf %45, %43 : vector<4x128xf32>
    %48 = arith.maximumf %46, %43 : vector<4x128xf32>
    %49 = arith.addf %47, %44 : vector<4x128xf32>
    %50 = arith.maximumf %48, %44 : vector<4x128xf32>
    %cst_21 = arith.constant 2.500000e-01 : f32
    %51 = vector.broadcast %cst_21 : f32 to vector<4x128xf32>
    %52 = arith.mulf %49, %51 : vector<4x128xf32>
    %53 = arith.addf %52, %50 : vector<4x128xf32>
    %cst_22 = arith.constant 5.000000e-01 : f32
    %54 = vector.broadcast %cst_22 : f32 to vector<4x128xf32>
    %55 = arith.mulf %53, %54 : vector<4x128xf32>
    %c0_23 = arith.constant 0 : index
    %c0_24 = arith.constant 0 : index
    %c0_25 = arith.constant 0 : index
    %56 = vector.load %arg19[%c0_23, %c0_24, %c0_25] : memref<1x4x128xf32, #tpu.memory_space<vmem>>, vector<1x4x128xf32>
    %57 = vector.shape_cast %56 : vector<1x4x128xf32> to vector<4x128xf32>
    %58 = vector.shape_cast %55 : vector<4x128xf32> to vector<1x4x128xf32>
    tpu.vector_store %arg19[%c0_23, %c0_24, %c0_25], %58 {strides = array<i32>} : memref<1x4x128xf32, #tpu.memory_space<vmem>>, vector<1x4x128xf32>,
    return
  }
  func.func @transform_0(%arg0: i32) -> (i32, i32, i32) {
    %c0_i32 = arith.constant 0 : i32
    %c0_i32_0 = arith.constant 0 : i32
    %c0_i32_1 = arith.constant 0 : i32
    return %arg0, %c0_i32, %c0_i32_0 : i32, i32, i32
  }
  func.func @transform_1(%arg0: i32) -> (i32, i32) {
    %c0_i32 = arith.constant 0 : i32
    %c0_i32_0 = arith.constant 0 : i32
    %c0_i32_1 = arith.constant 0 : i32
    return %c0_i32, %c0_i32_0 : i32, i32
  }
  func.func @transform_2(%arg0: i32) -> (i32, i32) {
    %c0_i32 = arith.constant 0 : i32
    %c0_i32_0 = arith.constant 0 : i32
    %c0_i32_1 = arith.constant 0 : i32
    return %c0_i32, %c0_i32_0 : i32, i32
  }
  func.func @transform_3(%arg0: i32) -> (i32, i32, i32) {
    %c0_i32 = arith.constant 0 : i32
    %c0_i32_0 = arith.constant 0 : i32
    %c0_i32_1 = arith.constant 0 : i32
    %c0_i32_2 = arith.constant 0 : i32
    return %c0_i32, %c0_i32_0, %c0_i32_1 : i32, i32, i32
  }
  func.func @transform_4(%arg0: i32) -> (i32, i32, i32) {
    %c0_i32 = arith.constant 0 : i32
    %c0_i32_0 = arith.constant 0 : i32
    %c0_i32_1 = arith.constant 0 : i32
    %c0_i32_2 = arith.constant 0 : i32
    return %c0_i32, %c0_i32_0, %c0_i32_1 : i32, i32, i32
  }
  func.func @transform_5(%arg0: i32) -> (i32, i32, i32) {
    %c0_i32 = arith.constant 0 : i32
    %c0_i32_0 = arith.constant 0 : i32
    %c0_i32_1 = arith.constant 0 : i32
    %c0_i32_2 = arith.constant 0 : i32
    return %c0_i32, %c0_i32_0, %c0_i32_1 : i32, i32, i32
  }
  func.func @transform_6(%arg0: i32) -> (i32, i32, i32) {
    %c0_i32 = arith.constant 0 : i32
    %c0_i32_0 = arith.constant 0 : i32
    %c0_i32_1 = arith.constant 0 : i32
    %c0_i32_2 = arith.constant 0 : i32
    return %c0_i32, %c0_i32_0, %c0_i32_1 : i32, i32, i32
  }
  func.func @transform_7(%arg0: i32) -> (i32, i32, i32) {
    %c0_i32 = arith.constant 0 : i32
    %c0_i32_0 = arith.constant 0 : i32
    %c0_i32_1 = arith.constant 0 : i32
    %c0_i32_2 = arith.constant 0 : i32
    return %c0_i32, %c0_i32_0, %c0_i32_1 : i32, i32, i32
  }
  func.func @transform_8(%arg0: i32) -> (i32, i32, i32) {
    %c0_i32 = arith.constant 0 : i32
    %c0_i32_0 = arith.constant 0 : i32
    %c0_i32_1 = arith.constant 0 : i32
    %c0_i32_2 = arith.constant 0 : i32
    return %c0_i32, %c0_i32_0, %c0_i32_1 : i32, i32, i32
  }
  func.func @transform_9(%arg0: i32) -> (i32, i32, i32) {
    %c0_i32 = arith.constant 0 : i32
    %c0_i32_0 = arith.constant 0 : i32
    %c0_i32_1 = arith.constant 0 : i32
    %c0_i32_2 = arith.constant 0 : i32
    return %c0_i32, %c0_i32_0, %c0_i32_1 : i32, i32, i32
  }
  func.func @transform_10(%arg0: i32) -> (i32, i32, i32) {
    %c0_i32 = arith.constant 0 : i32
    %c0_i32_0 = arith.constant 0 : i32
    %c0_i32_1 = arith.constant 0 : i32
    %c0_i32_2 = arith.constant 0 : i32
    return %c0_i32, %c0_i32_0, %c0_i32_1 : i32, i32, i32
  }
  func.func @transform_11(%arg0: i32) -> (i32, i32, i32) {
    %c0_i32 = arith.constant 0 : i32
    %c0_i32_0 = arith.constant 0 : i32
    %c0_i32_1 = arith.constant 0 : i32
    %c0_i32_2 = arith.constant 0 : i32
    return %c0_i32, %c0_i32_0, %c0_i32_1 : i32, i32, i32
  }
  func.func @transform_12(%arg0: i32) -> (i32, i32, i32) {
    %c0_i32 = arith.constant 0 : i32
    %c0_i32_0 = arith.constant 0 : i32
    %c0_i32_1 = arith.constant 0 : i32
    %c0_i32_2 = arith.constant 0 : i32
    return %c0_i32, %c0_i32_0, %c0_i32_1 : i32, i32, i32
  }
  func.func @transform_13(%arg0: i32) -> (i32, i32, i32) {
    %c0_i32 = arith.constant 0 : i32
    %c0_i32_0 = arith.constant 0 : i32
    %c0_i32_1 = arith.constant 0 : i32
    %c0_i32_2 = arith.constant 0 : i32
    return %c0_i32, %c0_i32_0, %c0_i32_1 : i32, i32, i32
  }
  func.func @transform_14(%arg0: i32) -> (i32, i32, i32) {
    %c0_i32 = arith.constant 0 : i32
    %c0_i32_0 = arith.constant 0 : i32
    %c0_i32_1 = arith.constant 0 : i32
    %c0_i32_2 = arith.constant 0 : i32
    return %c0_i32, %c0_i32_0, %c0_i32_1 : i32, i32, i32
  }
  func.func @transform_15(%arg0: i32) -> (i32, i32) {
    %c0_i32 = arith.constant 0 : i32
    %c0_i32_0 = arith.constant 0 : i32
    %c0_i32_1 = arith.constant 0 : i32
    return %c0_i32, %c0_i32_0 : i32, i32
  }
  func.func @transform_16(%arg0: i32) -> (i32, i32) {
    %c0_i32 = arith.constant 0 : i32
    %c0_i32_0 = arith.constant 0 : i32
    %c0_i32_1 = arith.constant 0 : i32
    return %c0_i32, %c0_i32_0 : i32, i32
  }
  func.func @transform_17(%arg0: i32) -> (i32, i32) {
    %c0_i32 = arith.constant 0 : i32
    %c0_i32_0 = arith.constant 0 : i32
    %c0_i32_1 = arith.constant 0 : i32
    return %c0_i32, %c0_i32_0 : i32, i32
  }
  func.func @transform_18(%arg0: i32) -> (i32, i32, i32) {
    %c0_i32 = arith.constant 0 : i32
    %c0_i32_0 = arith.constant 0 : i32
    %c0_i32_1 = arith.constant 0 : i32
    return %arg0, %c0_i32, %c0_i32_0 : i32, i32, i32
  }
}

</mosaic_0001>

<llo_original>
// kernel: audiomae_condition_forward.1
$region0: #{audiomae_condition_forward.1}
  #allocation0 [shape = 'u32[]', space=smem, size = 0x4, offset = 0x4, fixed_abs, tag = 'smem constant byte address 0x4 - core index']
  #allocation1 [shape = 'u32[144,128]{1,0:T(1,128)}', space=vmem, size = 0x12000, scoped, tag = 'internal scratch']
  %s0 = inlined_call_operand.vmem [shape: bf16[2,32,64], index: 0, kind: input, shape index: {}]
  %s1 = inlined_call_operand.hbm [shape: bf16[64,128], index: 1, kind: input, shape index: {}]
  %s2 = inlined_call_operand.vmem [shape: f32[32,128], index: 2, kind: input, shape index: {}]
  %s3 = inlined_call_operand.vmem [shape: f32[2,1,128], index: 3, kind: input, shape index: {}]
  %s4 = inlined_call_operand.vmem [shape: f32[2,1,128], index: 4, kind: input, shape index: {}]
  %s5 = inlined_call_operand.hbm [shape: bf16[2,128,384], index: 5, kind: input, shape index: {}]
  %s6 = inlined_call_operand.hbm [shape: f32[2,1,384], index: 6, kind: input, shape index: {}]
  %s7 = inlined_call_operand.vmem [shape: bf16[2,128,128], index: 7, kind: input, shape index: {}]
  %s8 = inlined_call_operand.hbm [shape: f32[2,1,128], index: 8, kind: input, shape index: {}]
  %s9 = inlined_call_operand.hbm [shape: f32[2,1,128], index: 9, kind: input, shape index: {}]
  %s10 = inlined_call_operand.hbm [shape: f32[2,1,128], index: 10, kind: input, shape index: {}]
  %s11 = inlined_call_operand.vmem [shape: bf16[2,128,512], index: 11, kind: input, shape index: {}]
  %s12 = inlined_call_operand.hbm [shape: f32[2,1,512], index: 12, kind: input, shape index: {}]
  %s13 = inlined_call_operand.hbm [shape: bf16[2,512,128], index: 13, kind: input, shape index: {}]
  %s14 = inlined_call_operand.hbm [shape: f32[2,1,128], index: 14, kind: input, shape index: {}]
  %s15 = inlined_call_operand.vmem [shape: f32[1,128], index: 15, kind: input, shape index: {}]
  %s16 = inlined_call_operand.hbm [shape: f32[1,128], index: 16, kind: input, shape index: {}]
  %s17 = inlined_call_operand.hbm [shape: bf16[16,32], index: 17, kind: input, shape index: {}]
  %s18 = inlined_call_operand.hbm [shape: f32[2,4,128], index: 18, kind: output, shape index: {}]
  %s19 = sld [smem:[#allocation0]]
  $region156: #{audiomae_condition_forward.1} parent=0
    _
  %s21 = ssub.s32 1, %s19
  %s22 = scalar_select 0, %s21, %s19
  $region1: #{audiomae_condition_forward.1} parent=0
    #allocation2 [shape = 'u8[16384]{0}', space=vmem, size = 0x4000, scoped, tag = 'input window, operand 1, single buffered']
    #allocation3 [shape = 's32[2]{0}', space=sflag, size = 0x8, scoped, tag = 'scoped memory for audiomae_condition_forward.1']
    #allocation4 [shape = 's32[2]{0}', space=sflag, size = 0x8, scoped, tag = 'scoped memory for audiomae_condition_forward.1']
    #allocation5 [shape = 'u8[196608]{0}', space=vmem, size = 0x30000, scoped, tag = 'input window, operand 5, single buffered']
    #allocation6 [shape = 's32[1]{0}', space=sflag, size = 0x4, scoped, tag = 'scoped memory for audiomae_condition_forward.1']
    #allocation7 [shape = 'u8[3072]{0}', space=vmem, size = 0xc00, scoped, tag = 'input window, operand 6, single buffered']
    #allocation8 [shape = 'u8[1024]{0}', space=vmem, size = 0x400, scoped, tag = 'input window, operand 8, single buffered']
    #allocation9 [shape = 's32[1]{0}', space=sflag, size = 0x4, scoped, tag = 'scoped memory for audiomae_condition_forward.1']
    #allocation10 [shape = 'u8[1024]{0}', space=vmem, size = 0x400, scoped, tag = 'input window, operand 9, single buffered']
    #allocation11 [shape = 'u8[1024]{0}', space=vmem, size = 0x400, scoped, tag = 'input window, operand 10, single buffered']
    #allocation12 [shape = 's32[1]{0}', space=sflag, size = 0x4, scoped, tag = 'scoped memory for audiomae_condition_forward.1']
    #allocation13 [shape = 'u8[4096]{0}', space=vmem, size = 0x1000, scoped, tag = 'input window, operand 12, single buffered']
    #allocation14 [shape = 'u8[262144]{0}', space=vmem, size = 0x40000, scoped, tag = 'input window, operand 13, single buffered']
    #allocation15 [shape = 's32[1]{0}', space=sflag, size = 0x4, scoped, tag = 'scoped memory for audiomae_condition_forward.1']
    #allocation16 [shape = 'u8[1024]{0}', space=vmem, size = 0x400, scoped, tag = 'input window, operand 14, single buffered']
    #allocation17 [shape = 'u8[512]{0}', space=vmem, size = 0x400, scoped, tag = 'input window, operand 16, single buffered']
    #allocation18 [shape = 's32[1]{0}', space=sflag, size = 0x4, scoped, tag = 'scoped memory for audiomae_condition_forward.1']
    #allocation19 [shape = 'u8[4096]{0}', space=vmem, size = 0x1000, scoped, tag = 'input window, operand 17, single buffered']
    #allocation20 [shape = 'u8[4096]{0}', space=vmem, size = 0x1000, scoped, tag = 'output window, operand 0']
    %23 = vsyncpa [#allocation3], 0
    %24 = vsyncpa [#allocation6], 0
    %25 = vsyncpa [#allocation9], 0
    %26 = vsyncpa [#allocation12], 0
    %27 = vsyncpa [#allocation15], 0
    %28 = vsyncpa [#allocation18], 0
    %29 = vsyncpa [#allocation4], 0
    %s30 = scalar_lea.sflag [#allocation4], 1
    %31 = vsyncpa %s30, 0
    loop: start=0, step=1, limit=4
    $region2: #{audiomae_condition_forward.1} parent=1 // loop_pre_header
      _
    $region3: #{audiomae_condition_forward.1} parent=1 // loop_header
      %s33 = sphi 0, %s37
      %p34 = scmp.ge.s32.totalorder %s33, 4
      %s43 = sphi 0, %s45
      %s46 = sphi 0, %s43
      %s47 = sphi 0, %s46
      %s63 = sphi 0, %s47
      %s67 = sphi 0, %s67
      %s69 = sphi 0, %s67
      %s70 = sphi 0, %s69
      %s84 = sphi 0, %s70
      %s88 = sphi 0, %s88
      %s90 = sphi 0, %s88
      %s91 = sphi 0, %s90
      %s105 = sphi 0, %s91
      %s109 = sphi 0, %s109
      %s111 = sphi 0, %s109
      %s112 = sphi 0, %s111
      %s126 = sphi 0, %s112
      %s130 = sphi 0, %s130
      %s132 = sphi 0, %s130
      %s133 = sphi 0, %s132
      %s147 = sphi 0, %s133
      %s151 = sphi 0, %s151
      %s153 = sphi 0, %s151
      %s154 = sphi 0, %s153
      %s168 = sphi 0, %s154
      %s172 = sphi 0, %s172
      %s174 = sphi 0, %s172
      %s175 = sphi 0, %s174
      %s189 = sphi 0, %s175
      %s193 = sphi 0, %s193
      %s195 = sphi 0, %s193
      %s196 = sphi 0, %s195
      %s210 = sphi 0, %s196
      %s214 = sphi 0, %s214
      %s216 = sphi 0, %s214
      %s217 = sphi 0, %s216
      %s231 = sphi 0, %s217
      %s235 = sphi 0, %s235
      %s237 = sphi 0, %s235
      %s238 = sphi 0, %s237
      %s252 = sphi 0, %s238
      %s256 = sphi 0, %s256
      %s258 = sphi 0, %s256
      %s259 = sphi 0, %s258
      %s273 = sphi 0, %s259
      %s277 = sphi 0, %s277
      %s279 = sphi 0, %s277
      %s280 = sphi 0, %s279
      %s294 = sphi 0, %s280
      %s298 = sphi 0, %s298
      %s300 = sphi 0, %s298
      %s301 = sphi 0, %s300
      %s315 = sphi 0, %s301
      %s319 = sphi 0, %s319
      %s321 = sphi 0, %s319
      %s322 = sphi 0, %s321
      %s336 = sphi 0, %s322
      %s340 = sphi 0, %s340
      %s342 = sphi 0, %s340
      %s343 = sphi 0, %s342
      %s357 = sphi 0, %s343
      %s361 = sphi 0, %s361
      %s363 = sphi 0, %s361
      %s364 = sphi 0, %s363
      %s378 = sphi 0, %s364
      %s382 = sphi 0, %s382
      %s384 = sphi 0, %s382
      %s385 = sphi 0, %s384
      %s399 = sphi 0, %s385
      %s403 = sphi 0, %s403
      %s405 = sphi 0, %s403
      %s406 = sphi 0, %s405
      %s420 = sphi 0, %s406
      %s426 = sphi 0, %s428
      %s429 = sphi 0, %s426
      %s430 = sphi 0, %s429
      %s446 = sphi 0, %s430
    $region4: #{audiomae_condition_forward.1} parent=1 // loop_header_branch
      %36 = sbr.rel (%p34) target = $region8
    $region5: #{audiomae_condition_forward.1} parent=1 // loop_body
      %s38 = ssub.s32 %s33, 1
      %s39 = ssub.s32 %s33, 2
      %s40 = sadd.s32 %s33, 1
      %s41 = ssub.s32 %s33, %s40
      %p42 = scmp.eq.s32.totalorder %s41, 0
      %s44 = sadd.s32 %s43, 1
      %s45 = scalar_select %p42, %s43, %s44
      %p48 = pneg %p42
      %p49 = scmp.eq.s32.totalorder %s33, 1
      %p50 = por %p48, %p49
      %p51 = scmp.ne.s32.totalorder %s43, %s46
      %p52 = scmp.eq.s32.totalorder %s33, 0
      %p53 = por %p51, %p52
      %p54 = scmp.ne.s32.totalorder %s43, %s46
      %p55 = scmp.eq.s32.totalorder %s38, 1
      %p56 = por %p54, %p55
      %p57 = scmp.ne.s32.totalorder %s46, %s47
      %p58 = scmp.eq.s32.totalorder %s38, 0
      %p59 = por %p57, %p58
      %p60 = scmp.ne.s32.totalorder %s46, %s47
      %p61 = scmp.eq.s32.totalorder %s39, 1
      %p62 = por %p60, %p61
      %p64 = scmp.ne.s32.totalorder %s47, %s63
      %p65 = scmp.eq.s32.totalorder %s39, 0
      %p66 = por %p64, %p65
      %s68 = sadd.s32 %s67, 1
      %p71 = scmp.eq.s32.totalorder %s33, 1
      %p72 = scmp.ne.s32.totalorder %s67, %s69
      %p73 = scmp.eq.s32.totalorder %s33, 0
      %p74 = por %p72, %p73
      %p75 = scmp.ne.s32.totalorder %s67, %s69
      %p76 = scmp.eq.s32.totalorder %s38, 1
      %p77 = por %p75, %p76
      %p78 = scmp.ne.s32.totalorder %s69, %s70
      %p79 = scmp.eq.s32.totalorder %s38, 0
      %p80 = por %p78, %p79
      %p81 = scmp.ne.s32.totalorder %s69, %s70
      %p82 = scmp.eq.s32.totalorder %s39, 1
      %p83 = por %p81, %p82
      %p85 = scmp.ne.s32.totalorder %s70, %s84
      %p86 = scmp.eq.s32.totalorder %s39, 0
      %p87 = por %p85, %p86
      %s89 = sadd.s32 %s88, 1
      %p92 = scmp.eq.s32.totalorder %s33, 1
      %p93 = scmp.ne.s32.totalorder %s88, %s90
      %p94 = scmp.eq.s32.totalorder %s33, 0
      %p95 = por %p93, %p94
      %p96 = scmp.ne.s32.totalorder %s88, %s90
      %p97 = scmp.eq.s32.totalorder %s38, 1
      %p98 = por %p96, %p97
      %p99 = scmp.ne.s32.totalorder %s90, %s91
      %p100 = scmp.eq.s32.totalorder %s38, 0
      %p101 = por %p99, %p100
      %p102 = scmp.ne.s32.totalorder %s90, %s91
      %p103 = scmp.eq.s32.totalorder %s39, 1
      %p104 = por %p102, %p103
      %p106 = scmp.ne.s32.totalorder %s91, %s105
      %p107 = scmp.eq.s32.totalorder %s39, 0
      %p108 = por %p106, %p107
      %s110 = sadd.s32 %s109, 1
      %p113 = scmp.eq.s32.totalorder %s33, 1
      %p114 = scmp.ne.s32.totalorder %s109, %s111
      %p115 = scmp.eq.s32.totalorder %s33, 0
      %p116 = por %p114, %p115
      %p117 = scmp.ne.s32.totalorder %s109, %s111
      %p118 = scmp.eq.s32.totalorder %s38, 1
      %p119 = por %p117, %p118
      %p120 = scmp.ne.s32.totalorder %s111, %s112
      %p121 = scmp.eq.s32.totalorder %s38, 0
      %p122 = por %p120, %p121
      %p123 = scmp.ne.s32.totalorder %s111, %s112
      %p124 = scmp.eq.s32.totalorder %s39, 1
      %p125 = por %p123, %p124
      %p127 = scmp.ne.s32.totalorder %s112, %s126
      %p128 = scmp.eq.s32.totalorder %s39, 0
      %p129 = por %p127, %p128
      %s131 = sadd.s32 %s130, 1
      %p134 = scmp.eq.s32.totalorder %s33, 1
      %p135 = scmp.ne.s32.totalorder %s130, %s132
      %p136 = scmp.eq.s32.totalorder %s33, 0
      %p137 = por %p135, %p136
      %p138 = scmp.ne.s32.totalorder %s130, %s132
      %p139 = scmp.eq.s32.totalorder %s38, 1
      %p140 = por %p138, %p139
      %p141 = scmp.ne.s32.totalorder %s132, %s133
      %p142 = scmp.eq.s32.totalorder %s38, 0
      %p143 = por %p141, %p142
      %p144 = scmp.ne.s32.totalorder %s132, %s133
      %p145 = scmp.eq.s32.totalorder %s39, 1
      %p146 = por %p144, %p145
      %p148 = scmp.ne.s32.totalorder %s133, %s147
      %p149 = scmp.eq.s32.totalorder %s39, 0
      %p150 = por %p148, %p149
      %s152 = sadd.s32 %s151, 1
      %p155 = scmp.eq.s32.totalorder %s33, 1
      %p156 = scmp.ne.s32.totalorder %s151, %s153
      %p157 = scmp.eq.s32.totalorder %s33, 0
      %p158 = por %p156, %p157
      %p159 = scmp.ne.s32.totalorder %s151, %s153
      %p160 = scmp.eq.s32.totalorder %s38, 1
      %p161 = por %p159, %p160
      %p162 = scmp.ne.s32.totalorder %s153, %s154
      %p163 = scmp.eq.s32.totalorder %s38, 0
      %p164 = por %p162, %p163
      %p165 = scmp.ne.s32.totalorder %s153, %s154
      %p166 = scmp.eq.s32.totalorder %s39, 1
      %p167 = por %p165, %p166
      %p169 = scmp.ne.s32.totalorder %s154, %s168
      %p170 = scmp.eq.s32.totalorder %s39, 0
      %p171 = por %p169, %p170
      %s173 = sadd.s32 %s172, 1
      %p176 = scmp.eq.s32.totalorder %s33, 1
      %p177 = scmp.ne.s32.totalorder %s172, %s174
      %p178 = scmp.eq.s32.totalorder %s33, 0
      %p179 = por %p177, %p178
      %p180 = scmp.ne.s32.totalorder %s172, %s174
      %p181 = scmp.eq.s32.totalorder %s38, 1
      %p182 = por %p180, %p181
      %p183 = scmp.ne.s32.totalorder %s174, %s175
      %p184 = scmp.eq.s32.totalorder %s38, 0
      %p185 = por %p183, %p184
      %p186 = scmp.ne.s32.totalorder %s174, %s175
      %p187 = scmp.eq.s32.totalorder %s39, 1
      %p188 = por %p186, %p187
      %p190 = scmp.ne.s32.totalorder %s175, %s189
      %p191 = scmp.eq.s32.totalorder %s39, 0
      %p192 = por %p190, %p191
      %s194 = sadd.s32 %s193, 1
      %p197 = scmp.eq.s32.totalorder %s33, 1
      %p198 = scmp.ne.s32.totalorder %s193, %s195
      %p199 = scmp.eq.s32.totalorder %s33, 0
      %p200 = por %p198, %p199
      %p201 = scmp.ne.s32.totalorder %s193, %s195
      %p202 = scmp.eq.s32.totalorder %s38, 1
      %p203 = por %p201, %p202
      %p204 = scmp.ne.s32.totalorder %s195, %s196
      %p205 = scmp.eq.s32.totalorder %s38, 0
      %p206 = por %p204, %p205
      %p207 = scmp.ne.s32.totalorder %s195, %s196
      %p208 = scmp.eq.s32.totalorder %s39, 1
      %p209 = por %p207, %p208
      %p211 = scmp.ne.s32.totalorder %s196, %s210
      %p212 = scmp.eq.s32.totalorder %s39, 0
      %p213 = por %p211, %p212
      %s215 = sadd.s32 %s214, 1
      %p218 = scmp.eq.s32.totalorder %s33, 1
      %p219 = scmp.ne.s32.totalorder %s214, %s216
      %p220 = scmp.eq.s32.totalorder %s33, 0
      %p221 = por %p219, %p220
      %p222 = scmp.ne.s32.totalorder %s214, %s216
      %p223 = scmp.eq.s32.totalorder %s38, 1
      %p224 = por %p222, %p223
      %p225 = scmp.ne.s32.totalorder %s216, %s217
      %p226 = scmp.eq.s32.totalorder %s38, 0
      %p227 = por %p225, %p226
      %p228 = scmp.ne.s32.totalorder %s216, %s217
      %p229 = scmp.eq.s32.totalorder %s39, 1
      %p230 = por %p228, %p229
      %p232 = scmp.ne.s32.totalorder %s217, %s231
      %p233 = scmp.eq.s32.totalorder %s39, 0
      %p234 = por %p232, %p233
      %s236 = sadd.s32 %s235, 1
      %p239 = scmp.eq.s32.totalorder %s33, 1
      %p240 = scmp.ne.s32.totalorder %s235, %s237
      %p241 = scmp.eq.s32.totalorder %s33, 0
      %p242 = por %p240, %p241
      %p243 = scmp.ne.s32.totalorder %s235, %s237
      %p244 = scmp.eq.s32.totalorder %s38, 1
      %p245 = por %p243, %p244
      %p246 = scmp.ne.s32.totalorder %s237, %s238
      %p247 = scmp.eq.s32.totalorder %s38, 0
      %p248 = por %p246, %p247
      %p249 = scmp.ne.s32.totalorder %s237, %s238
      %p250 = scmp.eq.s32.totalorder %s39, 1
      %p251 = por %p249, %p250
      %p253 = scmp.ne.s32.totalorder %s238, %s252
      %p254 = scmp.eq.s32.totalorder %s39, 0
      %p255 = por %p253, %p254
      %s257 = sadd.s32 %s256, 1
      %p260 = scmp.eq.s32.totalorder %s33, 1
      %p261 = scmp.ne.s32.totalorder %s256, %s258
      %p262 = scmp.eq.s32.totalorder %s33, 0
      %p263 = por %p261, %p262
      %p264 = scmp.ne.s32.totalorder %s256, %s258
      %p265 = scmp.eq.s32.totalorder %s38, 1
      %p266 = por %p264, %p265
      %p267 = scmp.ne.s32.totalorder %s258, %s259
      %p268 = scmp.eq.s32.totalorder %s38, 0
      %p269 = por %p267, %p268
      %p270 = scmp.ne.s32.totalorder %s258, %s259
      %p271 = scmp.eq.s32.totalorder %s39, 1
      %p272 = por %p270, %p271
      %p274 = scmp.ne.s32.totalorder %s259, %s273
      %p275 = scmp.eq.s32.totalorder %s39, 0
      %p276 = por %p274, %p275
      %s278 = sadd.s32 %s277, 1
      %p281 = scmp.eq.s32.totalorder %s33, 1
      %p282 = scmp.ne.s32.totalorder %s277, %s279
      %p283 = scmp.eq.s32.totalorder %s33, 0
      %p284 = por %p282, %p283
      %p285 = scmp.ne.s32.totalorder %s277, %s279
      %p286 = scmp.eq.s32.totalorder %s38, 1
      %p287 = por %p285, %p286
      %p288 = scmp.ne.s32.totalorder %s279, %s280
      %p289 = scmp.eq.s32.totalorder %s38, 0
      %p290 = por %p288, %p289
      %p291 = scmp.ne.s32.totalorder %s279, %s280
      %p292 = scmp.eq.s32.totalorder %s39, 1
      %p293 = por %p291, %p292
      %p295 = scmp.ne.s32.totalorder %s280, %s294
      %p296 = scmp.eq.s32.totalorder %s39, 0
      %p297 = por %p295, %p296
      %s299 = sadd.s32 %s298, 1
      %p302 = scmp.eq.s32.totalorder %s33, 1
      %p303 = scmp.ne.s32.totalorder %s298, %s300
      %p304 = scmp.eq.s32.totalorder %s33, 0
      %p305 = por %p303, %p304
      %p306 = scmp.ne.s32.totalorder %s298, %s300
      %p307 = scmp.eq.s32.totalorder %s38, 1
      %p308 = por %p306, %p307
      %p309 = scmp.ne.s32.totalorder %s300, %s301
      %p310 = scmp.eq.s32.totalorder %s38, 0
      %p311 = por %p309, %p310
      %p312 = scmp.ne.s32.totalorder %s300, %s301
      %p313 = scmp.eq.s32.totalorder %s39, 1
      %p314 = por %p312, %p313
      %p316 = scmp.ne.s32.totalorder %s301, %s315
      %p317 = scmp.eq.s32.totalorder %s39, 0
      %p318 = por %p316, %p317
      %s320 = sadd.s32 %s319, 1
      %p323 = scmp.eq.s32.totalorder %s33, 1
      %p324 = scmp.ne.s32.totalorder %s319, %s321
      %p325 = scmp.eq.s32.totalorder %s33, 0
      %p326 = por %p324, %p325
      %p327 = scmp.ne.s32.totalorder %s319, %s321
      %p328 = scmp.eq.s32.totalorder %s38, 1
      %p329 = por %p327, %p328
      %p330 = scmp.ne.s32.totalorder %s321, %s322
      %p331 = scmp.eq.s32.totalorder %s38, 0
      %p332 = por %p330, %p331
      %p333 = scmp.ne.s32.totalorder %s321, %s322
      %p334 = scmp.eq.s32.totalorder %s39, 1
      %p335 = por %p333, %p334
      %p337 = scmp.ne.s32.totalorder %s322, %s336
      %p338 = scmp.eq.s32.totalorder %s39, 0
      %p339 = por %p337, %p338
      %s341 = sadd.s32 %s340, 1
      %p344 = scmp.eq.s32.totalorder %s33, 1
      %p345 = scmp.ne.s32.totalorder %s340, %s342
      %p346 = scmp.eq.s32.totalorder %s33, 0
      %p347 = por %p345, %p346
      %p348 = scmp.ne.s32.totalorder %s340, %s342
      %p349 = scmp.eq.s32.totalorder %s38, 1
      %p350 = por %p348, %p349
      %p351 = scmp.ne.s32.totalorder %s342, %s343
      %p352 = scmp.eq.s32.totalorder %s38, 0
      %p353 = por %p351, %p352
      %p354 = scmp.ne.s32.totalorder %s342, %s343
      %p355 = scmp.eq.s32.totalorder %s39, 1
      %p356 = por %p354, %p355
      %p358 = scmp.ne.s32.totalorder %s343, %s357
      %p359 = scmp.eq.s32.totalorder %s39, 0
      %p360 = por %p358, %p359
      %s362 = sadd.s32 %s361, 1
      %p365 = scmp.eq.s32.totalorder %s33, 1
      %p366 = scmp.ne.s32.totalorder %s361, %s363
      %p367 = scmp.eq.s32.totalorder %s33, 0
      %p368 = por %p366, %p367
      %p369 = scmp.ne.s32.totalorder %s361, %s363
      %p370 = scmp.eq.s32.totalorder %s38, 1
      %p371 = por %p369, %p370
      %p372 = scmp.ne.s32.totalorder %s363, %s364
      %p373 = scmp.eq.s32.totalorder %s38, 0
      %p374 = por %p372, %p373
      %p375 = scmp.ne.s32.totalorder %s363, %s364
      %p376 = scmp.eq.s32.totalorder %s39, 1
      %p377 = por %p375, %p376
      %p379 = scmp.ne.s32.totalorder %s364, %s378
      %p380 = scmp.eq.s32.totalorder %s39, 0
      %p381 = por %p379, %p380
      %s383 = sadd.s32 %s382, 1
      %p386 = scmp.eq.s32.totalorder %s33, 1
      %p387 = scmp.ne.s32.totalorder %s382, %s384
      %p388 = scmp.eq.s32.totalorder %s33, 0
      %p389 = por %p387, %p388
      %p390 = scmp.ne.s32.totalorder %s382, %s384
      %p391 = scmp.eq.s32.totalorder %s38, 1
      %p392 = por %p390, %p391
      %p393 = scmp.ne.s32.totalorder %s384, %s385
      %p394 = scmp.eq.s32.totalorder %s38, 0
      %p395 = por %p393, %p394
      %p396 = scmp.ne.s32.totalorder %s384, %s385
      %p397 = scmp.eq.s32.totalorder %s39, 1
      %p398 = por %p396, %p397
      %p400 = scmp.ne.s32.totalorder %s385, %s399
      %p401 = scmp.eq.s32.totalorder %s39, 0
      %p402 = por %p400, %p401
      %s404 = sadd.s32 %s403, 1
      %p407 = scmp.eq.s32.totalorder %s33, 1
      %p408 = scmp.ne.s32.totalorder %s403, %s405
      %p409 = scmp.eq.s32.totalorder %s33, 0
      %p410 = por %p408, %p409
      %p411 = scmp.ne.s32.totalorder %s403, %s405
      %p412 = scmp.eq.s32.totalorder %s38, 1
      %p413 = por %p411, %p412
      %p414 = scmp.ne.s32.totalorder %s405, %s406
      %p415 = scmp.eq.s32.totalorder %s38, 0
      %p416 = por %p414, %p415
      %p417 = scmp.ne.s32.totalorder %s405, %s406
      %p418 = scmp.eq.s32.totalorder %s39, 1
      %p419 = por %p417, %p418
      %p421 = scmp.ne.s32.totalorder %s406, %s420
      %p422 = scmp.eq.s32.totalorder %s39, 0
      %p423 = por %p421, %p422
      %s424 = ssub.s32 %s33, %s40
      %p425 = scmp.eq.s32.totalorder %s424, 0
      %s427 = sadd.s32 %s426, 1
      %s428 = scalar_select %p425, %s426, %s427
      %p431 = pneg %p425
      %p432 = scmp.eq.s32.totalorder %s33, 1
      %p433 = por %p431, %p432
      %p434 = scmp.ne.s32.totalorder %s426, %s429
      %p435 = scmp.eq.s32.totalorder %s33, 0
      %p436 = por %p434, %p435
      %p437 = scmp.ne.s32.totalorder %s426, %s429
      %p438 = scmp.eq.s32.totalorder %s38, 1
      %p439 = por %p437, %p438
      %p440 = scmp.ne.s32.totalorder %s429, %s430
      %p441 = scmp.eq.s32.totalorder %s38, 0
      %p442 = por %p440, %p441
      %p443 = scmp.ne.s32.totalorder %s429, %s430
      %p444 = scmp.eq.s32.totalorder %s39, 1
      %p445 = por %p443, %p444
      %p447 = scmp.ne.s32.totalorder %s430, %s446
      %p448 = scmp.eq.s32.totalorder %s39, 0
      %p449 = por %p447, %p448
      %p450 = scmp.le.s32.totalorder 1, %s33
      %p451 = scmp.lt.s32.totalorder %s33, 3
      %p452 = pnand %p450, %p451
      %p453 = pneg %p452
      // Predicated region
      $region9: #{audiomae_condition_forward.1} parent=5 // pred_check
        _
      $region10: #{audiomae_condition_forward.1} parent=5 // pred_check_branch
        %455 = sbr.rel (%p452) target = $region12
      $region11: #{audiomae_condition_forward.1} parent=5 // pred_region
        %s456 = ssub.s32 %s33, 1
        // Predicated region
        $region13: #{audiomae_condition_forward.1} parent=11 // pred_check
          %p457 = pneg %p80
        $region14: #{audiomae_condition_forward.1} parent=11 // pred_check_branch
          %459 = sbr.rel (%p457) target = $region16
        $region15: #{audiomae_condition_forward.1} parent=11 // pred_region
          %s461 = ssub.s32 512, 512
          %462 = vsyncadd [#allocation3], %s461
          %s463 = sshll.u32 [#allocation2], 4
          %s464 = int_to_ptr.vmem [resolvable:$true] %s463
          %469 = dma.hbm_to_vmem [thread:$0]  %s1, 512, %s464, [#allocation3], 64, 64, 4
        $region16: #{audiomae_condition_forward.1} parent=11 // pred_fallthru
          _
        // Predicated region
        $region17: #{audiomae_condition_forward.1} parent=11 // pred_check
          %p470 = pneg %p101
        $region18: #{audiomae_condition_forward.1} parent=11 // pred_check_branch
          %472 = sbr.rel (%p470) target = $region20
        $region19: #{audiomae_condition_forward.1} parent=11 // pred_region
          _
        $region20: #{audiomae_condition_forward.1} parent=11 // pred_fallthru
          _
        // Predicated region
        $region21: #{audiomae_condition_forward.1} parent=11 // pred_check
          %p473 = pneg %p122
        $region22: #{audiomae_condition_forward.1} parent=11 // pred_check_branch
          %475 = sbr.rel (%p473) target = $region24
        $region23: #{audiomae_condition_forward.1} parent=11 // pred_region
          _
        $region24: #{audiomae_condition_forward.1} parent=11 // pred_fallthru
          _
        // Predicated region
        $region25: #{audiomae_condition_forward.1} parent=11 // pred_check
          %p476 = pneg %p143
        $region26: #{audiomae_condition_forward.1} parent=11 // pred_check_branch
          %478 = sbr.rel (%p476) target = $region28
        $region27: #{audiomae_condition_forward.1} parent=11 // pred_region
          _
        $region28: #{audiomae_condition_forward.1} parent=11 // pred_fallthru
          _
        // Predicated region
        $region29: #{audiomae_condition_forward.1} parent=11 // pred_check
          %p479 = pneg %p164
        $region30: #{audiomae_condition_forward.1} parent=11 // pred_check_branch
          %481 = sbr.rel (%p479) target = $region32
        $region31: #{audiomae_condition_forward.1} parent=11 // pred_region
          %s483 = ssub.s32 6144, 6144
          %484 = vsyncadd [#allocation6], %s483
          %s485 = sshll.u32 [#allocation5], 4
          %s486 = int_to_ptr.vmem [resolvable:$true] %s485
          %491 = dma.hbm_to_vmem [thread:$0]  %s5, 6144, %s486, [#allocation6], 192, 192, 12
        $region32: #{audiomae_condition_forward.1} parent=11 // pred_fallthru
          _
        // Predicated region
        $region33: #{audiomae_condition_forward.1} parent=11 // pred_check
          %p492 = pneg %p185
        $region34: #{audiomae_condition_forward.1} parent=11 // pred_check_branch
          %494 = sbr.rel (%p492) target = $region36
        $region35: #{audiomae_condition_forward.1} parent=11 // pred_region
          %s496 = ssub.s32 96, 96
          %497 = vsyncadd [#allocation6], %s496
          %s498 = sshll.u32 [#allocation7], 4
          %s499 = int_to_ptr.vmem [resolvable:$true] %s498
          %504 = dma.hbm_to_vmem [thread:$0]  %s6, 96, %s499, [#allocation6], 48, 48, 3
        $region36: #{audiomae_condition_forward.1} parent=11 // pred_fallthru
          _
        // Predicated region
        $region37: #{audiomae_condition_forward.1} parent=11 // pred_check
          %p505 = pneg %p206
        $region38: #{audiomae_condition_forward.1} parent=11 // pred_check_branch
          %507 = sbr.rel (%p505) target = $region40
        $region39: #{audiomae_condition_forward.1} parent=11 // pred_region
          _
        $region40: #{audiomae_condition_forward.1} parent=11 // pred_fallthru
          _
        // Predicated region
        $region41: #{audiomae_condition_forward.1} parent=11 // pred_check
          %p508 = pneg %p227
        $region42: #{audiomae_condition_forward.1} parent=11 // pred_check_branch
          %510 = sbr.rel (%p508) target = $region44
        $region43: #{audiomae_condition_forward.1} parent=11 // pred_region
          %s512 = ssub.s32 32, 32
          %513 = vsyncadd [#allocation9], %s512
          %s514 = sshll.u32 [#allocation8], 4
          %s515 = int_to_ptr.vmem [resolvable:$true] %s514
          %520 = dma.hbm_to_vmem [thread:$0]  %s8, 32, %s515, [#allocation9], 16, 16, 1
        $region44: #{audiomae_condition_forward.1} parent=11 // pred_fallthru
          _
        // Predicated region
        $region45: #{audiomae_condition_forward.1} parent=11 // pred_check
          %p521 = pneg %p248
        $region46: #{audiomae_condition_forward.1} parent=11 // pred_check_branch
          %523 = sbr.rel (%p521) target = $region48
        $region47: #{audiomae_condition_forward.1} parent=11 // pred_region
          %s525 = ssub.s32 32, 32
          %526 = vsyncadd [#allocation9], %s525
          %s527 = sshll.u32 [#allocation10], 4
          %s528 = int_to_ptr.vmem [resolvable:$true] %s527
          %533 = dma.hbm_to_vmem [thread:$0]  %s9, 32, %s528, [#allocation9], 16, 16, 1
        $region48: #{audiomae_condition_forward.1} parent=11 // pred_fallthru
          _
        // Predicated region
        $region49: #{audiomae_condition_forward.1} parent=11 // pred_check
          %p534 = pneg %p269
        $region50: #{audiomae_condition_forward.1} parent=11 // pred_check_branch
          %536 = sbr.rel (%p534) target = $region52
        $region51: #{audiomae_condition_forward.1} parent=11 // pred_region
          %s538 = ssub.s32 32, 32
          %539 = vsyncadd [#allocation12], %s538
          %s540 = sshll.u32 [#allocation11], 4
          %s541 = int_to_ptr.vmem [resolvable:$true] %s540
          %546 = dma.hbm_to_vmem [thread:$0]  %s10, 32, %s541, [#allocation12], 16, 16, 1
        $region52: #{audiomae_condition_forward.1} parent=11 // pred_fallthru
          _
        // Predicated region
        $region53: #{audiomae_condition_forward.1} parent=11 // pred_check
          %p547 = pneg %p290
        $region54: #{audiomae_condition_forward.1} parent=11 // pred_check_branch
          %549 = sbr.rel (%p547) target = $region56
        $region55: #{audiomae_condition_forward.1} parent=11 // pred_region
          _
        $region56: #{audiomae_condition_forward.1} parent=11 // pred_fallthru
          _
        // Predicated region
        $region57: #{audiomae_condition_forward.1} parent=11 // pred_check
          %p550 = pneg %p311
        $region58: #{audiomae_condition_forward.1} parent=11 // pred_check_branch
          %552 = sbr.rel (%p550) target = $region60
        $region59: #{audiomae_condition_forward.1} parent=11 // pred_region
          %s554 = ssub.s32 128, 128
          %555 = vsyncadd [#allocation12], %s554
          %s556 = sshll.u32 [#allocation13], 4
          %s557 = int_to_ptr.vmem [resolvable:$true] %s556
          %562 = dma.hbm_to_vmem [thread:$0]  %s12, 128, %s557, [#allocation12], 64, 64, 4
        $region60: #{audiomae_condition_forward.1} parent=11 // pred_fallthru
          _
        // Predicated region
        $region61: #{audiomae_condition_forward.1} parent=11 // pred_check
          %p563 = pneg %p332
        $region62: #{audiomae_condition_forward.1} parent=11 // pred_check_branch
          %565 = sbr.rel (%p563) target = $region64
        $region63: #{audiomae_condition_forward.1} parent=11 // pred_region
          %s567 = ssub.s32 8192, 8192
          %568 = vsyncadd [#allocation15], %s567
          %s569 = sshll.u32 [#allocation14], 4
          %s570 = int_to_ptr.vmem [resolvable:$true] %s569
          %575 = dma.hbm_to_vmem [thread:$0]  %s13, 8192, %s570, [#allocation15], 64, 64, 4
        $region64: #{audiomae_condition_forward.1} parent=11 // pred_fallthru
          _
        // Predicated region
        $region65: #{audiomae_condition_forward.1} parent=11 // pred_check
          %p576 = pneg %p353
        $region66: #{audiomae_condition_forward.1} parent=11 // pred_check_branch
          %578 = sbr.rel (%p576) target = $region68
        $region67: #{audiomae_condition_forward.1} parent=11 // pred_region
          %s580 = ssub.s32 32, 32
          %581 = vsyncadd [#allocation15], %s580
          %s582 = sshll.u32 [#allocation16], 4
          %s583 = int_to_ptr.vmem [resolvable:$true] %s582
          %588 = dma.hbm_to_vmem [thread:$0]  %s14, 32, %s583, [#allocation15], 16, 16, 1
        $region68: #{audiomae_condition_forward.1} parent=11 // pred_fallthru
          _
        // Predicated region
        $region69: #{audiomae_condition_forward.1} parent=11 // pred_check
          %p589 = pneg %p374
        $region70: #{audiomae_condition_forward.1} parent=11 // pred_check_branch
          %591 = sbr.rel (%p589) target = $region72
        $region71: #{audiomae_condition_forward.1} parent=11 // pred_region
          _
        $region72: #{audiomae_condition_forward.1} parent=11 // pred_fallthru
          _
        // Predicated region
        $region73: #{audiomae_condition_forward.1} parent=11 // pred_check
          %p592 = pneg %p395
        $region74: #{audiomae_condition_forward.1} parent=11 // pred_check_branch
          %594 = sbr.rel (%p592) target = $region76
        $region75: #{audiomae_condition_forward.1} parent=11 // pred_region
          %s596 = ssub.s32 16, 16
          %597 = vsyncadd [#allocation18], %s596
          %s599 = sshll.u32 [#allocation17], 4
          %s600 = int_to_ptr.vmem [resolvable:$true] %s599
          %602 = dma.hbm_to_vmem [thread:$0]  %s16, 16, %s600, [#allocation18]
        $region76: #{audiomae_condition_forward.1} parent=11 // pred_fallthru
          _
        // Predicated region
        $region77: #{audiomae_condition_forward.1} parent=11 // pred_check
          %p603 = pneg %p416
        $region78: #{audiomae_condition_forward.1} parent=11 // pred_check_branch
          %605 = sbr.rel (%p603) target = $region80
        $region79: #{audiomae_condition_forward.1} parent=11 // pred_region
          %s607 = ssub.s32 128, 128
          %608 = vsyncadd [#allocation18], %s607
          %s609 = sshll.u32 [#allocation19], 4
          %s610 = int_to_ptr.vmem [resolvable:$true] %s609
          %615 = dma.hbm_to_vmem [thread:$0]  %s17, 128, %s610, [#allocation18], 64, 64, 4
        $region80: #{audiomae_condition_forward.1} parent=11 // pred_fallthru
          _
      $region12: #{audiomae_condition_forward.1} parent=5 // pred_fallthru
        _
      %p616 = scmp.lt.s32.totalorder %s33, 2
      // Predicated region
      $region81: #{audiomae_condition_forward.1} parent=5 // pred_check
        %p617 = pneg %p616
      $region82: #{audiomae_condition_forward.1} parent=5 // pred_check_branch
        %619 = sbr.rel (%p617) target = $region84
      $region83: #{audiomae_condition_forward.1} parent=5 // pred_region
        // Predicated region
        $region85: #{audiomae_condition_forward.1} parent=83 // pred_check
          %p620 = pneg %p53
        $region86: #{audiomae_condition_forward.1} parent=83 // pred_check_branch
          %622 = sbr.rel (%p620) target = $region88
        $region87: #{audiomae_condition_forward.1} parent=83 // pred_region
          %p623 = scmp.lt.s32.totalorder %s33, 1
          %s624 = scalar_select %p623, %s33, 1
          %s625 = smul.addr %s624, 4
          %s626 = smul.addr %s625, 4
          %s627 = scalar_lea.vmem %s0, %s626
        $region88: #{audiomae_condition_forward.1} parent=83 // pred_fallthru
          _
      $region84: #{audiomae_condition_forward.1} parent=5 // pred_fallthru
        _
      %p628 = scmp.le.s32.totalorder 1, %s33
      %p629 = scmp.lt.s32.totalorder %s33, 3
      %p630 = pnand %p628, %p629
      %p631 = pneg %p630
      // Predicated region
      $region89: #{audiomae_condition_forward.1} parent=5 // pred_check
        _
      $region90: #{audiomae_condition_forward.1} parent=5 // pred_check_branch
        %633 = sbr.rel (%p630) target = $region92
      $region91: #{audiomae_condition_forward.1} parent=5 // pred_region
        %s634 = ssub.s32 %s33, 1
        // Predicated region
        $region93: #{audiomae_condition_forward.1} parent=91 // pred_check
          %p635 = pneg %p80
        $region94: #{audiomae_condition_forward.1} parent=91 // pred_check_branch
          %637 = sbr.rel (%p635) target = $region96
        $region95: #{audiomae_condition_forward.1} parent=91 // pred_region
          %638 = dma.done [#allocation3], 512
        $region96: #{audiomae_condition_forward.1} parent=91 // pred_fallthru
          _
        // Predicated region
        $region97: #{audiomae_condition_forward.1} parent=91 // pred_check
          %p639 = pneg %p164
        $region98: #{audiomae_condition_forward.1} parent=91 // pred_check_branch
          %641 = sbr.rel (%p639) target = $region100
        $region99: #{audiomae_condition_forward.1} parent=91 // pred_region
          %642 = dma.done [#allocation6], 6144
        $region100: #{audiomae_condition_forward.1} parent=91 // pred_fallthru
          _
        // Predicated region
        $region101: #{audiomae_condition_forward.1} parent=91 // pred_check
          %p643 = pneg %p185
        $region102: #{audiomae_condition_forward.1} parent=91 // pred_check_branch
          %645 = sbr.rel (%p643) target = $region104
        $region103: #{audiomae_condition_forward.1} parent=91 // pred_region
          %646 = dma.done [#allocation6], 96
        $region104: #{audiomae_condition_forward.1} parent=91 // pred_fallthru
          _
        // Predicated region
        $region105: #{audiomae_condition_forward.1} parent=91 // pred_check
          %p647 = pneg %p227
        $region106: #{audiomae_condition_forward.1} parent=91 // pred_check_branch
          %649 = sbr.rel (%p647) target = $region108
        $region107: #{audiomae_condition_forward.1} parent=91 // pred_region
          %650 = dma.done [#allocation9], 32
        $region108: #{audiomae_condition_forward.1} parent=91 // pred_fallthru
          _
        // Predicated region
        $region109: #{audiomae_condition_forward.1} parent=91 // pred_check
          %p651 = pneg %p248
        $region110: #{audiomae_condition_forward.1} parent=91 // pred_check_branch
          %653 = sbr.rel (%p651) target = $region112
        $region111: #{audiomae_condition_forward.1} parent=91 // pred_region
          %654 = dma.done [#allocation9], 32
        $region112: #{audiomae_condition_forward.1} parent=91 // pred_fallthru
          _
        // Predicated region
        $region113: #{audiomae_condition_forward.1} parent=91 // pred_check
          %p655 = pneg %p269
        $region114: #{audiomae_condition_forward.1} parent=91 // pred_check_branch
          %657 = sbr.rel (%p655) target = $region116
        $region115: #{audiomae_condition_forward.1} parent=91 // pred_region
          %658 = dma.done [#allocation12], 32
        $region116: #{audiomae_condition_forward.1} parent=91 // pred_fallthru
          _
        // Predicated region
        $region117: #{audiomae_condition_forward.1} parent=91 // pred_check
          %p659 = pneg %p311
        $region118: #{audiomae_condition_forward.1} parent=91 // pred_check_branch
          %661 = sbr.rel (%p659) target = $region120
        $region119: #{audiomae_condition_forward.1} parent=91 // pred_region
          %662 = dma.done [#allocation12], 128
        $region120: #{audiomae_condition_forward.1} parent=91 // pred_fallthru
          _
        // Predicated region
        $region121: #{audiomae_condition_forward.1} parent=91 // pred_check
          %p663 = pneg %p332
        $region122: #{audiomae_condition_forward.1} parent=91 // pred_check_branch
          %665 = sbr.rel (%p663) target = $region124
        $region123: #{audiomae_condition_forward.1} parent=91 // pred_region
          %666 = dma.done [#allocation15], 8192
        $region124: #{audiomae_condition_forward.1} parent=91 // pred_fallthru
          _
        // Predicated region
        $region125: #{audiomae_condition_forward.1} parent=91 // pred_check
          %p667 = pneg %p353
        $region126: #{audiomae_condition_forward.1} parent=91 // pred_check_branch
          %669 = sbr.rel (%p667) target = $region128
        $region127: #{audiomae_condition_forward.1} parent=91 // pred_region
          %670 = dma.done [#allocation15], 32
        $region128: #{audiomae_condition_forward.1} parent=91 // pred_fallthru
          _
        // Predicated region
        $region129: #{audiomae_condition_forward.1} parent=91 // pred_check
          %p671 = pneg %p395
        $region130: #{audiomae_condition_forward.1} parent=91 // pred_check_branch
          %673 = sbr.rel (%p671) target = $region132
        $region131: #{audiomae_condition_forward.1} parent=91 // pred_region
          %674 = dma.done [#allocation18], 16
        $region132: #{audiomae_condition_forward.1} parent=91 // pred_fallthru
          _
        // Predicated region
        $region133: #{audiomae_condition_forward.1} parent=91 // pred_check
          %p675 = pneg %p416
        $region134: #{audiomae_condition_forward.1} parent=91 // pred_check_branch
          %677 = sbr.rel (%p675) target = $region136
        $region135: #{audiomae_condition_forward.1} parent=91 // pred_region
          %678 = dma.done [#allocation18], 128
        $region136: #{audiomae_condition_forward.1} parent=91 // pred_fallthru
          _
        %p679 = scmp.lt.s32.totalorder %s38, 1
        %s680 = scalar_select %p679, %s38, 1
        %s681 = smul.addr %s680, 4
        %s682 = smul.addr %s681, 4
        %s683 = scalar_lea.vmem %s0, %s682
        %p684 = pneg %p59
        %p685 = pneg %p56
        %p686 = pneg %p80
        %p687 = pneg %p77
        %p688 = pneg %p101
        %p689 = pneg %p98
        %p690 = pneg %p122
        %p691 = pneg %p119
        %p692 = pneg %p143
        %p693 = pneg %p140
        %p694 = pneg %p164
        %p695 = pneg %p161
        %p696 = pneg %p185
        %p697 = pneg %p182
        %p698 = pneg %p206
        %p699 = pneg %p203
        %p700 = pneg %p227
        %p701 = pneg %p224
        %p702 = pneg %p248
        %p703 = pneg %p245
        %p704 = pneg %p269
        %p705 = pneg %p266
        %p706 = pneg %p290
        %p707 = pneg %p287
        %p708 = pneg %p311
        %p709 = pneg %p308
        %p710 = pneg %p332
        %p711 = pneg %p329
        %p712 = pneg %p353
        %p713 = pneg %p350
        %p714 = pneg %p374
        %p715 = pneg %p371
        %p716 = pneg %p395
        %p717 = pneg %p392
        %p718 = pneg %p416
        %p719 = pneg %p413
        %p720 = pneg %p442
        %p721 = pneg %p439
        %s722 = sand.u32 %s429, 1
        %s723 = scalar_lea.sflag [#allocation4], %s722
        %s724 = sand.u32 %s429, 1
        %s725 = smul.addr %s724, 4
        %s726 = scalar_lea.vmem [#allocation20], %s725
        %p727 = scmp.lt.s32.totalorder %s38, 1
        %s728 = scalar_select %p727, %s38, 1
        %s729 = smul.addr %s728, 4
        %s730 = smul.addr %s729, 4
        %s731 = scalar_lea.vmem %s0, %s730
        %v733 = vld [vmem:[%s731] sm:$0xf]
        %v734 = vld [vmem:[%s731 + $0x4] sm:$0xf]
        %v735 = vld [vmem:[%s731 + $0x8] sm:$0xf]
        %v736 = vld [vmem:[%s731 + $0xc] sm:$0xf]
        %v737 = vld [vmem:[#allocation2] sm:$0xf]
        %v738 = vld [vmem:[#allocation2 + $0x4] sm:$0xf]
        %v739 = vld [vmem:[#allocation2 + $0x8] sm:$0xf]
        %v740 = vld [vmem:[#allocation2 + $0xc] sm:$0xf]
        %v741 = vld [vmem:[#allocation2 + $0x10] sm:$0xf]
        %v742 = vld [vmem:[#allocation2 + $0x14] sm:$0xf]
        %v743 = vld [vmem:[#allocation2 + $0x18] sm:$0xf]
        %v744 = vld [vmem:[#allocation2 + $0x1c] sm:$0xf]
        %v745 = vld [vmem:[%s2] sm:$0xff]
        %v746 = vld [vmem:[%s2 + $0x8] sm:$0xff]
        %v747 = vld [vmem:[%s2 + $0x10] sm:$0xff]
        %v748 = vld [vmem:[%s2 + $0x18] sm:$0xff]
        %v753 = vunpack.c.l.b16 %v733
        %v754 = vunpack.c.l.b16 %v734
        %v755 = vunpack.c.l.b16 %v735
        %v756 = vunpack.c.l.b16 %v736
        %v757 = vpack.c.b16 %v754, %v753
        %v758 = vpack.c.b16 %v756, %v755
        %v767 = vunpack.c.l.b16 %v737
        %v768 = vunpack.c.l.b16 %v738
        %v769 = vunpack.c.l.b16 %v739
        %v770 = vunpack.c.l.b16 %v740
        %v771 = vunpack.c.l.b16 %v741
        %v772 = vunpack.c.l.b16 %v742
        %v773 = vunpack.c.l.b16 %v743
        %v774 = vunpack.c.l.b16 %v744
        %v775 = vpack.c.b16 %v768, %v767
        %v776 = vpack.c.b16 %v770, %v769
        %v777 = vpack.c.b16 %v772, %v771
        %v778 = vpack.c.b16 %v774, %v773
        %vm783 = vcmask 523264
        %v785 = vsel %vm783, %v757, 0
        %v788 = vsel %vm783, %v758, 0
        %790 = vmatprep.subr.bf16.mxu0 0
        %791 = vmatpush1.bf16.msra.mxu0 %v775
        %792 = vmatprep.subr.bf16.mxu0 0
        %793 = vmatpush1.bf16.msra.mxu0 %v776
        %794 = vmatprep.subr.bf16.mxu0 0
        %795 = vmatpush1.bf16.msra.mxu0 %v777
        %796 = vmatprep.subr.bf16.mxu0 0
        %797 = vmatpush1.bf16.msra.mxu0 %v778
        %798 = vmatprep.subr.bf16.mxu0 0
        %799 = vmatpush1.bf16.msra.mxu0 0
        %800 = vmatprep.subr.bf16.mxu0 0
        %801 = vmatpush1.bf16.msra.mxu0 0
        %802 = vmatprep.subr.bf16.mxu0 0
        %803 = vmatpush1.bf16.msra.mxu0 0
        %804 = vmatprep.subr.bf16.mxu0 0
        %805 = vmatpush1.bf16.msra.mxu0 0
        %806 = vmatprep.subr.bf16.mxu0 0
        %807 = vmatpush1.bf16.msra.mxu0 0
        %808 = vmatprep.subr.bf16.mxu0 0
        %809 = vmatpush1.bf16.msra.mxu0 0
        %810 = vmatprep.subr.bf16.mxu0 0
        %811 = vmatpush1.bf16.msra.mxu0 0
        %812 = vmatprep.subr.bf16.mxu0 0
        %813 = vmatpush1.bf16.msra.mxu0 0
        %814 = vmatprep.subr.bf16.mxu0 0
        %815 = vmatpush1.bf16.msra.mxu0 0
        %816 = vmatprep.subr.bf16.mxu0 0
        %817 = vmatpush1.bf16.msra.mxu0 0
        %818 = vmatprep.subr.bf16.mxu0 0
        %819 = vmatpush1.bf16.msra.mxu0 0
        %820 = vmatprep.subr.bf16.mxu0 0
        %821 = vmatpush1.bf16.msra.mxu0 0
        %822 = vmatprep.mubr.bf16.mxu0 0
        %823 = vmatmul.mubr.bf16.gmra.mrb[0].mxu0 %v785
        %v824 = vpop.f32.mrb[0].mxu0
        %v825 = vadd.f32 %v745, %v824
        %v826 = vpop.f32.mrb[0].mxu0
        %v827 = vpop.f32.mrb[0].mxu0
        %v828 = vadd.f32 %v746, %v827
        %v829 = vpop.f32.mrb[0].mxu0
        %830 = vmatprep.mubr.bf16.mxu0 0
        %831 = vmatmul.mubr.bf16.gmra.mrb[0].mxu0 %v788
        %v832 = vpop.f32.mrb[0].mxu0
        %v833 = vadd.f32 %v747, %v832
        %v834 = vpop.f32.mrb[0].mxu0
        %v835 = vpop.f32.mrb[0].mxu0
        %v836 = vadd.f32 %v748, %v835
        %v837 = vpop.f32.mrb[0].mxu0
        %838 = vdwg.mxu0
        %v839 = vlaneseq
        %v840 = vand.u32 %v839, 127
        %vm841 = vcmp.lt.s32.totalorder %v840, 17
        %v842 = vsel %vm841, 0.0, -1e+30
        loop: start=0, step=1, limit=2
        $region137: #{audiomae_condition_forward.1} parent=91 // loop_pre_header
          _
        $region138: #{audiomae_condition_forward.1} parent=91 // loop_header
          %s844 = sphi 0, %s848
          %p845 = scmp.ge.s32.totalorder %s844, 2
          %v849 = vphi %v825, %v3021
          %v850 = vphi %v828, %v3022
          %v851 = vphi %v833, %v3023
          %v852 = vphi %v836, %v3024
        $region139: #{audiomae_condition_forward.1} parent=91 // loop_header_branch
          %847 = sbr.rel (%p845) target = $region143
        $region140: #{audiomae_condition_forward.1} parent=91 // loop_body
          %s853 = scalar_lea.vmem %s3, %s844
          %v854 = vld [vmem:[%s853] sm:$0x1]
          %s855 = scalar_lea.vmem %s4, %s844
          %v856 = vld [vmem:[%s855] sm:$0x1]
          %857 = vadd.xlane.f32.xlu0 %v849
          %v858 = vpop.xlane.xlu0 %857
          %859 = vadd.xlane.f32.xlu0 %v850
          %v860 = vpop.xlane.xlu0 %859
          %861 = vadd.xlane.f32.xlu0 %v851
          %v862 = vpop.xlane.xlu0 %861
          %863 = vadd.xlane.f32.xlu0 %v852
          %v864 = vpop.xlane.xlu0 %863
          %v865 = vrcp.pop 128.0
          %v866 = vmul.f32 %v858, %v865
          %v867 = vmul.f32 %v860, %v865
          %v868 = vmul.f32 %v862, %v865
          %v869 = vmul.f32 %v864, %v865
          %v870 = vsub.f32 %v849, %v866
          %v871 = vsub.f32 %v850, %v867
          %v872 = vsub.f32 %v851, %v868
          %v873 = vsub.f32 %v852, %v869
          %v874 = vmul.f32 %v870, %v870
          %v875 = vmul.f32 %v871, %v871
          %v876 = vmul.f32 %v872, %v872
          %v877 = vmul.f32 %v873, %v873
          %878 = vadd.xlane.f32.xlu0 %v874
          %v879 = vpop.xlane.xlu0 %878
          %880 = vadd.xlane.f32.xlu0 %v875
          %v881 = vpop.xlane.xlu0 %880
          %882 = vadd.xlane.f32.xlu0 %v876
          %v883 = vpop.xlane.xlu0 %882
          %884 = vadd.xlane.f32.xlu0 %v877
          %v885 = vpop.xlane.xlu0 %884
          %v886 = vmul.f32 %v879, %v865
          %v887 = vmul.f32 %v881, %v865
          %v888 = vmul.f32 %v883, %v865
          %v889 = vmul.f32 %v885, %v865
          %v890 = vadd.f32 %v886, 1e-06
          %v891 = vadd.f32 %v887, 1e-06
          %v892 = vadd.f32 %v888, 1e-06
          %v893 = vadd.f32 %v889, 1e-06
          %v894 = vrsqrt.pop %v890
          %v895 = vrsqrt.pop %v891
          %v896 = vrsqrt.pop %v892
          %v897 = vrsqrt.pop %v893
          %v898 = vmul.f32 %v870, %v894
          %v899 = vmul.f32 %v871, %v895
          %v900 = vmul.f32 %v872, %v896
          %v901 = vmul.f32 %v873, %v897
          %v903 = vlaneseq
          %v904 = vshrl.u32 %v903, 7
          %v905 = vsub.s32 0, %v904
          %v906 = vrot.slane %v854, %v905
          %v908 = vmul.f32 %v898, %v906
          %v909 = vmul.f32 %v899, %v906
          %v910 = vmul.f32 %v900, %v906
          %v911 = vmul.f32 %v901, %v906
          %v913 = vlaneseq
          %v914 = vshrl.u32 %v913, 7
          %v915 = vsub.s32 0, %v914
          %v916 = vrot.slane %v856, %v915
          %v918 = vadd.f32 %v908, %v916
          %v919 = vadd.f32 %v909, %v916
          %v920 = vadd.f32 %v910, %v916
          %v921 = vadd.f32 %v911, %v916
          %v922 = vpack.c.bf16 %v919, %v918
          %v923 = vpack.c.bf16 %v921, %v920
          %s924 = smul.u32 %s844, 48
          %s925 = smul.addr %s924, 4
          %s926 = scalar_lea.vmem [#allocation5], %s925
          %v927 = vld [vmem:[%s926] sm:$0xff]
          %v928 = vld [vmem:[%s926 + $0x8] sm:$0xf]
          %v929 = vld [vmem:[%s926 + $0xc] sm:$0xff]
          %v930 = vld [vmem:[%s926 + $0x14] sm:$0xf]
          %v931 = vld [vmem:[%s926 + $0x18] sm:$0xff]
          %v932 = vld [vmem:[%s926 + $0x20] sm:$0xf]
          %v933 = vld [vmem:[%s926 + $0x24] sm:$0xff]
          %v934 = vld [vmem:[%s926 + $0x2c] sm:$0xf]
          %v935 = vld [vmem:[%s926 + $0x30] sm:$0xff]
          %v936 = vld [vmem:[%s926 + $0x38] sm:$0xf]
          %v937 = vld [vmem:[%s926 + $0x3c] sm:$0xff]
          %v938 = vld [vmem:[%s926 + $0x44] sm:$0xf]
          %v939 = vld [vmem:[%s926 + $0x48] sm:$0xff]
          %v940 = vld [vmem:[%s926 + $0x50] sm:$0xf]
          %v941 = vld [vmem:[%s926 + $0x54] sm:$0xff]
          %v942 = vld [vmem:[%s926 + $0x5c] sm:$0xf]
          %v943 = vld [vmem:[%s926 + $0x60] sm:$0xff]
          %v944 = vld [vmem:[%s926 + $0x68] sm:$0xf]
          %v945 = vld [vmem:[%s926 + $0x6c] sm:$0xff]
          %v946 = vld [vmem:[%s926 + $0x74] sm:$0xf]
          %v947 = vld [vmem:[%s926 + $0x78] sm:$0xff]
          %v948 = vld [vmem:[%s926 + $0x80] sm:$0xf]
          %v949 = vld [vmem:[%s926 + $0x84] sm:$0xff]
          %v950 = vld [vmem:[%s926 + $0x8c] sm:$0xf]
          %v951 = vld [vmem:[%s926 + $0x90] sm:$0xff]
          %v952 = vld [vmem:[%s926 + $0x98] sm:$0xf]
          %v953 = vld [vmem:[%s926 + $0x9c] sm:$0xff]
          %v954 = vld [vmem:[%s926 + $0xa4] sm:$0xf]
          %v955 = vld [vmem:[%s926 + $0xa8] sm:$0xff]
          %v956 = vld [vmem:[%s926 + $0xb0] sm:$0xf]
          %v957 = vld [vmem:[%s926 + $0xb4] sm:$0xff]
          %v958 = vld [vmem:[%s926 + $0xbc] sm:$0xf]
          %s959 = smul.u32 %s844, 3
          %s960 = scalar_lea.vmem [#allocation7], %s959
          %v961 = vld [vmem:[%s960] sm:$0x7]
          %v963 = vlaneseq
          %v964 = vshrl.u32 %v963, 7
          %v965 = vsub.s32 0, %v964
          %v966 = vrot.slane %v961, %v965
          %v967 = vlaneseq
          %v968 = vshrl.u32 %v967, 7
          %v969 = vsub.s32 1, %v968
          %v970 = vrot.slane %v961, %v969
          %v971 = vlaneseq
          %v972 = vshrl.u32 %v971, 7
          %v973 = vsub.s32 2, %v972
          %v974 = vrot.slane %v961, %v973
          %v1010 = vunpack.c.l.b16 %v927
          %v1011 = vunpack.c.h.b16 %v927
          %v1012 = vunpack.c.l.b16 %v928
          %v1013 = vunpack.c.l.b16 %v929
          %v1014 = vunpack.c.h.b16 %v929
          %v1015 = vunpack.c.l.b16 %v930
          %v1016 = vunpack.c.l.b16 %v931
          %v1017 = vunpack.c.h.b16 %v931
          %v1018 = vunpack.c.l.b16 %v932
          %v1019 = vunpack.c.l.b16 %v933
          %v1020 = vunpack.c.h.b16 %v933
          %v1021 = vunpack.c.l.b16 %v934
          %v1022 = vunpack.c.l.b16 %v935
          %v1023 = vunpack.c.h.b16 %v935
          %v1024 = vunpack.c.l.b16 %v936
          %v1025 = vunpack.c.l.b16 %v937
          %v1026 = vunpack.c.h.b16 %v937
          %v1027 = vunpack.c.l.b16 %v938
          %v1028 = vunpack.c.l.b16 %v939
          %v1029 = vunpack.c.h.b16 %v939
          %v1030 = vunpack.c.l.b16 %v940
          %v1031 = vunpack.c.l.b16 %v941
          %v1032 = vunpack.c.h.b16 %v941
          %v1033 = vunpack.c.l.b16 %v942
          %v1034 = vunpack.c.l.b16 %v943
          %v1035 = vunpack.c.h.b16 %v943
          %v1036 = vunpack.c.l.b16 %v944
          %v1037 = vunpack.c.l.b16 %v945
          %v1038 = vunpack.c.h.b16 %v945
          %v1039 = vunpack.c.l.b16 %v946
          %v1040 = vunpack.c.l.b16 %v947
          %v1041 = vunpack.c.h.b16 %v947
          %v1042 = vunpack.c.l.b16 %v948
          %v1043 = vunpack.c.l.b16 %v949
          %v1044 = vunpack.c.h.b16 %v949
          %v1045 = vunpack.c.l.b16 %v950
          %v1046 = vunpack.c.l.b16 %v951
          %v1047 = vunpack.c.h.b16 %v951
          %v1048 = vunpack.c.l.b16 %v952
          %v1049 = vunpack.c.l.b16 %v953
          %v1050 = vunpack.c.h.b16 %v953
          %v1051 = vunpack.c.l.b16 %v954
          %v1052 = vunpack.c.l.b16 %v955
          %v1053 = vunpack.c.h.b16 %v955
          %v1054 = vunpack.c.l.b16 %v956
          %v1055 = vunpack.c.l.b16 %v957
          %v1056 = vunpack.c.h.b16 %v957
          %v1057 = vunpack.c.l.b16 %v958
          %v1058 = vpack.c.b16 %v1013, %v1010
          %v1059 = vpack.c.b16 %v1014, %v1011
          %v1060 = vpack.c.b16 %v1015, %v1012
          %v1061 = vpack.c.b16 %v1019, %v1016
          %v1062 = vpack.c.b16 %v1020, %v1017
          %v1063 = vpack.c.b16 %v1021, %v1018
          %v1064 = vpack.c.b16 %v1025, %v1022
          %v1065 = vpack.c.b16 %v1026, %v1023
          %v1066 = vpack.c.b16 %v1027, %v1024
          %v1067 = vpack.c.b16 %v1031, %v1028
          %v1068 = vpack.c.b16 %v1032, %v1029
          %v1069 = vpack.c.b16 %v1033, %v1030
          %v1070 = vpack.c.b16 %v1037, %v1034
          %v1071 = vpack.c.b16 %v1038, %v1035
          %v1072 = vpack.c.b16 %v1039, %v1036
          %v1073 = vpack.c.b16 %v1043, %v1040
          %v1074 = vpack.c.b16 %v1044, %v1041
          %v1075 = vpack.c.b16 %v1045, %v1042
          %v1076 = vpack.c.b16 %v1049, %v1046
          %v1077 = vpack.c.b16 %v1050, %v1047
          %v1078 = vpack.c.b16 %v1051, %v1048
          %v1079 = vpack.c.b16 %v1055, %v1052
          %v1080 = vpack.c.b16 %v1056, %v1053
          %v1081 = vpack.c.b16 %v1057, %v1054
          %1106 = vmatprep.subr.bf16.mxu0 %v1059
          %1107 = vmatpush1.bf16.msra.mxu0 %v1058
          %1108 = vmatprep.subr.bf16.mxu0 %v1062
          %1109 = vmatpush1.bf16.msra.mxu0 %v1061
          %1110 = vmatprep.subr.bf16.mxu0 %v1065
          %1111 = vmatpush1.bf16.msra.mxu0 %v1064
          %1112 = vmatprep.subr.bf16.mxu0 %v1068
          %1113 = vmatpush1.bf16.msra.mxu0 %v1067
          %1114 = vmatprep.subr.bf16.mxu0 %v1071
          %1115 = vmatpush1.bf16.msra.mxu0 %v1070
          %1116 = vmatprep.subr.bf16.mxu0 %v1074
          %1117 = vmatpush1.bf16.msra.mxu0 %v1073
          %1118 = vmatprep.subr.bf16.mxu0 %v1077
          %1119 = vmatpush1.bf16.msra.mxu0 %v1076
          %1120 = vmatprep.subr.bf16.mxu0 %v1080
          %1121 = vmatpush1.bf16.msra.mxu0 %v1079
          %1122 = vmatprep.subr.bf16.mxu0 0
          %1123 = vmatpush1.bf16.msra.mxu0 0
          %1124 = vmatprep.subr.bf16.mxu0 0
          %1125 = vmatpush1.bf16.msra.mxu0 0
          %1126 = vmatprep.subr.bf16.mxu0 0
          %1127 = vmatpush1.bf16.msra.mxu0 0
          %1128 = vmatprep.subr.bf16.mxu0 0
          %1129 = vmatpush1.bf16.msra.mxu0 0
          %1130 = vmatprep.subr.bf16.mxu0 0
          %1131 = vmatpush1.bf16.msra.mxu0 0
          %1132 = vmatprep.subr.bf16.mxu0 0
          %1133 = vmatpush1.bf16.msra.mxu0 0
          %1134 = vmatprep.subr.bf16.mxu0 0
          %1135 = vmatpush1.bf16.msra.mxu0 0
          %1136 = vmatprep.subr.bf16.mxu0 0
          %1137 = vmatpush1.bf16.msra.mxu0 0
          %1138 = vmatprep.mubr.bf16.mxu0 0
          %1139 = vmatmul.mubr.bf16.gmra.mrb[0].mxu0 %v922
          %v1140 = vpop.f32.mrb[0].mxu0
          %v1141 = vadd.f32 %v966, %v1140
          %v1142 = vpop.f32.mrb[0].mxu0
          %v1143 = vadd.f32 %v970, %v1142
          %v1144 = vpop.f32.mrb[0].mxu0
          %v1145 = vadd.f32 %v966, %v1144
          %v1146 = vpop.f32.mrb[0].mxu0
          %v1147 = vadd.f32 %v970, %v1146
          %1148 = vmatprep.mubr.bf16.mxu0 0
          %1149 = vmatmul.mubr.bf16.gmra.mrb[0].mxu0 %v923
          %v1150 = vpop.f32.mrb[0].mxu0
          %v1151 = vadd.f32 %v966, %v1150
          %v1152 = vpop.f32.mrb[0].mxu0
          %v1153 = vadd.f32 %v970, %v1152
          %v1154 = vpop.f32.mrb[0].mxu0
          %v1155 = vadd.f32 %v966, %v1154
          %v1156 = vpop.f32.mrb[0].mxu0
          %v1157 = vadd.f32 %v970, %v1156
          %1158 = vdwg.mxu0
          %1159 = vmatprep.subr.bf16.mxu0 0
          %1160 = vmatpush1.bf16.msra.mxu0 %v1060
          %1161 = vmatprep.subr.bf16.mxu0 0
          %1162 = vmatpush1.bf16.msra.mxu0 %v1063
          %1163 = vmatprep.subr.bf16.mxu0 0
          %1164 = vmatpush1.bf16.msra.mxu0 %v1066
          %1165 = vmatprep.subr.bf16.mxu0 0
          %1166 = vmatpush1.bf16.msra.mxu0 %v1069
          %1167 = vmatprep.subr.bf16.mxu0 0
          %1168 = vmatpush1.bf16.msra.mxu0 %v1072
          %1169 = vmatprep.subr.bf16.mxu0 0
          %1170 = vmatpush1.bf16.msra.mxu0 %v1075
          %1171 = vmatprep.subr.bf16.mxu0 0
          %1172 = vmatpush1.bf16.msra.mxu0 %v1078
          %1173 = vmatprep.subr.bf16.mxu0 0
          %1174 = vmatpush1.bf16.msra.mxu0 %v1081
          %1175 = vmatprep.subr.bf16.mxu0 0
          %1176 = vmatpush1.bf16.msra.mxu0 0
          %1177 = vmatprep.subr.bf16.mxu0 0
          %1178 = vmatpush1.bf16.msra.mxu0 0
          %1179 = vmatprep.subr.bf16.mxu0 0
          %1180 = vmatpush1.bf16.msra.mxu0 0
          %1181 = vmatprep.subr.bf16.mxu0 0
          %1182 = vmatpush1.bf16.msra.mxu0 0
          %1183 = vmatprep.subr.bf16.mxu0 0
          %1184 = vmatpush1.bf16.msra.mxu0 0
          %1185 = vmatprep.subr.bf16.mxu0 0
          %1186 = vmatpush1.bf16.msra.mxu0 0
          %1187 = vmatprep.subr.bf16.mxu0 0
          %1188 = vmatpush1.bf16.msra.mxu0 0
          %1189 = vmatprep.subr.bf16.mxu0 0
          %1190 = vmatpush1.bf16.msra.mxu0 0
          %1191 = vmatprep.mubr.bf16.mxu0 0
          %1192 = vmatmul.mubr.bf16.gmra.mrb[0].mxu0 %v922
          %v1193 = vpop.f32.mrb[0].mxu0
          %v1194 = vadd.f32 %v974, %v1193
          %v1195 = vpop.f32.mrb[0].mxu0
          %v1196 = vpop.f32.mrb[0].mxu0
          %v1197 = vadd.f32 %v974, %v1196
          %v1198 = vpop.f32.mrb[0].mxu0
          %1199 = vmatprep.mubr.bf16.mxu0 0
          %1200 = vmatmul.mubr.bf16.gmra.mrb[0].mxu0 %v923
          %v1201 = vpop.f32.mrb[0].mxu0
          %v1202 = vadd.f32 %v974, %v1201
          %v1203 = vpop.f32.mrb[0].mxu0
          %v1204 = vpop.f32.mrb[0].mxu0
          %v1205 = vadd.f32 %v974, %v1204
          %v1206 = vpop.f32.mrb[0].mxu0
          %1207 = vdwg.mxu0
          %v1208 = vpack.c.bf16 %v1145, %v1141
          %v1209 = vpack.c.bf16 %v1155, %v1151
          %v1210 = vpack.c.bf16 %v1147, %v1143
          %v1211 = vpack.c.bf16 %v1157, %v1153
          %v1212 = vpack.c.bf16 %v1197, %v1194
          %v1213 = vpack.c.bf16 %v1205, %v1202
          %vm1214 = vcmask 261120
          %v1216 = vsel %vm1214, %v1208, 0
          %v1219 = vsel %vm1214, %v1209, 0
          %v1222 = vsel %vm1214, %v1210, 0
          %v1225 = vsel %vm1214, %v1211, 0
          %1227 = vmatprep.subr.bf16.mxu0 0
          %1228 = vmatpush1.bf16.xpose.msra.mxu0 %v1222
          %1229 = vmatprep.subr.bf16.mxu0 0
          %1230 = vmatpush1.bf16.xpose.msra.mxu0 %v1225
          %1231 = vmatprep.subr.bf16.mxu0 0
          %1232 = vmatpush1.bf16.xpose.msra.mxu0 0
          %1233 = vmatprep.subr.bf16.mxu0 0
          %1234 = vmatpush1.bf16.xpose.msra.mxu0 0
          %1235 = vmatprep.subr.bf16.mxu0 0
          %1236 = vmatpush1.bf16.xpose.msra.mxu0 0
          %1237 = vmatprep.subr.bf16.mxu0 0
          %1238 = vmatpush1.bf16.xpose.msra.mxu0 0
          %1239 = vmatprep.subr.bf16.mxu0 0
          %1240 = vmatpush1.bf16.xpose.msra.mxu0 0
          %1241 = vmatprep.subr.bf16.mxu0 0
          %1242 = vmatpush1.bf16.xpose.msra.mxu0 0
          %1243 = vmatprep.subr.bf16.mxu0 0
          %1244 = vmatpush1.bf16.xpose.msra.mxu0 0
          %1245 = vmatprep.subr.bf16.mxu0 0
          %1246 = vmatpush1.bf16.xpose.msra.mxu0 0
          %1247 = vmatprep.subr.bf16.mxu0 0
          %1248 = vmatpush1.bf16.xpose.msra.mxu0 0
          %1249 = vmatprep.subr.bf16.mxu0 0
          %1250 = vmatpush1.bf16.xpose.msra.mxu0 0
          %1251 = vmatprep.subr.bf16.mxu0 0
          %1252 = vmatpush1.bf16.xpose.msra.mxu0 0
          %1253 = vmatprep.subr.bf16.mxu0 0
          %1254 = vmatpush1.bf16.xpose.msra.mxu0 0
          %1255 = vmatprep.subr.bf16.mxu0 0
          %1256 = vmatpush1.bf16.xpose.msra.mxu0 0
          %1257 = vmatprep.subr.bf16.mxu0 0
          %1258 = vmatpush1.bf16.xpose.msra.mxu0 0
          %1259 = vmatprep.mubr.bf16.mxu0 0
          %1260 = vmatmul.mubr.bf16.gmra.mrb[0].mxu0 %v1216
          %v1261 = vpop.f32.mrb[0].mxu0
          %v1262 = vadd.f32 %v842, %v1261
          %v1263 = vpop.f32.mrb[0].mxu0
          %v1264 = vpop.f32.mrb[0].mxu0
          %v1265 = vadd.f32 %v842, %v1264
          %v1266 = vpop.f32.mrb[0].mxu0
          %1267 = vmatprep.mubr.bf16.mxu0 0
          %1268 = vmatmul.mubr.bf16.gmra.mrb[0].mxu0 %v1219
          %v1269 = vpop.f32.mrb[0].mxu0
          %v1270 = vadd.f32 %v842, %v1269
          %v1271 = vpop.f32.mrb[0].mxu0
          %v1272 = vpop.f32.mrb[0].mxu0
          %v1273 = vadd.f32 %v842, %v1272
          %v1274 = vpop.f32.mrb[0].mxu0
          %1275 = vdwg.mxu0
          %v1276 = vsel %vm1214, %v1262, -inf
          %1277 = vmax.xlane.f32.xlu0 %v1276
          %v1278 = vpop.xlane.xlu0 %1277
          %v1279 = vsel %vm1214, %v1265, -inf
          %1280 = vmax.xlane.f32.xlu0 %v1279
          %v1281 = vpop.xlane.xlu0 %1280
          %v1282 = vsel %vm1214, %v1270, -inf
          %1283 = vmax.xlane.f32.xlu0 %v1282
          %v1284 = vpop.xlane.xlu0 %1283
          %v1285 = vsel %vm1214, %v1273, -inf
          %1286 = vmax.xlane.f32.xlu0 %v1285
          %v1287 = vpop.xlane.xlu0 %1286
          %v1288 = vsub.f32 %v1262, %v1278
          %v1289 = vsub.f32 %v1265, %v1281
          %v1290 = vsub.f32 %v1270, %v1284
          %v1291 = vsub.f32 %v1273, %v1287
          %v1292 = vmul.f32 %v1288, 1.442695
          %v1293 = vpow.pop %v1292
          %v1294 = vmul.f32 %v1289, 1.442695
          %v1295 = vpow.pop %v1294
          %v1296 = vmul.f32 %v1290, 1.442695
          %v1297 = vpow.pop %v1296
          %v1298 = vmul.f32 %v1291, 1.442695
          %v1299 = vpow.pop %v1298
          %v1300 = vsel %vm1214, %v1293, 0.0
          %1301 = vadd.xlane.f32.xlu0 %v1300
          %v1302 = vpop.xlane.xlu0 %1301
          %v1303 = vsel %vm1214, %v1295, 0.0
          %1304 = vadd.xlane.f32.xlu0 %v1303
          %v1305 = vpop.xlane.xlu0 %1304
          %v1306 = vsel %vm1214, %v1297, 0.0
          %1307 = vadd.xlane.f32.xlu0 %v1306
          %v1308 = vpop.xlane.xlu0 %1307
          %v1309 = vsel %vm1214, %v1299, 0.0
          %1310 = vadd.xlane.f32.xlu0 %v1309
          %v1311 = vpop.xlane.xlu0 %1310
          %v1312 = vrcp.pop %v1302
          %v1313 = vrcp.pop %v1305
          %v1314 = vrcp.pop %v1308
          %v1315 = vrcp.pop %v1311
          %v1316 = vmul.f32 %v1293, %v1312
          %v1317 = vmul.f32 %v1295, %v1313
          %v1318 = vmul.f32 %v1297, %v1314
          %v1319 = vmul.f32 %v1299, %v1315
          %v1320 = vpack.c.bf16 %v1317, %v1316
          %v1321 = vpack.c.bf16 %v1319, %v1318
          %v1323 = vsel %vm1214, %v1320, 0
          %v1326 = vsel %vm1214, %v1321, 0
          %1328 = vmatprep.subr.bf16.mxu0 0
          %1329 = vmatpush1.bf16.msra.mxu0 %v1212
          %1330 = vmatprep.subr.bf16.mxu0 0
          %1331 = vmatpush1.bf16.msra.mxu0 %v1213
          %1332 = vmatprep.subr.bf16.mxu0 0
          %1333 = vmatpush1.bf16.msra.mxu0 0
          %1334 = vmatprep.subr.bf16.mxu0 0
          %1335 = vmatpush1.bf16.msra.mxu0 0
          %1336 = vmatprep.subr.bf16.mxu0 0
          %1337 = vmatpush1.bf16.msra.mxu0 0
          %1338 = vmatprep.subr.bf16.mxu0 0
          %1339 = vmatpush1.bf16.msra.mxu0 0
          %1340 = vmatprep.subr.bf16.mxu0 0
          %1341 = vmatpush1.bf16.msra.mxu0 0
          %1342 = vmatprep.subr.bf16.mxu0 0
          %1343 = vmatpush1.bf16.msra.mxu0 0
          %1344 = vmatprep.subr.bf16.mxu0 0
          %1345 = vmatpush1.bf16.msra.mxu0 0
          %1346 = vmatprep.subr.bf16.mxu0 0
          %1347 = vmatpush1.bf16.msra.mxu0 0
          %1348 = vmatprep.subr.bf16.mxu0 0
          %1349 = vmatpush1.bf16.msra.mxu0 0
          %1350 = vmatprep.subr.bf16.mxu0 0
          %1351 = vmatpush1.bf16.msra.mxu0 0
          %1352 = vmatprep.subr.bf16.mxu0 0
          %1353 = vmatpush1.bf16.msra.mxu0 0
          %1354 = vmatprep.subr.bf16.mxu0 0
          %1355 = vmatpush1.bf16.msra.mxu0 0
          %1356 = vmatprep.subr.bf16.mxu0 0
          %1357 = vmatpush1.bf16.msra.mxu0 0
          %1358 = vmatprep.subr.bf16.mxu0 0
          %1359 = vmatpush1.bf16.msra.mxu0 0
          %1360 = vmatprep.mubr.bf16.mxu0 0
          %1361 = vmatmul.mubr.bf16.gmra.mrb[0].mxu0 %v1323
          %v1362 = vpop.f32.mrb[0].mxu0
          %v1363 = vadd.f32 0.0, %v1362
          %v1364 = vpop.f32.mrb[0].mxu0
          %v1365 = vpop.f32.mrb[0].mxu0
          %v1366 = vadd.f32 0.0, %v1365
          %v1367 = vpop.f32.mrb[0].mxu0
          %1368 = vmatprep.mubr.bf16.mxu0 0
          %1369 = vmatmul.mubr.bf16.gmra.mrb[0].mxu0 %v1326
          %v1370 = vpop.f32.mrb[0].mxu0
          %v1371 = vadd.f32 0.0, %v1370
          %v1372 = vpop.f32.mrb[0].mxu0
          %v1373 = vpop.f32.mrb[0].mxu0
          %v1374 = vadd.f32 0.0, %v1373
          %v1375 = vpop.f32.mrb[0].mxu0
          %1376 = vdwg.mxu0
          %1379 = vrot.lane.b32.xlu0 %v1208, 96
          %v1380 = vpop.permute.xlu0 %1379
          %1381 = vrot.lane.b32.xlu0 %v1209, 96
          %v1382 = vpop.permute.xlu0 %1381
          %1385 = vrot.lane.b32.xlu0 %v1210, 96
          %v1386 = vpop.permute.xlu0 %1385
          %1387 = vrot.lane.b32.xlu0 %v1211, 96
          %v1388 = vpop.permute.xlu0 %1387
          %v1390 = vsel %vm1214, %v1380, 0
          %v1393 = vsel %vm1214, %v1382, 0
          %v1396 = vsel %vm1214, %v1386, 0
          %v1399 = vsel %vm1214, %v1388, 0
          %1401 = vmatprep.subr.bf16.mxu0 0
          %1402 = vmatpush1.bf16.xpose.msra.mxu0 %v1396
          %1403 = vmatprep.subr.bf16.mxu0 0
          %1404 = vmatpush1.bf16.xpose.msra.mxu0 %v1399
          %1405 = vmatprep.subr.bf16.mxu0 0
          %1406 = vmatpush1.bf16.xpose.msra.mxu0 0
          %1407 = vmatprep.subr.bf16.mxu0 0
          %1408 = vmatpush1.bf16.xpose.msra.mxu0 0
          %1409 = vmatprep.subr.bf16.mxu0 0
          %1410 = vmatpush1.bf16.xpose.msra.mxu0 0
          %1411 = vmatprep.subr.bf16.mxu0 0
          %1412 = vmatpush1.bf16.xpose.msra.mxu0 0
          %1413 = vmatprep.subr.bf16.mxu0 0
          %1414 = vmatpush1.bf16.xpose.msra.mxu0 0
          %1415 = vmatprep.subr.bf16.mxu0 0
          %1416 = vmatpush1.bf16.xpose.msra.mxu0 0
          %1417 = vmatprep.subr.bf16.mxu0 0
          %1418 = vmatpush1.bf16.xpose.msra.mxu0 0
          %1419 = vmatprep.subr.bf16.mxu0 0
          %1420 = vmatpush1.bf16.xpose.msra.mxu0 0
          %1421 = vmatprep.subr.bf16.mxu0 0
          %1422 = vmatpush1.bf16.xpose.msra.mxu0 0
          %1423 = vmatprep.subr.bf16.mxu0 0
          %1424 = vmatpush1.bf16.xpose.msra.mxu0 0
          %1425 = vmatprep.subr.bf16.mxu0 0
          %1426 = vmatpush1.bf16.xpose.msra.mxu0 0
          %1427 = vmatprep.subr.bf16.mxu0 0
          %1428 = vmatpush1.bf16.xpose.msra.mxu0 0
          %1429 = vmatprep.subr.bf16.mxu0 0
          %1430 = vmatpush1.bf16.xpose.msra.mxu0 0
          %1431 = vmatprep.subr.bf16.mxu0 0
          %1432 = vmatpush1.bf16.xpose.msra.mxu0 0
          %1433 = vmatprep.mubr.bf16.mxu0 0
          %1434 = vmatmul.mubr.bf16.gmra.mrb[0].mxu0 %v1390
          %v1435 = vpop.f32.mrb[0].mxu0
          %v1436 = vadd.f32 %v842, %v1435
          %v1437 = vpop.f32.mrb[0].mxu0
          %v1438 = vpop.f32.mrb[0].mxu0
          %v1439 = vadd.f32 %v842, %v1438
          %v1440 = vpop.f32.mrb[0].mxu0
          %1441 = vmatprep.mubr.bf16.mxu0 0
          %1442 = vmatmul.mubr.bf16.gmra.mrb[0].mxu0 %v1393
          %v1443 = vpop.f32.mrb[0].mxu0
          %v1444 = vadd.f32 %v842, %v1443
          %v1445 = vpop.f32.mrb[0].mxu0
          %v1446 = vpop.f32.mrb[0].mxu0
          %v1447 = vadd.f32 %v842, %v1446
          %v1448 = vpop.f32.mrb[0].mxu0
          %1449 = vdwg.mxu0
          %v1450 = vsel %vm1214, %v1436, -inf
          %1451 = vmax.xlane.f32.xlu0 %v1450
          %v1452 = vpop.xlane.xlu0 %1451
          %v1453 = vsel %vm1214, %v1439, -inf
          %1454 = vmax.xlane.f32.xlu0 %v1453
          %v1455 = vpop.xlane.xlu0 %1454
          %v1456 = vsel %vm1214, %v1444, -inf
          %1457 = vmax.xlane.f32.xlu0 %v1456
          %v1458 = vpop.xlane.xlu0 %1457
          %v1459 = vsel %vm1214, %v1447, -inf
          %1460 = vmax.xlane.f32.xlu0 %v1459
          %v1461 = vpop.xlane.xlu0 %1460
          %v1462 = vsub.f32 %v1436, %v1452
          %v1463 = vsub.f32 %v1439, %v1455
          %v1464 = vsub.f32 %v1444, %v1458
          %v1465 = vsub.f32 %v1447, %v1461
          %v1466 = vmul.f32 %v1462, 1.442695
          %v1467 = vpow.pop %v1466
          %v1468 = vmul.f32 %v1463, 1.442695
          %v1469 = vpow.pop %v1468
          %v1470 = vmul.f32 %v1464, 1.442695
          %v1471 = vpow.pop %v1470
          %v1472 = vmul.f32 %v1465, 1.442695
          %v1473 = vpow.pop %v1472
          %v1474 = vsel %vm1214, %v1467, 0.0
          %1475 = vadd.xlane.f32.xlu0 %v1474
          %v1476 = vpop.xlane.xlu0 %1475
          %v1477 = vsel %vm1214, %v1469, 0.0
          %1478 = vadd.xlane.f32.xlu0 %v1477
          %v1479 = vpop.xlane.xlu0 %1478
          %v1480 = vsel %vm1214, %v1471, 0.0
          %1481 = vadd.xlane.f32.xlu0 %v1480
          %v1482 = vpop.xlane.xlu0 %1481
          %v1483 = vsel %vm1214, %v1473, 0.0
          %1484 = vadd.xlane.f32.xlu0 %v1483
          %v1485 = vpop.xlane.xlu0 %1484
          %v1486 = vrcp.pop %v1476
          %v1487 = vrcp.pop %v1479
          %v1488 = vrcp.pop %v1482
          %v1489 = vrcp.pop %v1485
          %v1490 = vmul.f32 %v1467, %v1486
          %v1491 = vmul.f32 %v1469, %v1487
          %v1492 = vmul.f32 %v1471, %v1488
          %v1493 = vmul.f32 %v1473, %v1489
          %v1494 = vpack.c.bf16 %v1491, %v1490
          %v1495 = vpack.c.bf16 %v1493, %v1492
          %1498 = vrot.lane.b32.xlu0 %v1212, 96
          %v1499 = vpop.permute.xlu0 %1498
          %1500 = vrot.lane.b32.xlu0 %v1213, 96
          %v1501 = vpop.permute.xlu0 %1500
          %v1505 = vsel %vm1214, %v1494, 0
          %v1508 = vsel %vm1214, %v1495, 0
          %1510 = vmatprep.subr.bf16.mxu0 0
          %1511 = vmatpush1.bf16.msra.mxu0 %v1499
          %1512 = vmatprep.subr.bf16.mxu0 0
          %1513 = vmatpush1.bf16.msra.mxu0 %v1501
          %1514 = vmatprep.subr.bf16.mxu0 0
          %1515 = vmatpush1.bf16.msra.mxu0 0
          %1516 = vmatprep.subr.bf16.mxu0 0
          %1517 = vmatpush1.bf16.msra.mxu0 0
          %1518 = vmatprep.subr.bf16.mxu0 0
          %1519 = vmatpush1.bf16.msra.mxu0 0
          %1520 = vmatprep.subr.bf16.mxu0 0
          %1521 = vmatpush1.bf16.msra.mxu0 0
          %1522 = vmatprep.subr.bf16.mxu0 0
          %1523 = vmatpush1.bf16.msra.mxu0 0
          %1524 = vmatprep.subr.bf16.mxu0 0
          %1525 = vmatpush1.bf16.msra.mxu0 0
          %1526 = vmatprep.subr.bf16.mxu0 0
          %1527 = vmatpush1.bf16.msra.mxu0 0
          %1528 = vmatprep.subr.bf16.mxu0 0
          %1529 = vmatpush1.bf16.msra.mxu0 0
          %1530 = vmatprep.subr.bf16.mxu0 0
          %1531 = vmatpush1.bf16.msra.mxu0 0
          %1532 = vmatprep.subr.bf16.mxu0 0
          %1533 = vmatpush1.bf16.msra.mxu0 0
          %1534 = vmatprep.subr.bf16.mxu0 0
          %1535 = vmatpush1.bf16.msra.mxu0 0
          %1536 = vmatprep.subr.bf16.mxu0 0
          %1537 = vmatpush1.bf16.msra.mxu0 0
          %1538 = vmatprep.subr.bf16.mxu0 0
          %1539 = vmatpush1.bf16.msra.mxu0 0
          %1540 = vmatprep.subr.bf16.mxu0 0
          %1541 = vmatpush1.bf16.msra.mxu0 0
          %1542 = vmatprep.mubr.bf16.mxu0 0
          %1543 = vmatmul.mubr.bf16.gmra.mrb[0].mxu0 %v1505
          %v1544 = vpop.f32.mrb[0].mxu0
          %v1545 = vadd.f32 0.0, %v1544
          %v1546 = vpop.f32.mrb[0].mxu0
          %v1547 = vpop.f32.mrb[0].mxu0
          %v1548 = vadd.f32 0.0, %v1547
          %v1549 = vpop.f32.mrb[0].mxu0
          %1550 = vmatprep.mubr.bf16.mxu0 0
          %1551 = vmatmul.mubr.bf16.gmra.mrb[0].mxu0 %v1508
          %v1552 = vpop.f32.mrb[0].mxu0
          %v1553 = vadd.f32 0.0, %v1552
          %v1554 = vpop.f32.mrb[0].mxu0
          %v1555 = vpop.f32.mrb[0].mxu0
          %v1556 = vadd.f32 0.0, %v1555
          %v1557 = vpop.f32.mrb[0].mxu0
          %1558 = vdwg.mxu0
          %1559 = vrot.lane.b32.xlu0 %v1208, 64
          %v1560 = vpop.permute.xlu0 %1559
          %1561 = vrot.lane.b32.xlu0 %v1209, 64
          %v1562 = vpop.permute.xlu0 %1561
          %1563 = vrot.lane.b32.xlu0 %v1210, 64
          %v1564 = vpop.permute.xlu0 %1563
          %1565 = vrot.lane.b32.xlu0 %v1211, 64
          %v1566 = vpop.permute.xlu0 %1565
          %v1568 = vsel %vm1214, %v1560, 0
          %v1571 = vsel %vm1214, %v1562, 0
          %v1574 = vsel %vm1214, %v1564, 0
          %v1577 = vsel %vm1214, %v1566, 0
          %1579 = vmatprep.subr.bf16.mxu0 0
          %1580 = vmatpush1.bf16.xpose.msra.mxu0 %v1574
          %1581 = vmatprep.subr.bf16.mxu0 0
          %1582 = vmatpush1.bf16.xpose.msra.mxu0 %v1577
          %1583 = vmatprep.subr.bf16.mxu0 0
          %1584 = vmatpush1.bf16.xpose.msra.mxu0 0
          %1585 = vmatprep.subr.bf16.mxu0 0
          %1586 = vmatpush1.bf16.xpose.msra.mxu0 0
          %1587 = vmatprep.subr.bf16.mxu0 0
          %1588 = vmatpush1.bf16.xpose.msra.mxu0 0
          %1589 = vmatprep.subr.bf16.mxu0 0
          %1590 = vmatpush1.bf16.xpose.msra.mxu0 0
          %1591 = vmatprep.subr.bf16.mxu0 0
          %1592 = vmatpush1.bf16.xpose.msra.mxu0 0
          %1593 = vmatprep.subr.bf16.mxu0 0
          %1594 = vmatpush1.bf16.xpose.msra.mxu0 0
          %1595 = vmatprep.subr.bf16.mxu0 0
          %1596 = vmatpush1.bf16.xpose.msra.mxu0 0
          %1597 = vmatprep.subr.bf16.mxu0 0
          %1598 = vmatpush1.bf16.xpose.msra.mxu0 0
          %1599 = vmatprep.subr.bf16.mxu0 0
          %1600 = vmatpush1.bf16.xpose.msra.mxu0 0
          %1601 = vmatprep.subr.bf16.mxu0 0
          %1602 = vmatpush1.bf16.xpose.msra.mxu0 0
          %1603 = vmatprep.subr.bf16.mxu0 0
          %1604 = vmatpush1.bf16.xpose.msra.mxu0 0
          %1605 = vmatprep.subr.bf16.mxu0 0
          %1606 = vmatpush1.bf16.xpose.msra.mxu0 0
          %1607 = vmatprep.subr.bf16.mxu0 0
          %1608 = vmatpush1.bf16.xpose.msra.mxu0 0
          %1609 = vmatprep.subr.bf16.mxu0 0
          %1610 = vmatpush1.bf16.xpose.msra.mxu0 0
          %1611 = vmatprep.mubr.bf16.mxu0 0
          %1612 = vmatmul.mubr.bf16.gmra.mrb[0].mxu0 %v1568
          %v1613 = vpop.f32.mrb[0].mxu0
          %v1614 = vadd.f32 %v842, %v1613
          %v1615 = vpop.f32.mrb[0].mxu0
          %v1616 = vpop.f32.mrb[0].mxu0
          %v1617 = vadd.f32 %v842, %v1616
          %v1618 = vpop.f32.mrb[0].mxu0
          %1619 = vmatprep.mubr.bf16.mxu0 0
          %1620 = vmatmul.mubr.bf16.gmra.mrb[0].mxu0 %v1571
          %v1621 = vpop.f32.mrb[0].mxu0
          %v1622 = vadd.f32 %v842, %v1621
          %v1623 = vpop.f32.mrb[0].mxu0
          %v1624 = vpop.f32.mrb[0].mxu0
          %v1625 = vadd.f32 %v842, %v1624
          %v1626 = vpop.f32.mrb[0].mxu0
          %1627 = vdwg.mxu0
          %v1628 = vsel %vm1214, %v1614, -inf
          %1629 = vmax.xlane.f32.xlu0 %v1628
          %v1630 = vpop.xlane.xlu0 %1629
          %v1631 = vsel %vm1214, %v1617, -inf
          %1632 = vmax.xlane.f32.xlu0 %v1631
          %v1633 = vpop.xlane.xlu0 %1632
          %v1634 = vsel %vm1214, %v1622, -inf
          %1635 = vmax.xlane.f32.xlu0 %v1634
          %v1636 = vpop.xlane.xlu0 %1635
          %v1637 = vsel %vm1214, %v1625, -inf
          %1638 = vmax.xlane.f32.xlu0 %v1637
          %v1639 = vpop.xlane.xlu0 %1638
          %v1640 = vsub.f32 %v1614, %v1630
          %v1641 = vsub.f32 %v1617, %v1633
          %v1642 = vsub.f32 %v1622, %v1636
          %v1643 = vsub.f32 %v1625, %v1639
          %v1644 = vmul.f32 %v1640, 1.442695
          %v1645 = vpow.pop %v1644
          %v1646 = vmul.f32 %v1641, 1.442695
          %v1647 = vpow.pop %v1646
          %v1648 = vmul.f32 %v1642, 1.442695
          %v1649 = vpow.pop %v1648
          %v1650 = vmul.f32 %v1643, 1.442695
          %v1651 = vpow.pop %v1650
          %v1652 = vsel %vm1214, %v1645, 0.0
          %1653 = vadd.xlane.f32.xlu0 %v1652
          %v1654 = vpop.xlane.xlu0 %1653
          %v1655 = vsel %vm1214, %v1647, 0.0
          %1656 = vadd.xlane.f32.xlu0 %v1655
          %v1657 = vpop.xlane.xlu0 %1656
          %v1658 = vsel %vm1214, %v1649, 0.0
          %1659 = vadd.xlane.f32.xlu0 %v1658
          %v1660 = vpop.xlane.xlu0 %1659
          %v1661 = vsel %vm1214, %v1651, 0.0
          %1662 = vadd.xlane.f32.xlu0 %v1661
          %v1663 = vpop.xlane.xlu0 %1662
          %v1664 = vrcp.pop %v1654
          %v1665 = vrcp.pop %v1657
          %v1666 = vrcp.pop %v1660
          %v1667 = vrcp.pop %v1663
          %v1668 = vmul.f32 %v1645, %v1664
          %v1669 = vmul.f32 %v1647, %v1665
          %v1670 = vmul.f32 %v1649, %v1666
          %v1671 = vmul.f32 %v1651, %v1667
          %v1672 = vpack.c.bf16 %v1669, %v1668
          %v1673 = vpack.c.bf16 %v1671, %v1670
          %1674 = vrot.lane.b32.xlu0 %v1212, 64
          %v1675 = vpop.permute.xlu0 %1674
          %1676 = vrot.lane.b32.xlu0 %v1213, 64
          %v1677 = vpop.permute.xlu0 %1676
          %v1681 = vsel %vm1214, %v1672, 0
          %v1684 = vsel %vm1214, %v1673, 0
          %1686 = vmatprep.subr.bf16.mxu0 0
          %1687 = vmatpush1.bf16.msra.mxu0 %v1675
          %1688 = vmatprep.subr.bf16.mxu0 0
          %1689 = vmatpush1.bf16.msra.mxu0 %v1677
          %1690 = vmatprep.subr.bf16.mxu0 0
          %1691 = vmatpush1.bf16.msra.mxu0 0
          %1692 = vmatprep.subr.bf16.mxu0 0
          %1693 = vmatpush1.bf16.msra.mxu0 0
          %1694 = vmatprep.subr.bf16.mxu0 0
          %1695 = vmatpush1.bf16.msra.mxu0 0
          %1696 = vmatprep.subr.bf16.mxu0 0
          %1697 = vmatpush1.bf16.msra.mxu0 0
          %1698 = vmatprep.subr.bf16.mxu0 0
          %1699 = vmatpush1.bf16.msra.mxu0 0
          %1700 = vmatprep.subr.bf16.mxu0 0
          %1701 = vmatpush1.bf16.msra.mxu0 0
          %1702 = vmatprep.subr.bf16.mxu0 0
          %1703 = vmatpush1.bf16.msra.mxu0 0
          %1704 = vmatprep.subr.bf16.mxu0 0
          %1705 = vmatpush1.bf16.msra.mxu0 0
          %1706 = vmatprep.subr.bf16.mxu0 0
          %1707 = vmatpush1.bf16.msra.mxu0 0
          %1708 = vmatprep.subr.bf16.mxu0 0
          %1709 = vmatpush1.bf16.msra.mxu0 0
          %1710 = vmatprep.subr.bf16.mxu0 0
          %1711 = vmatpush1.bf16.msra.mxu0 0
          %1712 = vmatprep.subr.bf16.mxu0 0
          %1713 = vmatpush1.bf16.msra.mxu0 0
          %1714 = vmatprep.subr.bf16.mxu0 0
          %1715 = vmatpush1.bf16.msra.mxu0 0
          %1716 = vmatprep.subr.bf16.mxu0 0
          %1717 = vmatpush1.bf16.msra.mxu0 0
          %1718 = vmatprep.mubr.bf16.mxu0 0
          %1719 = vmatmul.mubr.bf16.gmra.mrb[0].mxu0 %v1681
          %v1720 = vpop.f32.mrb[0].mxu0
          %v1721 = vadd.f32 0.0, %v1720
          %v1722 = vpop.f32.mrb[0].mxu0
          %v1723 = vpop.f32.mrb[0].mxu0
          %v1724 = vadd.f32 0.0, %v1723
          %v1725 = vpop.f32.mrb[0].mxu0
          %1726 = vmatprep.mubr.bf16.mxu0 0
          %1727 = vmatmul.mubr.bf16.gmra.mrb[0].mxu0 %v1684
          %v1728 = vpop.f32.mrb[0].mxu0
          %v1729 = vadd.f32 0.0, %v1728
          %v1730 = vpop.f32.mrb[0].mxu0
          %v1731 = vpop.f32.mrb[0].mxu0
          %v1732 = vadd.f32 0.0, %v1731
          %v1733 = vpop.f32.mrb[0].mxu0
          %1734 = vdwg.mxu0
          %1735 = vrot.lane.b32.xlu0 %v1208, 32
          %v1736 = vpop.permute.xlu0 %1735
          %1737 = vrot.lane.b32.xlu0 %v1209, 32
          %v1738 = vpop.permute.xlu0 %1737
          %1739 = vrot.lane.b32.xlu0 %v1210, 32
          %v1740 = vpop.permute.xlu0 %1739
          %1741 = vrot.lane.b32.xlu0 %v1211, 32
          %v1742 = vpop.permute.xlu0 %1741
          %v1744 = vsel %vm1214, %v1736, 0
          %v1747 = vsel %vm1214, %v1738, 0
          %v1750 = vsel %vm1214, %v1740, 0
          %v1753 = vsel %vm1214, %v1742, 0
          %1755 = vmatprep.subr.bf16.mxu0 0
          %1756 = vmatpush1.bf16.xpose.msra.mxu0 %v1750
          %1757 = vmatprep.subr.bf16.mxu0 0
          %1758 = vmatpush1.bf16.xpose.msra.mxu0 %v1753
          %1759 = vmatprep.subr.bf16.mxu0 0
          %1760 = vmatpush1.bf16.xpose.msra.mxu0 0
          %1761 = vmatprep.subr.bf16.mxu0 0
          %1762 = vmatpush1.bf16.xpose.msra.mxu0 0
          %1763 = vmatprep.subr.bf16.mxu0 0
          %1764 = vmatpush1.bf16.xpose.msra.mxu0 0
          %1765 = vmatprep.subr.bf16.mxu0 0
          %1766 = vmatpush1.bf16.xpose.msra.mxu0 0
          %1767 = vmatprep.subr.bf16.mxu0 0
          %1768 = vmatpush1.bf16.xpose.msra.mxu0 0
          %1769 = vmatprep.subr.bf16.mxu0 0
          %1770 = vmatpush1.bf16.xpose.msra.mxu0 0
          %1771 = vmatprep.subr.bf16.mxu0 0
          %1772 = vmatpush1.bf16.xpose.msra.mxu0 0
          %1773 = vmatprep.subr.bf16.mxu0 0
          %1774 = vmatpush1.bf16.xpose.msra.mxu0 0
          %1775 = vmatprep.subr.bf16.mxu0 0
          %1776 = vmatpush1.bf16.xpose.msra.mxu0 0
          %1777 = vmatprep.subr.bf16.mxu0 0
          %1778 = vmatpush1.bf16.xpose.msra.mxu0 0
          %1779 = vmatprep.subr.bf16.mxu0 0
          %1780 = vmatpush1.bf16.xpose.msra.mxu0 0
          %1781 = vmatprep.subr.bf16.mxu0 0
          %1782 = vmatpush1.bf16.xpose.msra.mxu0 0
          %1783 = vmatprep.subr.bf16.mxu0 0
          %1784 = vmatpush1.bf16.xpose.msra.mxu0 0
          %1785 = vmatprep.subr.bf16.mxu0 0
          %1786 = vmatpush1.bf16.xpose.msra.mxu0 0
          %1787 = vmatprep.mubr.bf16.mxu0 0
          %1788 = vmatmul.mubr.bf16.gmra.mrb[0].mxu0 %v1744
          %v1789 = vpop.f32.mrb[0].mxu0
          %v1790 = vadd.f32 %v842, %v1789
          %v1791 = vpop.f32.mrb[0].mxu0
          %v1792 = vpop.f32.mrb[0].mxu0
          %v1793 = vadd.f32 %v842, %v1792
          %v1794 = vpop.f32.mrb[0].mxu0
          %1795 = vmatprep.mubr.bf16.mxu0 0
          %1796 = vmatmul.mubr.bf16.gmra.mrb[0].mxu0 %v1747
          %v1797 = vpop.f32.mrb[0].mxu0
          %v1798 = vadd.f32 %v842, %v1797
          %v1799 = vpop.f32.mrb[0].mxu0
          %v1800 = vpop.f32.mrb[0].mxu0
          %v1801 = vadd.f32 %v842, %v1800
          %v1802 = vpop.f32.mrb[0].mxu0
          %1803 = vdwg.mxu0
          %v1804 = vsel %vm1214, %v1790, -inf
          %1805 = vmax.xlane.f32.xlu0 %v1804
          %v1806 = vpop.xlane.xlu0 %1805
          %v1807 = vsel %vm1214, %v1793, -inf
          %1808 = vmax.xlane.f32.xlu0 %v1807
          %v1809 = vpop.xlane.xlu0 %1808
          %v1810 = vsel %vm1214, %v1798, -inf
          %1811 = vmax.xlane.f32.xlu0 %v1810
          %v1812 = vpop.xlane.xlu0 %1811
          %v1813 = vsel %vm1214, %v1801, -inf
          %1814 = vmax.xlane.f32.xlu0 %v1813
          %v1815 = vpop.xlane.xlu0 %1814
          %v1816 = vsub.f32 %v1790, %v1806
          %v1817 = vsub.f32 %v1793, %v1809
          %v1818 = vsub.f32 %v1798, %v1812
          %v1819 = vsub.f32 %v1801, %v1815
          %v1820 = vmul.f32 %v1816, 1.442695
          %v1821 = vpow.pop %v1820
          %v1822 = vmul.f32 %v1817, 1.442695
          %v1823 = vpow.pop %v1822
          %v1824 = vmul.f32 %v1818, 1.442695
          %v1825 = vpow.pop %v1824
          %v1826 = vmul.f32 %v1819, 1.442695
          %v1827 = vpow.pop %v1826
          %v1828 = vsel %vm1214, %v1821, 0.0
          %1829 = vadd.xlane.f32.xlu0 %v1828
          %v1830 = vpop.xlane.xlu0 %1829
          %v1831 = vsel %vm1214, %v1823, 0.0
          %1832 = vadd.xlane.f32.xlu0 %v1831
          %v1833 = vpop.xlane.xlu0 %1832
          %v1834 = vsel %vm1214, %v1825, 0.0
          %1835 = vadd.xlane.f32.xlu0 %v1834
          %v1836 = vpop.xlane.xlu0 %1835
          %v1837 = vsel %vm1214, %v1827, 0.0
          %1838 = vadd.xlane.f32.xlu0 %v1837
          %v1839 = vpop.xlane.xlu0 %1838
          %v1840 = vrcp.pop %v1830
          %v1841 = vrcp.pop %v1833
          %v1842 = vrcp.pop %v1836
          %v1843 = vrcp.pop %v1839
          %v1844 = vmul.f32 %v1821, %v1840
          %v1845 = vmul.f32 %v1823, %v1841
          %v1846 = vmul.f32 %v1825, %v1842
          %v1847 = vmul.f32 %v1827, %v1843
          %v1848 = vpack.c.bf16 %v1845, %v1844
          %v1849 = vpack.c.bf16 %v1847, %v1846
          %1850 = vrot.lane.b32.xlu0 %v1212, 32
          %v1851 = vpop.permute.xlu0 %1850
          %1852 = vrot.lane.b32.xlu0 %v1213, 32
          %v1853 = vpop.permute.xlu0 %1852
          %v1857 = vsel %vm1214, %v1848, 0
          %v1860 = vsel %vm1214, %v1849, 0
          %1862 = vmatprep.subr.bf16.mxu0 0
          %1863 = vmatpush1.bf16.msra.mxu0 %v1851
          %1864 = vmatprep.subr.bf16.mxu0 0
          %1865 = vmatpush1.bf16.msra.mxu0 %v1853
          %1866 = vmatprep.subr.bf16.mxu0 0
          %1867 = vmatpush1.bf16.msra.mxu0 0
          %1868 = vmatprep.subr.bf16.mxu0 0
          %1869 = vmatpush1.bf16.msra.mxu0 0
          %1870 = vmatprep.subr.bf16.mxu0 0
          %1871 = vmatpush1.bf16.msra.mxu0 0
          %1872 = vmatprep.subr.bf16.mxu0 0
          %1873 = vmatpush1.bf16.msra.mxu0 0
          %1874 = vmatprep.subr.bf16.mxu0 0
          %1875 = vmatpush1.bf16.msra.mxu0 0
          %1876 = vmatprep.subr.bf16.mxu0 0
          %1877 = vmatpush1.bf16.msra.mxu0 0
          %1878 = vmatprep.subr.bf16.mxu0 0
          %1879 = vmatpush1.bf16.msra.mxu0 0
          %1880 = vmatprep.subr.bf16.mxu0 0
          %1881 = vmatpush1.bf16.msra.mxu0 0
          %1882 = vmatprep.subr.bf16.mxu0 0
          %1883 = vmatpush1.bf16.msra.mxu0 0
          %1884 = vmatprep.subr.bf16.mxu0 0
          %1885 = vmatpush1.bf16.msra.mxu0 0
          %1886 = vmatprep.subr.bf16.mxu0 0
          %1887 = vmatpush1.bf16.msra.mxu0 0
          %1888 = vmatprep.subr.bf16.mxu0 0
          %1889 = vmatpush1.bf16.msra.mxu0 0
          %1890 = vmatprep.subr.bf16.mxu0 0
          %1891 = vmatpush1.bf16.msra.mxu0 0
          %1892 = vmatprep.subr.bf16.mxu0 0
          %1893 = vmatpush1.bf16.msra.mxu0 0
          %1894 = vmatprep.mubr.bf16.mxu0 0
          %1895 = vmatmul.mubr.bf16.gmra.mrb[0].mxu0 %v1857
          %v1896 = vpop.f32.mrb[0].mxu0
          %v1897 = vadd.f32 0.0, %v1896
          %v1898 = vpop.f32.mrb[0].mxu0
          %v1899 = vpop.f32.mrb[0].mxu0
          %v1900 = vadd.f32 0.0, %v1899
          %v1901 = vpop.f32.mrb[0].mxu0
          %1902 = vmatprep.mubr.bf16.mxu0 0
          %1903 = vmatmul.mubr.bf16.gmra.mrb[0].mxu0 %v1860
          %v1904 = vpop.f32.mrb[0].mxu0
          %v1905 = vadd.f32 0.0, %v1904
          %v1906 = vpop.f32.mrb[0].mxu0
          %v1907 = vpop.f32.mrb[0].mxu0
          %v1908 = vadd.f32 0.0, %v1907
          %v1909 = vpop.f32.mrb[0].mxu0
          %1910 = vdwg.mxu0
          %1915 = vrot.lane.b32.xlu0 %v1545, 32
          %v1916 = vpop.permute.xlu0 %1915
          %1917 = vrot.lane.b32.xlu0 %v1548, 32
          %v1918 = vpop.permute.xlu0 %1917
          %1919 = vrot.lane.b32.xlu0 %v1553, 32
          %v1920 = vpop.permute.xlu0 %1919
          %1921 = vrot.lane.b32.xlu0 %v1556, 32
          %v1922 = vpop.permute.xlu0 %1921
          %1931 = vrot.lane.b32.xlu0 %v1721, 64
          %v1932 = vpop.permute.xlu0 %1931
          %1933 = vrot.lane.b32.xlu0 %v1724, 64
          %v1934 = vpop.permute.xlu0 %1933
          %1935 = vrot.lane.b32.xlu0 %v1729, 64
          %v1936 = vpop.permute.xlu0 %1935
          %1937 = vrot.lane.b32.xlu0 %v1732, 64
          %v1938 = vpop.permute.xlu0 %1937
          %1947 = vrot.lane.b32.xlu0 %v1897, 96
          %v1948 = vpop.permute.xlu0 %1947
          %1949 = vrot.lane.b32.xlu0 %v1900, 96
          %v1950 = vpop.permute.xlu0 %1949
          %1951 = vrot.lane.b32.xlu0 %v1905, 96
          %v1952 = vpop.permute.xlu0 %1951
          %1953 = vrot.lane.b32.xlu0 %v1908, 96
          %v1954 = vpop.permute.xlu0 %1953
          %v1959 = vsel %vm1214, %v1363, %v1916
          %v1960 = vsel %vm1214, %v1366, %v1918
          %v1961 = vsel %vm1214, %v1371, %v1920
          %v1962 = vsel %vm1214, %v1374, %v1922
          %v1963 = vsel %vm783, %v1959, %v1932
          %v1964 = vsel %vm783, %v1960, %v1934
          %v1965 = vsel %vm783, %v1961, %v1936
          %v1966 = vsel %vm783, %v1962, %v1938
          %vm1967 = vcmask 785408
          %v1968 = vsel %vm1967, %v1963, %v1948
          %v1969 = vsel %vm1967, %v1964, %v1950
          %v1970 = vsel %vm1967, %v1965, %v1952
          %v1971 = vsel %vm1967, %v1966, %v1954
          %v1972 = vpack.c.bf16 %v1969, %v1968
          %v1973 = vpack.c.bf16 %v1971, %v1970
          %s1974 = smul.u32 %s844, 16
          %s1975 = smul.addr %s1974, 4
          %s1976 = scalar_lea.vmem %s7, %s1975
          %v1977 = vld [vmem:[%s1976] sm:$0xf]
          %v1978 = vld [vmem:[%s1976 + $0x4] sm:$0xf]
          %v1979 = vld [vmem:[%s1976 + $0x8] sm:$0xf]
          %v1980 = vld [vmem:[%s1976 + $0xc] sm:$0xf]
          %v1981 = vld [vmem:[%s1976 + $0x10] sm:$0xf]
          %v1982 = vld [vmem:[%s1976 + $0x14] sm:$0xf]
          %v1983 = vld [vmem:[%s1976 + $0x18] sm:$0xf]
          %v1984 = vld [vmem:[%s1976 + $0x1c] sm:$0xf]
          %v1985 = vld [vmem:[%s1976 + $0x20] sm:$0xf]
          %v1986 = vld [vmem:[%s1976 + $0x24] sm:$0xf]
          %v1987 = vld [vmem:[%s1976 + $0x28] sm:$0xf]
          %v1988 = vld [vmem:[%s1976 + $0x2c] sm:$0xf]
          %v1989 = vld [vmem:[%s1976 + $0x30] sm:$0xf]
          %v1990 = vld [vmem:[%s1976 + $0x34] sm:$0xf]
          %v1991 = vld [vmem:[%s1976 + $0x38] sm:$0xf]
          %v1992 = vld [vmem:[%s1976 + $0x3c] sm:$0xf]
          %v2009 = vunpack.c.l.b16 %v1977
          %v2010 = vunpack.c.l.b16 %v1978
          %v2011 = vunpack.c.l.b16 %v1979
          %v2012 = vunpack.c.l.b16 %v1980
          %v2013 = vunpack.c.l.b16 %v1981
          %v2014 = vunpack.c.l.b16 %v1982
          %v2015 = vunpack.c.l.b16 %v1983
          %v2016 = vunpack.c.l.b16 %v1984
          %v2017 = vunpack.c.l.b16 %v1985
          %v2018 = vunpack.c.l.b16 %v1986
          %v2019 = vunpack.c.l.b16 %v1987
          %v2020 = vunpack.c.l.b16 %v1988
          %v2021 = vunpack.c.l.b16 %v1989
          %v2022 = vunpack.c.l.b16 %v1990
          %v2023 = vunpack.c.l.b16 %v1991
          %v2024 = vunpack.c.l.b16 %v1992
          %v2025 = vpack.c.b16 %v2010, %v2009
          %v2026 = vpack.c.b16 %v2012, %v2011
          %v2027 = vpack.c.b16 %v2014, %v2013
          %v2028 = vpack.c.b16 %v2016, %v2015
          %v2029 = vpack.c.b16 %v2018, %v2017
          %v2030 = vpack.c.b16 %v2020, %v2019
          %v2031 = vpack.c.b16 %v2022, %v2021
          %v2032 = vpack.c.b16 %v2024, %v2023
          %2041 = vmatprep.subr.bf16.mxu0 0
          %2042 = vmatpush1.bf16.msra.mxu0 %v2025
          %2043 = vmatprep.subr.bf16.mxu0 0
          %2044 = vmatpush1.bf16.msra.mxu0 %v2026
          %2045 = vmatprep.subr.bf16.mxu0 0
          %2046 = vmatpush1.bf16.msra.mxu0 %v2027
          %2047 = vmatprep.subr.bf16.mxu0 0
          %2048 = vmatpush1.bf16.msra.mxu0 %v2028
          %2049 = vmatprep.subr.bf16.mxu0 0
          %2050 = vmatpush1.bf16.msra.mxu0 %v2029
          %2051 = vmatprep.subr.bf16.mxu0 0
          %2052 = vmatpush1.bf16.msra.mxu0 %v2030
          %2053 = vmatprep.subr.bf16.mxu0 0
          %2054 = vmatpush1.bf16.msra.mxu0 %v2031
          %2055 = vmatprep.subr.bf16.mxu0 0
          %2056 = vmatpush1.bf16.msra.mxu0 %v2032
          %2057 = vmatprep.subr.bf16.mxu0 0
          %2058 = vmatpush1.bf16.msra.mxu0 0
          %2059 = vmatprep.subr.bf16.mxu0 0
          %2060 = vmatpush1.bf16.msra.mxu0 0
          %2061 = vmatprep.subr.bf16.mxu0 0
          %2062 = vmatpush1.bf16.msra.mxu0 0
          %2063 = vmatprep.subr.bf16.mxu0 0
          %2064 = vmatpush1.bf16.msra.mxu0 0
          %2065 = vmatprep.subr.bf16.mxu0 0
          %2066 = vmatpush1.bf16.msra.mxu0 0
          %2067 = vmatprep.subr.bf16.mxu0 0
          %2068 = vmatpush1.bf16.msra.mxu0 0
          %2069 = vmatprep.subr.bf16.mxu0 0
          %2070 = vmatpush1.bf16.msra.mxu0 0
          %2071 = vmatprep.subr.bf16.mxu0 0
          %2072 = vmatpush1.bf16.msra.mxu0 0
          %2073 = vmatprep.mubr.bf16.mxu0 0
          %2074 = vmatmul.mubr.bf16.gmra.mrb[0].mxu0 %v1972
          %v2075 = vpop.f32.mrb[0].mxu0
          %v2076 = vadd.f32 0.0, %v2075
          %v2077 = vpop.f32.mrb[0].mxu0
          %v2078 = vpop.f32.mrb[0].mxu0
          %v2079 = vadd.f32 0.0, %v2078
          %v2080 = vpop.f32.mrb[0].mxu0
          %2081 = vmatprep.mubr.bf16.mxu0 0
          %2082 = vmatmul.mubr.bf16.gmra.mrb[0].mxu0 %v1973
          %v2083 = vpop.f32.mrb[0].mxu0
          %v2084 = vadd.f32 0.0, %v2083
          %v2085 = vpop.f32.mrb[0].mxu0
          %v2086 = vpop.f32.mrb[0].mxu0
          %v2087 = vadd.f32 0.0, %v2086
          %v2088 = vpop.f32.mrb[0].mxu0
          %2089 = vdwg.mxu0
          %v2090 = vadd.f32 %v849, %v2076
          %v2091 = vadd.f32 %v850, %v2079
          %v2092 = vadd.f32 %v851, %v2084
          %v2093 = vadd.f32 %v852, %v2087
          %s2094 = scalar_lea.vmem [#allocation8], %s844
          %v2095 = vld [vmem:[%s2094] sm:$0x1]
          %v2097 = vlaneseq
          %v2098 = vshrl.u32 %v2097, 7
          %v2099 = vsub.s32 0, %v2098
          %v2100 = vrot.slane %v2095, %v2099
          %v2102 = vadd.f32 %v2090, %v2100
          %v2103 = vadd.f32 %v2091, %v2100
          %v2104 = vadd.f32 %v2092, %v2100
          %v2105 = vadd.f32 %v2093, %v2100
          %s2106 = scalar_lea.vmem [#allocation10], %s844
          %v2107 = vld [vmem:[%s2106] sm:$0x1]
          %s2108 = scalar_lea.vmem [#allocation11], %s844
          %v2109 = vld [vmem:[%s2108] sm:$0x1]
          %2110 = vadd.xlane.f32.xlu0 %v2102
          %v2111 = vpop.xlane.xlu0 %2110
          %2112 = vadd.xlane.f32.xlu0 %v2103
          %v2113 = vpop.xlane.xlu0 %2112
          %2114 = vadd.xlane.f32.xlu0 %v2104
          %v2115 = vpop.xlane.xlu0 %2114
          %2116 = vadd.xlane.f32.xlu0 %v2105
          %v2117 = vpop.xlane.xlu0 %2116
          %v2118 = vmul.f32 %v2111, %v865
          %v2119 = vmul.f32 %v2113, %v865
          %v2120 = vmul.f32 %v2115, %v865
          %v2121 = vmul.f32 %v2117, %v865
          %v2122 = vsub.f32 %v2102, %v2118
          %v2123 = vsub.f32 %v2103, %v2119
          %v2124 = vsub.f32 %v2104, %v2120
          %v2125 = vsub.f32 %v2105, %v2121
          %v2126 = vmul.f32 %v2122, %v2122
          %v2127 = vmul.f32 %v2123, %v2123
          %v2128 = vmul.f32 %v2124, %v2124
          %v2129 = vmul.f32 %v2125, %v2125
          %2130 = vadd.xlane.f32.xlu0 %v2126
          %v2131 = vpop.xlane.xlu0 %2130
          %2132 = vadd.xlane.f32.xlu0 %v2127
          %v2133 = vpop.xlane.xlu0 %2132
          %2134 = vadd.xlane.f32.xlu0 %v2128
          %v2135 = vpop.xlane.xlu0 %2134
          %2136 = vadd.xlane.f32.xlu0 %v2129
          %v2137 = vpop.xlane.xlu0 %2136
          %v2138 = vmul.f32 %v2131, %v865
          %v2139 = vmul.f32 %v2133, %v865
          %v2140 = vmul.f32 %v2135, %v865
          %v2141 = vmul.f32 %v2137, %v865
          %v2142 = vadd.f32 %v2138, 1e-06
          %v2143 = vadd.f32 %v2139, 1e-06
          %v2144 = vadd.f32 %v2140, 1e-06
          %v2145 = vadd.f32 %v2141, 1e-06
          %v2146 = vrsqrt.pop %v2142
          %v2147 = vrsqrt.pop %v2143
          %v2148 = vrsqrt.pop %v2144
          %v2149 = vrsqrt.pop %v2145
          %v2150 = vmul.f32 %v2122, %v2146
          %v2151 = vmul.f32 %v2123, %v2147
          %v2152 = vmul.f32 %v2124, %v2148
          %v2153 = vmul.f32 %v2125, %v2149
          %v2155 = vlaneseq
          %v2156 = vshrl.u32 %v2155, 7
          %v2157 = vsub.s32 0, %v2156
          %v2158 = vrot.slane %v2107, %v2157
          %v2160 = vmul.f32 %v2150, %v2158
          %v2161 = vmul.f32 %v2151, %v2158
          %v2162 = vmul.f32 %v2152, %v2158
          %v2163 = vmul.f32 %v2153, %v2158
          %v2165 = vlaneseq
          %v2166 = vshrl.u32 %v2165, 7
          %v2167 = vsub.s32 0, %v2166
          %v2168 = vrot.slane %v2109, %v2167
          %v2170 = vadd.f32 %v2160, %v2168
          %v2171 = vadd.f32 %v2161, %v2168
          %v2172 = vadd.f32 %v2162, %v2168
          %v2173 = vadd.f32 %v2163, %v2168
          %v2174 = vpack.c.bf16 %v2171, %v2170
          %v2175 = vpack.c.bf16 %v2173, %v2172
          %s2176 = smul.u32 %s844, 64
          %s2177 = smul.addr %s2176, 4
          %s2178 = scalar_lea.vmem %s11, %s2177
          %v2179 = vld [vmem:[%s2178] sm:$0xff]
          %v2180 = vld [vmem:[%s2178 + $0x8] sm:$0xff]
          %v2181 = vld [vmem:[%s2178 + $0x10] sm:$0xff]
          %v2182 = vld [vmem:[%s2178 + $0x18] sm:$0xff]
          %v2183 = vld [vmem:[%s2178 + $0x20] sm:$0xff]
          %v2184 = vld [vmem:[%s2178 + $0x28] sm:$0xff]
          %v2185 = vld [vmem:[%s2178 + $0x30] sm:$0xff]
          %v2186 = vld [vmem:[%s2178 + $0x38] sm:$0xff]
          %v2187 = vld [vmem:[%s2178 + $0x40] sm:$0xff]
          %v2188 = vld [vmem:[%s2178 + $0x48] sm:$0xff]
          %v2189 = vld [vmem:[%s2178 + $0x50] sm:$0xff]
          %v2190 = vld [vmem:[%s2178 + $0x58] sm:$0xff]
          %v2191 = vld [vmem:[%s2178 + $0x60] sm:$0xff]
          %v2192 = vld [vmem:[%s2178 + $0x68] sm:$0xff]
          %v2193 = vld [vmem:[%s2178 + $0x70] sm:$0xff]
          %v2194 = vld [vmem:[%s2178 + $0x78] sm:$0xff]
          %v2195 = vld [vmem:[%s2178 + $0x80] sm:$0xff]
          %v2196 = vld [vmem:[%s2178 + $0x88] sm:$0xff]
          %v2197 = vld [vmem:[%s2178 + $0x90] sm:$0xff]
          %v2198 = vld [vmem:[%s2178 + $0x98] sm:$0xff]
          %v2199 = vld [vmem:[%s2178 + $0xa0] sm:$0xff]
          %v2200 = vld [vmem:[%s2178 + $0xa8] sm:$0xff]
          %v2201 = vld [vmem:[%s2178 + $0xb0] sm:$0xff]
          %v2202 = vld [vmem:[%s2178 + $0xb8] sm:$0xff]
          %v2203 = vld [vmem:[%s2178 + $0xc0] sm:$0xff]
          %v2204 = vld [vmem:[%s2178 + $0xc8] sm:$0xff]
          %v2205 = vld [vmem:[%s2178 + $0xd0] sm:$0xff]
          %v2206 = vld [vmem:[%s2178 + $0xd8] sm:$0xff]
          %v2207 = vld [vmem:[%s2178 + $0xe0] sm:$0xff]
          %v2208 = vld [vmem:[%s2178 + $0xe8] sm:$0xff]
          %v2209 = vld [vmem:[%s2178 + $0xf0] sm:$0xff]
          %v2210 = vld [vmem:[%s2178 + $0xf8] sm:$0xff]
          %s2211 = smul.u32 %s844, 4
          %s2212 = scalar_lea.vmem [#allocation13], %s2211
          %v2213 = vld [vmem:[%s2212] sm:$0xf]
          %v2215 = vlaneseq
          %v2216 = vshrl.u32 %v2215, 7
          %v2217 = vsub.s32 0, %v2216
          %v2218 = vrot.slane %v2213, %v2217
          %v2219 = vlaneseq
          %v2220 = vshrl.u32 %v2219, 7
          %v2221 = vsub.s32 1, %v2220
          %v2222 = vrot.slane %v2213, %v2221
          %v2223 = vlaneseq
          %v2224 = vshrl.u32 %v2223, 7
          %v2225 = vsub.s32 2, %v2224
          %v2226 = vrot.slane %v2213, %v2225
          %v2227 = vlaneseq
          %v2228 = vshrl.u32 %v2227, 7
          %v2229 = vsub.s32 3, %v2228
          %v2230 = vrot.slane %v2213, %v2229
          %v2267 = vunpack.c.l.b16 %v2179
          %v2268 = vunpack.c.h.b16 %v2179
          %v2269 = vunpack.c.l.b16 %v2180
          %v2270 = vunpack.c.h.b16 %v2180
          %v2271 = vunpack.c.l.b16 %v2181
          %v2272 = vunpack.c.h.b16 %v2181
          %v2273 = vunpack.c.l.b16 %v2182
          %v2274 = vunpack.c.h.b16 %v2182
          %v2275 = vunpack.c.l.b16 %v2183
          %v2276 = vunpack.c.h.b16 %v2183
          %v2277 = vunpack.c.l.b16 %v2184
          %v2278 = vunpack.c.h.b16 %v2184
          %v2279 = vunpack.c.l.b16 %v2185
          %v2280 = vunpack.c.h.b16 %v2185
          %v2281 = vunpack.c.l.b16 %v2186
          %v2282 = vunpack.c.h.b16 %v2186
          %v2283 = vunpack.c.l.b16 %v2187
          %v2284 = vunpack.c.h.b16 %v2187
          %v2285 = vunpack.c.l.b16 %v2188
          %v2286 = vunpack.c.h.b16 %v2188
          %v2287 = vunpack.c.l.b16 %v2189
          %v2288 = vunpack.c.h.b16 %v2189
          %v2289 = vunpack.c.l.b16 %v2190
          %v2290 = vunpack.c.h.b16 %v2190
          %v2291 = vunpack.c.l.b16 %v2191
          %v2292 = vunpack.c.h.b16 %v2191
          %v2293 = vunpack.c.l.b16 %v2192
          %v2294 = vunpack.c.h.b16 %v2192
          %v2295 = vunpack.c.l.b16 %v2193
          %v2296 = vunpack.c.h.b16 %v2193
          %v2297 = vunpack.c.l.b16 %v2194
          %v2298 = vunpack.c.h.b16 %v2194
          %v2299 = vunpack.c.l.b16 %v2195
          %v2300 = vunpack.c.h.b16 %v2195
          %v2301 = vunpack.c.l.b16 %v2196
          %v2302 = vunpack.c.h.b16 %v2196
          %v2303 = vunpack.c.l.b16 %v2197
          %v2304 = vunpack.c.h.b16 %v2197
          %v2305 = vunpack.c.l.b16 %v2198
          %v2306 = vunpack.c.h.b16 %v2198
          %v2307 = vunpack.c.l.b16 %v2199
          %v2308 = vunpack.c.h.b16 %v2199
          %v2309 = vunpack.c.l.b16 %v2200
          %v2310 = vunpack.c.h.b16 %v2200
          %v2311 = vunpack.c.l.b16 %v2201
          %v2312 = vunpack.c.h.b16 %v2201
          %v2313 = vunpack.c.l.b16 %v2202
          %v2314 = vunpack.c.h.b16 %v2202
          %v2315 = vunpack.c.l.b16 %v2203
          %v2316 = vunpack.c.h.b16 %v2203
          %v2317 = vunpack.c.l.b16 %v2204
          %v2318 = vunpack.c.h.b16 %v2204
          %v2319 = vunpack.c.l.b16 %v2205
          %v2320 = vunpack.c.h.b16 %v2205
          %v2321 = vunpack.c.l.b16 %v2206
          %v2322 = vunpack.c.h.b16 %v2206
          %v2323 = vunpack.c.l.b16 %v2207
          %v2324 = vunpack.c.h.b16 %v2207
          %v2325 = vunpack.c.l.b16 %v2208
          %v2326 = vunpack.c.h.b16 %v2208
          %v2327 = vunpack.c.l.b16 %v2209
          %v2328 = vunpack.c.h.b16 %v2209
          %v2329 = vunpack.c.l.b16 %v2210
          %v2330 = vunpack.c.h.b16 %v2210
          %v2331 = vpack.c.b16 %v2271, %v2267
          %v2332 = vpack.c.b16 %v2272, %v2268
          %v2333 = vpack.c.b16 %v2273, %v2269
          %v2334 = vpack.c.b16 %v2274, %v2270
          %v2335 = vpack.c.b16 %v2279, %v2275
          %v2336 = vpack.c.b16 %v2280, %v2276
          %v2337 = vpack.c.b16 %v2281, %v2277
          %v2338 = vpack.c.b16 %v2282, %v2278
          %v2339 = vpack.c.b16 %v2287, %v2283
          %v2340 = vpack.c.b16 %v2288, %v2284
          %v2341 = vpack.c.b16 %v2289, %v2285
          %v2342 = vpack.c.b16 %v2290, %v2286
          %v2343 = vpack.c.b16 %v2295, %v2291
          %v2344 = vpack.c.b16 %v2296, %v2292
          %v2345 = vpack.c.b16 %v2297, %v2293
          %v2346 = vpack.c.b16 %v2298, %v2294
          %v2347 = vpack.c.b16 %v2303, %v2299
          %v2348 = vpack.c.b16 %v2304, %v2300
          %v2349 = vpack.c.b16 %v2305, %v2301
          %v2350 = vpack.c.b16 %v2306, %v2302
          %v2351 = vpack.c.b16 %v2311, %v2307
          %v2352 = vpack.c.b16 %v2312, %v2308
          %v2353 = vpack.c.b16 %v2313, %v2309
          %v2354 = vpack.c.b16 %v2314, %v2310
          %v2355 = vpack.c.b16 %v2319, %v2315
          %v2356 = vpack.c.b16 %v2320, %v2316
          %v2357 = vpack.c.b16 %v2321, %v2317
          %v2358 = vpack.c.b16 %v2322, %v2318
          %v2359 = vpack.c.b16 %v2327, %v2323
          %v2360 = vpack.c.b16 %v2328, %v2324
          %v2361 = vpack.c.b16 %v2329, %v2325
          %v2362 = vpack.c.b16 %v2330, %v2326
          %2395 = vmatprep.subr.bf16.mxu0 %v2332
          %2396 = vmatpush1.bf16.msra.mxu0 %v2331
          %2397 = vmatprep.subr.bf16.mxu0 %v2336
          %2398 = vmatpush1.bf16.msra.mxu0 %v2335
          %2399 = vmatprep.subr.bf16.mxu0 %v2340
          %2400 = vmatpush1.bf16.msra.mxu0 %v2339
          %2401 = vmatprep.subr.bf16.mxu0 %v2344
          %2402 = vmatpush1.bf16.msra.mxu0 %v2343
          %2403 = vmatprep.subr.bf16.mxu0 %v2348
          %2404 = vmatpush1.bf16.msra.mxu0 %v2347
          %2405 = vmatprep.subr.bf16.mxu0 %v2352
          %2406 = vmatpush1.bf16.msra.mxu0 %v2351
          %2407 = vmatprep.subr.bf16.mxu0 %v2356
          %2408 = vmatpush1.bf16.msra.mxu0 %v2355
          %2409 = vmatprep.subr.bf16.mxu0 %v2360
          %2410 = vmatpush1.bf16.msra.mxu0 %v2359
          %2411 = vmatprep.subr.bf16.mxu0 0
          %2412 = vmatpush1.bf16.msra.mxu0 0
          %2413 = vmatprep.subr.bf16.mxu0 0
          %2414 = vmatpush1.bf16.msra.mxu0 0
          %2415 = vmatprep.subr.bf16.mxu0 0
          %2416 = vmatpush1.bf16.msra.mxu0 0
          %2417 = vmatprep.subr.bf16.mxu0 0
          %2418 = vmatpush1.bf16.msra.mxu0 0
          %2419 = vmatprep.subr.bf16.mxu0 0
          %2420 = vmatpush1.bf16.msra.mxu0 0
          %2421 = vmatprep.subr.bf16.mxu0 0
          %2422 = vmatpush1.bf16.msra.mxu0 0
          %2423 = vmatprep.subr.bf16.mxu0 0
          %2424 = vmatpush1.bf16.msra.mxu0 0
          %2425 = vmatprep.subr.bf16.mxu0 0
          %2426 = vmatpush1.bf16.msra.mxu0 0
          %2427 = vmatprep.mubr.bf16.mxu0 0
          %2428 = vmatmul.mubr.bf16.gmra.mrb[0].mxu0 %v2174
          %v2429 = vpop.f32.mrb[0].mxu0
          %v2430 = vadd.f32 %v2218, %v2429
          %v2431 = vpop.f32.mrb[0].mxu0
          %v2432 = vadd.f32 %v2222, %v2431
          %v2433 = vpop.f32.mrb[0].mxu0
          %v2434 = vadd.f32 %v2218, %v2433
          %v2435 = vpop.f32.mrb[0].mxu0
          %v2436 = vadd.f32 %v2222, %v2435
          %2437 = vmatprep.mubr.bf16.mxu0 0
          %2438 = vmatmul.mubr.bf16.gmra.mrb[0].mxu0 %v2175
          %v2439 = vpop.f32.mrb[0].mxu0
          %v2440 = vadd.f32 %v2218, %v2439
          %v2441 = vpop.f32.mrb[0].mxu0
          %v2442 = vadd.f32 %v2222, %v2441
          %v2443 = vpop.f32.mrb[0].mxu0
          %v2444 = vadd.f32 %v2218, %v2443
          %v2445 = vpop.f32.mrb[0].mxu0
          %v2446 = vadd.f32 %v2222, %v2445
          %2447 = vdwg.mxu0
          %2448 = vmatprep.subr.bf16.mxu0 %v2334
          %2449 = vmatpush1.bf16.msra.mxu0 %v2333
          %2450 = vmatprep.subr.bf16.mxu0 %v2338
          %2451 = vmatpush1.bf16.msra.mxu0 %v2337
          %2452 = vmatprep.subr.bf16.mxu0 %v2342
          %2453 = vmatpush1.bf16.msra.mxu0 %v2341
          %2454 = vmatprep.subr.bf16.mxu0 %v2346
          %2455 = vmatpush1.bf16.msra.mxu0 %v2345
          %2456 = vmatprep.subr.bf16.mxu0 %v2350
          %2457 = vmatpush1.bf16.msra.mxu0 %v2349
          %2458 = vmatprep.subr.bf16.mxu0 %v2354
          %2459 = vmatpush1.bf16.msra.mxu0 %v2353
          %2460 = vmatprep.subr.bf16.mxu0 %v2358
          %2461 = vmatpush1.bf16.msra.mxu0 %v2357
          %2462 = vmatprep.subr.bf16.mxu0 %v2362
          %2463 = vmatpush1.bf16.msra.mxu0 %v2361
          %2464 = vmatprep.subr.bf16.mxu0 0
          %2465 = vmatpush1.bf16.msra.mxu0 0
          %2466 = vmatprep.subr.bf16.mxu0 0
          %2467 = vmatpush1.bf16.msra.mxu0 0
          %2468 = vmatprep.subr.bf16.mxu0 0
          %2469 = vmatpush1.bf16.msra.mxu0 0
          %2470 = vmatprep.subr.bf16.mxu0 0
          %2471 = vmatpush1.bf16.msra.mxu0 0
          %2472 = vmatprep.subr.bf16.mxu0 0
          %2473 = vmatpush1.bf16.msra.mxu0 0
          %2474 = vmatprep.subr.bf16.mxu0 0
          %2475 = vmatpush1.bf16.msra.mxu0 0
          %2476 = vmatprep.subr.bf16.mxu0 0
          %2477 = vmatpush1.bf16.msra.mxu0 0
          %2478 = vmatprep.subr.bf16.mxu0 0
          %2479 = vmatpush1.bf16.msra.mxu0 0
          %2480 = vmatprep.mubr.bf16.mxu0 0
          %2481 = vmatmul.mubr.bf16.gmra.mrb[0].mxu0 %v2174
          %v2482 = vpop.f32.mrb[0].mxu0
          %v2483 = vadd.f32 %v2226, %v2482
          %v2484 = vpop.f32.mrb[0].mxu0
          %v2485 = vadd.f32 %v2230, %v2484
          %v2486 = vpop.f32.mrb[0].mxu0
          %v2487 = vadd.f32 %v2226, %v2486
          %v2488 = vpop.f32.mrb[0].mxu0
          %v2489 = vadd.f32 %v2230, %v2488
          %2490 = vmatprep.mubr.bf16.mxu0 0
          %2491 = vmatmul.mubr.bf16.gmra.mrb[0].mxu0 %v2175
          %v2492 = vpop.f32.mrb[0].mxu0
          %v2493 = vadd.f32 %v2226, %v2492
          %v2494 = vpop.f32.mrb[0].mxu0
          %v2495 = vadd.f32 %v2230, %v2494
          %v2496 = vpop.f32.mrb[0].mxu0
          %v2497 = vadd.f32 %v2226, %v2496
          %v2498 = vpop.f32.mrb[0].mxu0
          %v2499 = vadd.f32 %v2230, %v2498
          %2500 = vdwg.mxu0
          %v2501 = vmul.f32 %v2430, 0.5
          %v2502 = vmul.f32 %v2432, 0.5
          %v2503 = vmul.f32 %v2483, 0.5
          %v2504 = vmul.f32 %v2485, 0.5
          %v2505 = vmul.f32 %v2434, 0.5
          %v2506 = vmul.f32 %v2436, 0.5
          %v2507 = vmul.f32 %v2487, 0.5
          %v2508 = vmul.f32 %v2489, 0.5
          %v2509 = vmul.f32 %v2440, 0.5
          %v2510 = vmul.f32 %v2442, 0.5
          %v2511 = vmul.f32 %v2493, 0.5
          %v2512 = vmul.f32 %v2495, 0.5
          %v2513 = vmul.f32 %v2444, 0.5
          %v2514 = vmul.f32 %v2446, 0.5
          %v2515 = vmul.f32 %v2497, 0.5
          %v2516 = vmul.f32 %v2499, 0.5
          %v2517 = vmul.f32 %v2430, 0.044715
          %v2518 = vmul.f32 %v2432, 0.044715
          %v2519 = vmul.f32 %v2483, 0.044715
          %v2520 = vmul.f32 %v2485, 0.044715
          %v2521 = vmul.f32 %v2434, 0.044715
          %v2522 = vmul.f32 %v2436, 0.044715
          %v2523 = vmul.f32 %v2487, 0.044715
          %v2524 = vmul.f32 %v2489, 0.044715
          %v2525 = vmul.f32 %v2440, 0.044715
          %v2526 = vmul.f32 %v2442, 0.044715
          %v2527 = vmul.f32 %v2493, 0.044715
          %v2528 = vmul.f32 %v2495, 0.044715
          %v2529 = vmul.f32 %v2444, 0.044715
          %v2530 = vmul.f32 %v2446, 0.044715
          %v2531 = vmul.f32 %v2497, 0.044715
          %v2532 = vmul.f32 %v2499, 0.044715
          %v2533 = vmul.f32 %v2517, %v2430
          %v2534 = vmul.f32 %v2518, %v2432
          %v2535 = vmul.f32 %v2519, %v2483
          %v2536 = vmul.f32 %v2520, %v2485
          %v2537 = vmul.f32 %v2521, %v2434
          %v2538 = vmul.f32 %v2522, %v2436
          %v2539 = vmul.f32 %v2523, %v2487
          %v2540 = vmul.f32 %v2524, %v2489
          %v2541 = vmul.f32 %v2525, %v2440
          %v2542 = vmul.f32 %v2526, %v2442
          %v2543 = vmul.f32 %v2527, %v2493
          %v2544 = vmul.f32 %v2528, %v2495
          %v2545 = vmul.f32 %v2529, %v2444
          %v2546 = vmul.f32 %v2530, %v2446
          %v2547 = vmul.f32 %v2531, %v2497
          %v2548 = vmul.f32 %v2532, %v2499
          %v2549 = vmul.f32 %v2533, %v2430
          %v2550 = vmul.f32 %v2534, %v2432
          %v2551 = vmul.f32 %v2535, %v2483
          %v2552 = vmul.f32 %v2536, %v2485
          %v2553 = vmul.f32 %v2537, %v2434
          %v2554 = vmul.f32 %v2538, %v2436
          %v2555 = vmul.f32 %v2539, %v2487
          %v2556 = vmul.f32 %v2540, %v2489
          %v2557 = vmul.f32 %v2541, %v2440
          %v2558 = vmul.f32 %v2542, %v2442
          %v2559 = vmul.f32 %v2543, %v2493
          %v2560 = vmul.f32 %v2544, %v2495
          %v2561 = vmul.f32 %v2545, %v2444
          %v2562 = vmul.f32 %v2546, %v2446
          %v2563 = vmul.f32 %v2547, %v2497
          %v2564 = vmul.f32 %v2548, %v2499
          %v2565 = vadd.f32 %v2430, %v2549
          %v2566 = vadd.f32 %v2432, %v2550
          %v2567 = vadd.f32 %v2483, %v2551
          %v2568 = vadd.f32 %v2485, %v2552
          %v2569 = vadd.f32 %v2434, %v2553
          %v2570 = vadd.f32 %v2436, %v2554
          %v2571 = vadd.f32 %v2487, %v2555
          %v2572 = vadd.f32 %v2489, %v2556
          %v2573 = vadd.f32 %v2440, %v2557
          %v2574 = vadd.f32 %v2442, %v2558
          %v2575 = vadd.f32 %v2493, %v2559
          %v2576 = vadd.f32 %v2495, %v2560
          %v2577 = vadd.f32 %v2444, %v2561
          %v2578 = vadd.f32 %v2446, %v2562
          %v2579 = vadd.f32 %v2497, %v2563
          %v2580 = vadd.f32 %v2499, %v2564
          %v2581 = vmul.f32 %v2565, 0.7978846
          %v2582 = vmul.f32 %v2566, 0.7978846
          %v2583 = vmul.f32 %v2567, 0.7978846
          %v2584 = vmul.f32 %v2568, 0.7978846
          %v2585 = vmul.f32 %v2569, 0.7978846
          %v2586 = vmul.f32 %v2570, 0.7978846
          %v2587 = vmul.f32 %v2571, 0.7978846
          %v2588 = vmul.f32 %v2572, 0.7978846
          %v2589 = vmul.f32 %v2573, 0.7978846
          %v2590 = vmul.f32 %v2574, 0.7978846
          %v2591 = vmul.f32 %v2575, 0.7978846
          %v2592 = vmul.f32 %v2576, 0.7978846
          %v2593 = vmul.f32 %v2577, 0.7978846
          %v2594 = vmul.f32 %v2578, 0.7978846
          %v2595 = vmul.f32 %v2579, 0.7978846
          %v2596 = vmul.f32 %v2580, 0.7978846
          %v2597 = vtanh.pop %v2581
          %v2598 = vtanh.pop %v2582
          %v2599 = vtanh.pop %v2583
          %v2600 = vtanh.pop %v2584
          %v2601 = vtanh.pop %v2585
          %v2602 = vtanh.pop %v2586
          %v2603 = vtanh.pop %v2587
          %v2604 = vtanh.pop %v2588
          %v2605 = vtanh.pop %v2589
          %v2606 = vtanh.pop %v2590
          %v2607 = vtanh.pop %v2591
          %v2608 = vtanh.pop %v2592
          %v2609 = vtanh.pop %v2593
          %v2610 = vtanh.pop %v2594
          %v2611 = vtanh.pop %v2595
          %v2612 = vtanh.pop %v2596
          %v2613 = vadd.f32 %v2597, 1.0
          %v2614 = vadd.f32 %v2598, 1.0
          %v2615 = vadd.f32 %v2599, 1.0
          %v2616 = vadd.f32 %v2600, 1.0
          %v2617 = vadd.f32 %v2601, 1.0
          %v2618 = vadd.f32 %v2602, 1.0
          %v2619 = vadd.f32 %v2603, 1.0
          %v2620 = vadd.f32 %v2604, 1.0
          %v2621 = vadd.f32 %v2605, 1.0
          %v2622 = vadd.f32 %v2606, 1.0
          %v2623 = vadd.f32 %v2607, 1.0
          %v2624 = vadd.f32 %v2608, 1.0
          %v2625 = vadd.f32 %v2609, 1.0
          %v2626 = vadd.f32 %v2610, 1.0
          %v2627 = vadd.f32 %v2611, 1.0
          %v2628 = vadd.f32 %v2612, 1.0
          %v2629 = vmul.f32 %v2501, %v2613
          %v2630 = vmul.f32 %v2502, %v2614
          %v2631 = vmul.f32 %v2503, %v2615
          %v2632 = vmul.f32 %v2504, %v2616
          %v2633 = vmul.f32 %v2505, %v2617
          %v2634 = vmul.f32 %v2506, %v2618
          %v2635 = vmul.f32 %v2507, %v2619
          %v2636 = vmul.f32 %v2508, %v2620
          %v2637 = vmul.f32 %v2509, %v2621
          %v2638 = vmul.f32 %v2510, %v2622
          %v2639 = vmul.f32 %v2511, %v2623
          %v2640 = vmul.f32 %v2512, %v2624
          %v2641 = vmul.f32 %v2513, %v2625
          %v2642 = vmul.f32 %v2514, %v2626
          %v2643 = vmul.f32 %v2515, %v2627
          %v2644 = vmul.f32 %v2516, %v2628
          %v2645 = vpack.c.bf16 %v2633, %v2629
          %v2646 = vpack.c.bf16 %v2634, %v2630
          %v2647 = vpack.c.bf16 %v2635, %v2631
          %v2648 = vpack.c.bf16 %v2636, %v2632
          %v2649 = vpack.c.bf16 %v2641, %v2637
          %v2650 = vpack.c.bf16 %v2642, %v2638
          %v2651 = vpack.c.bf16 %v2643, %v2639
          %v2652 = vpack.c.bf16 %v2644, %v2640
          %s2653 = smul.addr %s2176, 4
          %s2654 = scalar_lea.vmem [#allocation14], %s2653
          %v2655 = vld [vmem:[%s2654] sm:$0xf]
          %v2656 = vld [vmem:[%s2654 + $0x4] sm:$0xf]
          %v2657 = vld [vmem:[%s2654 + $0x8] sm:$0xf]
          %v2658 = vld [vmem:[%s2654 + $0xc] sm:$0xf]
          %v2659 = vld [vmem:[%s2654 + $0x10] sm:$0xf]
          %v2660 = vld [vmem:[%s2654 + $0x14] sm:$0xf]
          %v2661 = vld [vmem:[%s2654 + $0x18] sm:$0xf]
          %v2662 = vld [vmem:[%s2654 + $0x1c] sm:$0xf]
          %v2663 = vld [vmem:[%s2654 + $0x20] sm:$0xf]
          %v2664 = vld [vmem:[%s2654 + $0x24] sm:$0xf]
          %v2665 = vld [vmem:[%s2654 + $0x28] sm:$0xf]
          %v2666 = vld [vmem:[%s2654 + $0x2c] sm:$0xf]
          %v2667 = vld [vmem:[%s2654 + $0x30] sm:$0xf]
          %v2668 = vld [vmem:[%s2654 + $0x34] sm:$0xf]
          %v2669 = vld [vmem:[%s2654 + $0x38] sm:$0xf]
          %v2670 = vld [vmem:[%s2654 + $0x3c] sm:$0xf]
          %v2671 = vld [vmem:[%s2654 + $0x40] sm:$0xf]
          %v2672 = vld [vmem:[%s2654 + $0x44] sm:$0xf]
          %v2673 = vld [vmem:[%s2654 + $0x48] sm:$0xf]
          %v2674 = vld [vmem:[%s2654 + $0x4c] sm:$0xf]
          %v2675 = vld [vmem:[%s2654 + $0x50] sm:$0xf]
          %v2676 = vld [vmem:[%s2654 + $0x54] sm:$0xf]
          %v2677 = vld [vmem:[%s2654 + $0x58] sm:$0xf]
          %v2678 = vld [vmem:[%s2654 + $0x5c] sm:$0xf]
          %v2679 = vld [vmem:[%s2654 + $0x60] sm:$0xf]
          %v2680 = vld [vmem:[%s2654 + $0x64] sm:$0xf]
          %v2681 = vld [vmem:[%s2654 + $0x68] sm:$0xf]
          %v2682 = vld [vmem:[%s2654 + $0x6c] sm:$0xf]
          %v2683 = vld [vmem:[%s2654 + $0x70] sm:$0xf]
          %v2684 = vld [vmem:[%s2654 + $0x74] sm:$0xf]
          %v2685 = vld [vmem:[%s2654 + $0x78] sm:$0xf]
          %v2686 = vld [vmem:[%s2654 + $0x7c] sm:$0xf]
          %v2687 = vld [vmem:[%s2654 + $0x80] sm:$0xf]
          %v2688 = vld [vmem:[%s2654 + $0x84] sm:$0xf]
          %v2689 = vld [vmem:[%s2654 + $0x88] sm:$0xf]
          %v2690 = vld [vmem:[%s2654 + $0x8c] sm:$0xf]
          %v2691 = vld [vmem:[%s2654 + $0x90] sm:$0xf]
          %v2692 = vld [vmem:[%s2654 + $0x94] sm:$0xf]
          %v2693 = vld [vmem:[%s2654 + $0x98] sm:$0xf]
          %v2694 = vld [vmem:[%s2654 + $0x9c] sm:$0xf]
          %v2695 = vld [vmem:[%s2654 + $0xa0] sm:$0xf]
          %v2696 = vld [vmem:[%s2654 + $0xa4] sm:$0xf]
          %v2697 = vld [vmem:[%s2654 + $0xa8] sm:$0xf]
          %v2698 = vld [vmem:[%s2654 + $0xac] sm:$0xf]
          %v2699 = vld [vmem:[%s2654 + $0xb0] sm:$0xf]
          %v2700 = vld [vmem:[%s2654 + $0xb4] sm:$0xf]
          %v2701 = vld [vmem:[%s2654 + $0xb8] sm:$0xf]
          %v2702 = vld [vmem:[%s2654 + $0xbc] sm:$0xf]
          %v2703 = vld [vmem:[%s2654 + $0xc0] sm:$0xf]
          %v2704 = vld [vmem:[%s2654 + $0xc4] sm:$0xf]
          %v2705 = vld [vmem:[%s2654 + $0xc8] sm:$0xf]
          %v2706 = vld [vmem:[%s2654 + $0xcc] sm:$0xf]
          %v2707 = vld [vmem:[%s2654 + $0xd0] sm:$0xf]
          %v2708 = vld [vmem:[%s2654 + $0xd4] sm:$0xf]
          %v2709 = vld [vmem:[%s2654 + $0xd8] sm:$0xf]
          %v2710 = vld [vmem:[%s2654 + $0xdc] sm:$0xf]
          %v2711 = vld [vmem:[%s2654 + $0xe0] sm:$0xf]
          %v2712 = vld [vmem:[%s2654 + $0xe4] sm:$0xf]
          %v2713 = vld [vmem:[%s2654 + $0xe8] sm:$0xf]
          %v2714 = vld [vmem:[%s2654 + $0xec] sm:$0xf]
          %v2715 = vld [vmem:[%s2654 + $0xf0] sm:$0xf]
          %v2716 = vld [vmem:[%s2654 + $0xf4] sm:$0xf]
          %v2717 = vld [vmem:[%s2654 + $0xf8] sm:$0xf]
          %v2718 = vld [vmem:[%s2654 + $0xfc] sm:$0xf]
          %v2783 = vunpack.c.l.b16 %v2655
          %v2784 = vunpack.c.l.b16 %v2656
          %v2785 = vunpack.c.l.b16 %v2657
          %v2786 = vunpack.c.l.b16 %v2658
          %v2787 = vunpack.c.l.b16 %v2659
          %v2788 = vunpack.c.l.b16 %v2660
          %v2789 = vunpack.c.l.b16 %v2661
          %v2790 = vunpack.c.l.b16 %v2662
          %v2791 = vunpack.c.l.b16 %v2663
          %v2792 = vunpack.c.l.b16 %v2664
          %v2793 = vunpack.c.l.b16 %v2665
          %v2794 = vunpack.c.l.b16 %v2666
          %v2795 = vunpack.c.l.b16 %v2667
          %v2796 = vunpack.c.l.b16 %v2668
          %v2797 = vunpack.c.l.b16 %v2669
          %v2798 = vunpack.c.l.b16 %v2670
          %v2799 = vunpack.c.l.b16 %v2671
          %v2800 = vunpack.c.l.b16 %v2672
          %v2801 = vunpack.c.l.b16 %v2673
          %v2802 = vunpack.c.l.b16 %v2674
          %v2803 = vunpack.c.l.b16 %v2675
          %v2804 = vunpack.c.l.b16 %v2676
          %v2805 = vunpack.c.l.b16 %v2677
          %v2806 = vunpack.c.l.b16 %v2678
          %v2807 = vunpack.c.l.b16 %v2679
          %v2808 = vunpack.c.l.b16 %v2680
          %v2809 = vunpack.c.l.b16 %v2681
          %v2810 = vunpack.c.l.b16 %v2682
          %v2811 = vunpack.c.l.b16 %v2683
          %v2812 = vunpack.c.l.b16 %v2684
          %v2813 = vunpack.c.l.b16 %v2685
          %v2814 = vunpack.c.l.b16 %v2686
          %v2815 = vunpack.c.l.b16 %v2687
          %v2816 = vunpack.c.l.b16 %v2688
          %v2817 = vunpack.c.l.b16 %v2689
          %v2818 = vunpack.c.l.b16 %v2690
          %v2819 = vunpack.c.l.b16 %v2691
          %v2820 = vunpack.c.l.b16 %v2692
          %v2821 = vunpack.c.l.b16 %v2693
          %v2822 = vunpack.c.l.b16 %v2694
          %v2823 = vunpack.c.l.b16 %v2695
          %v2824 = vunpack.c.l.b16 %v2696
          %v2825 = vunpack.c.l.b16 %v2697
          %v2826 = vunpack.c.l.b16 %v2698
          %v2827 = vunpack.c.l.b16 %v2699
          %v2828 = vunpack.c.l.b16 %v2700
          %v2829 = vunpack.c.l.b16 %v2701
          %v2830 = vunpack.c.l.b16 %v2702
          %v2831 = vunpack.c.l.b16 %v2703
          %v2832 = vunpack.c.l.b16 %v2704
          %v2833 = vunpack.c.l.b16 %v2705
          %v2834 = vunpack.c.l.b16 %v2706
          %v2835 = vunpack.c.l.b16 %v2707
          %v2836 = vunpack.c.l.b16 %v2708
          %v2837 = vunpack.c.l.b16 %v2709
          %v2838 = vunpack.c.l.b16 %v2710
          %v2839 = vunpack.c.l.b16 %v2711
          %v2840 = vunpack.c.l.b16 %v2712
          %v2841 = vunpack.c.l.b16 %v2713
          %v2842 = vunpack.c.l.b16 %v2714
          %v2843 = vunpack.c.l.b16 %v2715
          %v2844 = vunpack.c.l.b16 %v2716
          %v2845 = vunpack.c.l.b16 %v2717
          %v2846 = vunpack.c.l.b16 %v2718
          %v2847 = vpack.c.b16 %v2784, %v2783
          %v2848 = vpack.c.b16 %v2786, %v2785
          %v2849 = vpack.c.b16 %v2788, %v2787
          %v2850 = vpack.c.b16 %v2790, %v2789
          %v2851 = vpack.c.b16 %v2792, %v2791
          %v2852 = vpack.c.b16 %v2794, %v2793
          %v2853 = vpack.c.b16 %v2796, %v2795
          %v2854 = vpack.c.b16 %v2798, %v2797
          %v2855 = vpack.c.b16 %v2800, %v2799
          %v2856 = vpack.c.b16 %v2802, %v2801
          %v2857 = vpack.c.b16 %v2804, %v2803
          %v2858 = vpack.c.b16 %v2806, %v2805
          %v2859 = vpack.c.b16 %v2808, %v2807
          %v2860 = vpack.c.b16 %v2810, %v2809
          %v2861 = vpack.c.b16 %v2812, %v2811
          %v2862 = vpack.c.b16 %v2814, %v2813
          %v2863 = vpack.c.b16 %v2816, %v2815
          %v2864 = vpack.c.b16 %v2818, %v2817
          %v2865 = vpack.c.b16 %v2820, %v2819
          %v2866 = vpack.c.b16 %v2822, %v2821
          %v2867 = vpack.c.b16 %v2824, %v2823
          %v2868 = vpack.c.b16 %v2826, %v2825
          %v2869 = vpack.c.b16 %v2828, %v2827
          %v2870 = vpack.c.b16 %v2830, %v2829
          %v2871 = vpack.c.b16 %v2832, %v2831
          %v2872 = vpack.c.b16 %v2834, %v2833
          %v2873 = vpack.c.b16 %v2836, %v2835
          %v2874 = vpack.c.b16 %v2838, %v2837
          %v2875 = vpack.c.b16 %v2840, %v2839
          %v2876 = vpack.c.b16 %v2842, %v2841
          %v2877 = vpack.c.b16 %v2844, %v2843
          %v2878 = vpack.c.b16 %v2846, %v2845
          %2911 = vmatprep.subr.bf16.mxu0 0
          %2912 = vmatpush1.bf16.msra.mxu0 %v2847
          %2913 = vmatprep.subr.bf16.mxu0 0
          %2914 = vmatpush1.bf16.msra.mxu0 %v2848
          %2915 = vmatprep.subr.bf16.mxu0 0
          %2916 = vmatpush1.bf16.msra.mxu0 %v2849
          %2917 = vmatprep.subr.bf16.mxu0 0
          %2918 = vmatpush1.bf16.msra.mxu0 %v2850
          %2919 = vmatprep.subr.bf16.mxu0 0
          %2920 = vmatpush1.bf16.msra.mxu0 %v2851
          %2921 = vmatprep.subr.bf16.mxu0 0
          %2922 = vmatpush1.bf16.msra.mxu0 %v2852
          %2923 = vmatprep.subr.bf16.mxu0 0
          %2924 = vmatpush1.bf16.msra.mxu0 %v2853
          %2925 = vmatprep.subr.bf16.mxu0 0
          %2926 = vmatpush1.bf16.msra.mxu0 %v2854
          %2927 = vmatprep.subr.bf16.mxu0 0
          %2928 = vmatpush1.bf16.msra.mxu0 %v2855
          %2929 = vmatprep.subr.bf16.mxu0 0
          %2930 = vmatpush1.bf16.msra.mxu0 %v2856
          %2931 = vmatprep.subr.bf16.mxu0 0
          %2932 = vmatpush1.bf16.msra.mxu0 %v2857
          %2933 = vmatprep.subr.bf16.mxu0 0
          %2934 = vmatpush1.bf16.msra.mxu0 %v2858
          %2935 = vmatprep.subr.bf16.mxu0 0
          %2936 = vmatpush1.bf16.msra.mxu0 %v2859
          %2937 = vmatprep.subr.bf16.mxu0 0
          %2938 = vmatpush1.bf16.msra.mxu0 %v2860
          %2939 = vmatprep.subr.bf16.mxu0 0
          %2940 = vmatpush1.bf16.msra.mxu0 %v2861
          %2941 = vmatprep.subr.bf16.mxu0 0
          %2942 = vmatpush1.bf16.msra.mxu0 %v2862
          %2943 = vmatprep.mubr.bf16.mxu0 %v2646
          %2944 = vmatmul.mubr.bf16.gmra.mrb[0].mxu0 %v2645
          %v2945 = vpop.f32.mrb[0].mxu0
          %v2946 = vadd.f32 0.0, %v2945
          %v2947 = vpop.f32.mrb[0].mxu0
          %v2948 = vpop.f32.mrb[0].mxu0
          %v2949 = vadd.f32 0.0, %v2948
          %v2950 = vpop.f32.mrb[0].mxu0
          %2951 = vmatprep.mubr.bf16.mxu0 %v2650
          %2952 = vmatmul.mubr.bf16.gmra.mrb[0].mxu0 %v2649
          %v2953 = vpop.f32.mrb[0].mxu0
          %v2954 = vadd.f32 0.0, %v2953
          %v2955 = vpop.f32.mrb[0].mxu0
          %v2956 = vpop.f32.mrb[0].mxu0
          %v2957 = vadd.f32 0.0, %v2956
          %v2958 = vpop.f32.mrb[0].mxu0
          %2959 = vdwg.mxu0
          %2960 = vmatprep.subr.bf16.mxu0 0
          %2961 = vmatpush1.bf16.msra.mxu0 %v2863
          %2962 = vmatprep.subr.bf16.mxu0 0
          %2963 = vmatpush1.bf16.msra.mxu0 %v2864
          %2964 = vmatprep.subr.bf16.mxu0 0
          %2965 = vmatpush1.bf16.msra.mxu0 %v2865
          %2966 = vmatprep.subr.bf16.mxu0 0
          %2967 = vmatpush1.bf16.msra.mxu0 %v2866
          %2968 = vmatprep.subr.bf16.mxu0 0
          %2969 = vmatpush1.bf16.msra.mxu0 %v2867
          %2970 = vmatprep.subr.bf16.mxu0 0
          %2971 = vmatpush1.bf16.msra.mxu0 %v2868
          %2972 = vmatprep.subr.bf16.mxu0 0
          %2973 = vmatpush1.bf16.msra.mxu0 %v2869
          %2974 = vmatprep.subr.bf16.mxu0 0
          %2975 = vmatpush1.bf16.msra.mxu0 %v2870
          %2976 = vmatprep.subr.bf16.mxu0 0
          %2977 = vmatpush1.bf16.msra.mxu0 %v2871
          %2978 = vmatprep.subr.bf16.mxu0 0
          %2979 = vmatpush1.bf16.msra.mxu0 %v2872
          %2980 = vmatprep.subr.bf16.mxu0 0
          %2981 = vmatpush1.bf16.msra.mxu0 %v2873
          %2982 = vmatprep.subr.bf16.mxu0 0
          %2983 = vmatpush1.bf16.msra.mxu0 %v2874
          %2984 = vmatprep.subr.bf16.mxu0 0
          %2985 = vmatpush1.bf16.msra.mxu0 %v2875
          %2986 = vmatprep.subr.bf16.mxu0 0
          %2987 = vmatpush1.bf16.msra.mxu0 %v2876
          %2988 = vmatprep.subr.bf16.mxu0 0
          %2989 = vmatpush1.bf16.msra.mxu0 %v2877
          %2990 = vmatprep.subr.bf16.mxu0 0
          %2991 = vmatpush1.bf16.msra.mxu0 %v2878
          %2992 = vmatprep.mubr.bf16.mxu0 %v2648
          %2993 = vmatmul.mubr.bf16.gmra.mrb[0].mxu0 %v2647
          %v2994 = vpop.f32.mrb[0].mxu0
          %v2995 = vadd.f32 %v2946, %v2994
          %v2996 = vpop.f32.mrb[0].mxu0
          %v2997 = vpop.f32.mrb[0].mxu0
          %v2998 = vadd.f32 %v2949, %v2997
          %v2999 = vpop.f32.mrb[0].mxu0
          %3000 = vmatprep.mubr.bf16.mxu0 %v2652
          %3001 = vmatmul.mubr.bf16.gmra.mrb[0].mxu0 %v2651
          %v3002 = vpop.f32.mrb[0].mxu0
          %v3003 = vadd.f32 %v2954, %v3002
          %v3004 = vpop.f32.mrb[0].mxu0
          %v3005 = vpop.f32.mrb[0].mxu0
          %v3006 = vadd.f32 %v2957, %v3005
          %v3007 = vpop.f32.mrb[0].mxu0
          %3008 = vdwg.mxu0
          %v3009 = vadd.f32 %v2102, %v2995
          %v3010 = vadd.f32 %v2103, %v2998
          %v3011 = vadd.f32 %v2104, %v3003
          %v3012 = vadd.f32 %v2105, %v3006
          %s3013 = scalar_lea.vmem [#allocation16], %s844
          %v3014 = vld [vmem:[%s3013] sm:$0x1]
          %v3016 = vlaneseq
          %v3017 = vshrl.u32 %v3016, 7
          %v3018 = vsub.s32 0, %v3017
          %v3019 = vrot.slane %v3014, %v3018
          %v3021 = vadd.f32 %v3009, %v3019
          %v3022 = vadd.f32 %v3010, %v3019
          %v3023 = vadd.f32 %v3011, %v3019
          %v3024 = vadd.f32 %v3012, %v3019
        $region141: #{audiomae_condition_forward.1} parent=91 // loop_footer
          %s848 = sadd.s32 1, %s844
        $region142: #{audiomae_condition_forward.1} parent=91 // loop_footer_branch
          %843 = sbr.rel target = $region138
        $region143: #{audiomae_condition_forward.1} parent=91 // loop_exit
          _
        %v3025 = vld [vmem:[%s15] sm:$0x1]
        %v3026 = vld [vmem:[#allocation17] sm:$0x1]
        %3027 = vadd.xlane.f32.xlu0 %v849
        %v3028 = vpop.xlane.xlu0 %3027
        %3029 = vadd.xlane.f32.xlu0 %v850
        %v3030 = vpop.xlane.xlu0 %3029
        %3031 = vadd.xlane.f32.xlu0 %v851
        %v3032 = vpop.xlane.xlu0 %3031
        %3033 = vadd.xlane.f32.xlu0 %v852
        %v3034 = vpop.xlane.xlu0 %3033
        %v3035 = vrcp.pop 128.0
        %v3036 = vmul.f32 %v3028, %v3035
        %v3037 = vmul.f32 %v3030, %v3035
        %v3038 = vmul.f32 %v3032, %v3035
        %v3039 = vmul.f32 %v3034, %v3035
        %v3040 = vsub.f32 %v849, %v3036
        %v3041 = vsub.f32 %v850, %v3037
        %v3042 = vsub.f32 %v851, %v3038
        %v3043 = vsub.f32 %v852, %v3039
        %v3044 = vmul.f32 %v3040, %v3040
        %v3045 = vmul.f32 %v3041, %v3041
        %v3046 = vmul.f32 %v3042, %v3042
        %v3047 = vmul.f32 %v3043, %v3043
        %3048 = vadd.xlane.f32.xlu0 %v3044
        %v3049 = vpop.xlane.xlu0 %3048
        %3050 = vadd.xlane.f32.xlu0 %v3045
        %v3051 = vpop.xlane.xlu0 %3050
        %3052 = vadd.xlane.f32.xlu0 %v3046
        %v3053 = vpop.xlane.xlu0 %3052
        %3054 = vadd.xlane.f32.xlu0 %v3047
        %v3055 = vpop.xlane.xlu0 %3054
        %v3056 = vmul.f32 %v3049, %v3035
        %v3057 = vmul.f32 %v3051, %v3035
        %v3058 = vmul.f32 %v3053, %v3035
        %v3059 = vmul.f32 %v3055, %v3035
        %v3060 = vadd.f32 %v3056, 1e-06
        %v3061 = vadd.f32 %v3057, 1e-06
        %v3062 = vadd.f32 %v3058, 1e-06
        %v3063 = vadd.f32 %v3059, 1e-06
        %v3064 = vrsqrt.pop %v3060
        %v3065 = vrsqrt.pop %v3061
        %v3066 = vrsqrt.pop %v3062
        %v3067 = vrsqrt.pop %v3063
        %v3068 = vmul.f32 %v3040, %v3064
        %v3069 = vmul.f32 %v3041, %v3065
        %v3070 = vmul.f32 %v3042, %v3066
        %v3071 = vmul.f32 %v3043, %v3067
        %v3073 = vlaneseq
        %v3074 = vshrl.u32 %v3073, 7
        %v3075 = vsub.s32 0, %v3074
        %v3076 = vrot.slane %v3025, %v3075
        %v3078 = vmul.f32 %v3068, %v3076
        %v3079 = vmul.f32 %v3069, %v3076
        %v3080 = vmul.f32 %v3070, %v3076
        %v3081 = vmul.f32 %v3071, %v3076
        %v3083 = vlaneseq
        %v3084 = vshrl.u32 %v3083, 7
        %v3085 = vsub.s32 0, %v3084
        %v3086 = vrot.slane %v3026, %v3085
        %v3088 = vadd.f32 %v3078, %v3086
        %v3089 = vadd.f32 %v3079, %v3086
        %v3090 = vadd.f32 %v3080, %v3086
        %v3091 = vadd.f32 %v3081, %v3086
        %v3092 = vpack.c.bf16 %v3089, %v3088
        %v3093 = vpack.c.bf16 %v3091, %v3090
        %v3094 = vld [vmem:[#allocation19] sm:$0xf]
        %v3095 = vld [vmem:[#allocation19 + $0x4] sm:$0xf]
        %v3098 = vunpack.c.l.b16 %v3094
        %v3099 = vunpack.c.l.b16 %v3095
        %v3100 = vpack.c.b16 %v3099, %v3098
        %vm3101 = vcmask 261120
        %v3103 = vsel %vm3101, %v3100, 0
        %3105 = vmatprep.subr.bf16.mxu0 0
        %3106 = vmatpush1.bf16.msra.mxu0 %v3092
        %3107 = vmatprep.subr.bf16.mxu0 0
        %3108 = vmatpush1.bf16.msra.mxu0 %v3093
        %3109 = vmatprep.subr.bf16.mxu0 0
        %3110 = vmatpush1.bf16.msra.mxu0 0
        %3111 = vmatprep.subr.bf16.mxu0 0
        %3112 = vmatpush1.bf16.msra.mxu0 0
        %3113 = vmatprep.subr.bf16.mxu0 0
        %3114 = vmatpush1.bf16.msra.mxu0 0
        %3115 = vmatprep.subr.bf16.mxu0 0
        %3116 = vmatpush1.bf16.msra.mxu0 0
        %3117 = vmatprep.subr.bf16.mxu0 0
        %3118 = vmatpush1.bf16.msra.mxu0 0
        %3119 = vmatprep.subr.bf16.mxu0 0
        %3120 = vmatpush1.bf16.msra.mxu0 0
        %3121 = vmatprep.subr.bf16.mxu0 0
        %3122 = vmatpush1.bf16.msra.mxu0 0
        %3123 = vmatprep.subr.bf16.mxu0 0
        %3124 = vmatpush1.bf16.msra.mxu0 0
        %3125 = vmatprep.subr.bf16.mxu0 0
        %3126 = vmatpush1.bf16.msra.mxu0 0
        %3127 = vmatprep.subr.bf16.mxu0 0
        %3128 = vmatpush1.bf16.msra.mxu0 0
        %3129 = vmatprep.subr.bf16.mxu0 0
        %3130 = vmatpush1.bf16.msra.mxu0 0
        %3131 = vmatprep.subr.bf16.mxu0 0
        %3132 = vmatpush1.bf16.msra.mxu0 0
        %3133 = vmatprep.subr.bf16.mxu0 0
        %3134 = vmatpush1.bf16.msra.mxu0 0
        %3135 = vmatprep.subr.bf16.mxu0 0
        %3136 = vmatpush1.bf16.msra.mxu0 0
        %3137 = vmatprep.mubr.bf16.mxu0 0
        %3138 = vmatmul.mubr.bf16.gmra.mrb[0].mxu0 %v3103
        %v3139 = vpop.f32.mrb[0].mxu0
        %v3140 = vadd.f32 0.0, %v3139
        %v3141 = vpop.f32.mrb[0].mxu0
        %v3142 = vpop.f32.mrb[0].mxu0
        %v3143 = vadd.f32 0.0, %v3142
        %v3144 = vpop.f32.mrb[0].mxu0
        %3145 = vdwg.mxu0
        %v3147 = vrot.slane %v3140, 4
        %v3149 = vadd.f32 %v3140, %v3147
        %v3150 = vmax.f32 %v3140, %v3147
        %v3151 = vadd.f32 %v3149, %v3143
        %v3152 = vmax.f32 %v3150, %v3143
        %v3154 = vrot.slane %v3143, 4
        %v3156 = vadd.f32 %v3151, %v3154
        %v3157 = vmax.f32 %v3152, %v3154
        %v3158 = vmul.f32 %v3156, 0.25
        %v3159 = vadd.f32 %v3158, %v3157
        %v3160 = vmul.f32 %v3159, 0.5
        %3161 = vst [vmem:[%s726] sm:$0xf] %v3160
        %s3162 = sand.u32 %s429, 1
        %s3163 = scalar_lea.sflag [#allocation4], %s3162
        %s3164 = sand.u32 %s429, 1
        %s3165 = smul.addr %s3164, 4
        %s3166 = scalar_lea.vmem [#allocation20], %s3165
        // Predicated region
        $region144: #{audiomae_condition_forward.1} parent=91 // pred_check
          %p3167 = pneg %p439
        $region145: #{audiomae_condition_forward.1} parent=91 // pred_check_branch
          %3169 = sbr.rel (%p3167) target = $region147
        $region146: #{audiomae_condition_forward.1} parent=91 // pred_region
          %s3171 = ssub.s32 64, 64
          %3172 = vsyncadd %s3163, %s3171
          %s3173 = smul.addr %s38, 64
          %s3174 = scalar_lea.hbm %s18, %s3173
          %s3176 = sshll.u32 %s3166, 4
          %s3177 = int_to_ptr.vmem [resolvable:$true] %s3176
          %3179 = dma.vmem_to_hbm [thread:$0]  %s3177, 64, %s3174, %s3163
        $region147: #{audiomae_condition_forward.1} parent=91 // pred_fallthru
          _
      $region92: #{audiomae_condition_forward.1} parent=5 // pred_fallthru
        _
      %p3180 = scmp.le.s32.totalorder 2, %s33
      // Predicated region
      $region148: #{audiomae_condition_forward.1} parent=5 // pred_check
        %p3181 = pneg %p3180
      $region149: #{audiomae_condition_forward.1} parent=5 // pred_check_branch
        %3183 = sbr.rel (%p3181) target = $region151
      $region150: #{audiomae_condition_forward.1} parent=5 // pred_region
        %s3184 = ssub.s32 %s33, 2
        // Predicated region
        $region152: #{audiomae_condition_forward.1} parent=150 // pred_check
          %p3185 = pneg %p445
        $region153: #{audiomae_condition_forward.1} parent=150 // pred_check_branch
          %3187 = sbr.rel (%p3185) target = $region155
        $region154: #{audiomae_condition_forward.1} parent=150 // pred_region
          %s3188 = sand.u32 %s430, 1
          %s3189 = scalar_lea.sflag [#allocation4], %s3188
          %s3190 = sand.u32 %s430, 1
          %s3191 = smul.addr %s3190, 4
          %s3192 = scalar_lea.vmem [#allocation20], %s3191
          %3193 = dma.done %s3189, 64
        $region155: #{audiomae_condition_forward.1} parent=150 // pred_fallthru
          _
      $region151: #{audiomae_condition_forward.1} parent=5 // pred_fallthru
        _
    $region6: #{audiomae_condition_forward.1} parent=1 // loop_footer
      %s37 = sadd.s32 1, %s33
    $region7: #{audiomae_condition_forward.1} parent=1 // loop_footer_branch
      %32 = sbr.rel target = $region3
    $region8: #{audiomae_condition_forward.1} parent=1 // loop_exit
      _
    %3194 = vsyncpa [#allocation3], 1
    %s3195 = scalar_lea.sflag [#allocation3], 1
    %3196 = vsyncpa %s3195, 1
    %3197 = vsyncpa [#allocation6], 1
    %3198 = vsyncpa [#allocation9], 1
    %3199 = vsyncpa [#allocation12], 1
    %3200 = vsyncpa [#allocation15], 1
    %3201 = vsyncpa [#allocation18], 1
    %3202 = vsyncpa [#allocation4], 1
    %s3203 = scalar_lea.sflag [#allocation4], 1
    %3204 = vsyncpa %s3203, 1

</llo_original>
